<compile_context>
chip_gen: v5e
topology: v5e:2x2
jax: 0.10.0
libtpu: 0.0.40
codegen_flags: <defaults>
</compile_context>

<pallas_src>
import functools

import jax
import jax.numpy as jnp
from jax.experimental import pallas as pl
from jax.experimental.pallas import tpu as pltpu


# -----------------------------------------------------------------------------
# Fused Pallas kernel
# -----------------------------------------------------------------------------
def _fused_xlstm_kernel(*refs, T, B, H, num_layers, num_dirs):
    """Fused multi-layer (bi)LSTM + attention pooling + fc.

    Input refs (in order):
      xg0                          : (T, B, 4H*num_dirs)  layer-0 x@W_ih + b
      per layer l = 0..L-1:
        if l > 0:
          w_in[d] for each dir     : (H, 4H*num_dirs)     input-dir-d rows of W_ih
          b                        : (1, 4H*num_dirs)
        w_hh[d] for each dir       : (H, 4H)
      aw[d] for each dir           : (1, H)   attention weight split per dir
      ab                           : (1, 1)
      fw[d] for each dir           : (H, O)   fc weight split per dir
      fb                           : (1, O)
    Output ref: (B, O).
    Gate order follows PyTorch: [i, f, g, o].  The g-gate columns of all gate
    weights/biases arrive PRE-SCALED by 2 so tanh(g) = 2*sigmoid(2g) - 1 can be
    read off the single sigmoid pass.
    """
    G = 4 * H
    it = iter(refs)
    xg0_ref = next(it)
    layer_refs = []
    for li in range(num_layers):
        p = {}
        if li > 0:
            p["w_in"] = [next(it) for _ in range(num_dirs)]
            p["b"] = next(it)
        p["w_hh"] = [next(it) for _ in range(num_dirs)]
        layer_refs.append(p)
    aw_refs = [next(it) for _ in range(num_dirs)]
    ab_ref = next(it)
    fw_refs = [next(it) for _ in range(num_dirs)]
    fb_ref = next(it)
    out_ref = next(it)

    def lstm_cell(gates, c):
        # gates: (B, 4H) -- ONE full-width sigmoid (EUP) pass, slices after.
        sg = jax.nn.sigmoid(gates)
        i_g = sg[:, 0:H]
        f_g = sg[:, H:2 * H]
        o_g = sg[:, 3 * H:4 * H]
        # g columns were pre-scaled by 2 -> tanh(x) = 2*sigmoid(2x) - 1 (VPU only)
        g_g = sg[:, 2 * H:3 * H] * 2.0 - 1.0
        c_new = f_g * c + i_g * g_g
        h_new = o_g * jnp.tanh(c_new)
        return h_new, c_new

    # acts[d][t]: (B, H) hidden state of direction d at sequence position t.
    acts = None
    for li in range(num_layers):
        p = layer_refs[li]
        w_hh = [p["w_hh"][d][...] for d in range(num_dirs)]   # load once / layer

        # ---- hoisted input->gates projection (independent of recurrence) ----
        if li == 0:
            xg = [xg0_ref[t] for t in range(T)]               # (B, 4H*dirs) each
        else:
            w_in = [p["w_in"][d][...] for d in range(num_dirs)]
            b_val = p["b"][...]
            xg = []
            for t in range(T):
                g = b_val
                for d in range(num_dirs):
                    g = g + jnp.dot(acts[d][t], w_in[d],
                                    preferred_element_type=jnp.float32)
                xg.append(g)                                  # (B, 4H*dirs)

        # ---- recurrence: both directions interleaved, fully unrolled ----
        new_acts = [[None] * T for _ in range(num_dirs)]
        h = [jnp.zeros((B, H), jnp.float32) for _ in range(num_dirs)]
        c = [jnp.zeros((B, H), jnp.float32) for _ in range(num_dirs)]
        for t in range(T):
            for d in range(num_dirs):
                tt = t if d == 0 else (T - 1 - t)
                gates = (jnp.dot(h[d], w_hh[d],
                                 preferred_element_type=jnp.float32)
                         + xg[tt][:, d * G:(d + 1) * G])
                h[d], c[d] = lstm_cell(gates, c[d])
                new_acts[d][tt] = h[d]
        acts = new_acts

    # ---- attention pooling over the sequence (softmax over time) + fc ----
    aw = [aw_refs[d][...] for d in range(num_dirs)]
    ab = ab_ref[...]
    scores = []
    for t in range(T):
        s = ab
        for d in range(num_dirs):
            s = s + jnp.sum(acts[d][t] * aw[d], axis=-1, keepdims=True)
        scores.append(s)                                      # (B, 1)

    m = scores[0]
    for t in range(1, T):
        m = jnp.maximum(m, scores[t])
    e = [jnp.exp(scores[t] - m) for t in range(T)]
    denom = e[0]
    for t in range(1, T):
        denom = denom + e[t]
    inv = 1.0 / denom                                         # single divide

    out = fb_ref[...]                                         # (1, O)
    for d in range(num_dirs):
        ctx = e[0] * acts[d][0]
        for t in range(1, T):
            ctx = ctx + e[t] * acts[d][t]                     # (B, H) unnormalized
        out = out + jnp.dot(ctx * inv, fw_refs[d][...],
                            preferred_element_type=jnp.float32)
    out_ref[...] = out


# -----------------------------------------------------------------------------
# Wrapper
# -----------------------------------------------------------------------------
def _gate_scale(H, num_dirs):
    """(1, 4H*num_dirs) scale vector: 2.0 on the g-gate columns, 1.0 elsewhere."""
    one = jnp.ones((H,), jnp.float32)
    per_dir = jnp.concatenate([one, one, 2.0 * one, one])     # [i, f, g, o]
    return jnp.tile(per_dir, (num_dirs,))[None, :]


def x_lstm_forward(params, x_ids, *, bidirectional):
    layers = params["lstm_layers"]
    num_layers = len(layers)
    num_dirs = 2 if bidirectional else 1
    tags = ["f", "b"] if bidirectional else ["f"]
    H = layers[0]["w_hh_f"].shape[0]
    O = params["fc_w"].shape[1]

    scale_md = _gate_scale(H, num_dirs)                       # (1, 4H*dirs)
    scale_sd = _gate_scale(H, 1)                              # (1, 4H)

    # Embedding lookup (XLA gather) + single transpose to time-major.
    emb = params["embedding"][x_ids]                          # (B, T, E)
    x_tbe = jnp.transpose(emb, (1, 0, 2))                     # (T, B, E)
    T, B, _ = x_tbe.shape

    # Layer-0 input projection hoisted entirely out of the recurrence: one big
    # matmul with direction-merged, g-gate-pre-scaled weights, done in XLA.
    w_ih0 = jnp.concatenate([layers[0][f"w_ih_{t}"] for t in tags], axis=1)
    b0 = jnp.concatenate([layers[0][f"b_{t}"] for t in tags], axis=1)
    w_ih0 = w_ih0 * scale_md
    b0 = b0 * scale_md
    xg0 = jnp.einsum("tbe,eg->tbg", x_tbe, w_ih0,
                     preferred_element_type=jnp.float32) + b0  # (T,B,4H*dirs)

    ins = [xg0]
    for li, layer in enumerate(layers):
        if li > 0:
            # Merge output directions, split rows by input-direction half so the
            # kernel never needs to concatenate activations.
            w_cat = jnp.concatenate([layer[f"w_ih_{t}"] for t in tags], axis=1)
            w_cat = w_cat * scale_md
            for d in range(num_dirs):
                ins.append(w_cat[d * H:(d + 1) * H, :])       # (H, 4H*dirs)
            b_cat = jnp.concatenate([layer[f"b_{t}"] for t in tags], axis=1)
            ins.append(b_cat * scale_md)
        for t in tags:
            ins.append(layer[f"w_hh_{t}"] * scale_sd)         # (H, 4H)
    for d in range(num_dirs):
        ins.append(params["attn_w"][:, d * H:(d + 1) * H])    # (1, H)
    ins.append(params["attn_b"])                              # (1, 1)
    for d in range(num_dirs):
        ins.append(params["fc_w"][d * H:(d + 1) * H, :])      # (H, O)
    ins.append(params["fc_b"])                                # (1, O)

    kernel = functools.partial(_fused_xlstm_kernel, T=T, B=B, H=H,
                               num_layers=num_layers, num_dirs=num_dirs)
    vmem = pl.BlockSpec(memory_space=pltpu.MemorySpace.VMEM)
    return pl.pallas_call(
        kernel,
        out_shape=jax.ShapeDtypeStruct((B, O), jnp.float32),
        in_specs=[vmem] * len(ins),
        out_specs=vmem,
    )(*ins)


# -----------------------------------------------------------------------------
# Pure-JAX reference (for correctness check)
# -----------------------------------------------------------------------------
def _lstm_layer_ref(x_btf, w_ih, w_hh, b, reverse):
    B, T, _ = x_btf.shape
    H = w_hh.shape[0]
    xs = jnp.transpose(x_btf, (1, 0, 2))
    if reverse:
        xs = xs[::-1]

    def step(carry, x_t):
        h, c = carry
        gates = x_t @ w_ih + h @ w_hh + b
        i = jax.nn.sigmoid(gates[:, :H])
        f = jax.nn.sigmoid(gates[:, H:2 * H])
        g = jnp.tanh(gates[:, 2 * H:3 * H])
        o = jax.nn.sigmoid(gates[:, 3 * H:])
        c = f * c + i * g
        h = o * jnp.tanh(c)
        return (h, c), h

    init = (jnp.zeros((B, H), jnp.float32), jnp.zeros((B, H), jnp.float32))
    _, hs = jax.lax.scan(step, init, xs)
    if reverse:
        hs = hs[::-1]
    return jnp.transpose(hs, (1, 0, 2))


def x_lstm_forward_ref(params, x_ids, *, bidirectional):
    layer_in = params["embedding"][x_ids]
    for layer in params["lstm_layers"]:
        outs = [_lstm_layer_ref(layer_in, layer["w_ih_f"], layer["w_hh_f"],
                                layer["b_f"], reverse=False)]
        if bidirectional:
            outs.append(_lstm_layer_ref(layer_in, layer["w_ih_b"],
                                        layer["w_hh_b"], layer["b_b"],
                                        reverse=True))
        layer_in = jnp.concatenate(outs, axis=-1)
    lstm_out = layer_in
    scores = jnp.sum(lstm_out * params["attn_w"], axis=-1) + params["attn_b"]
    w = jax.nn.softmax(scores, axis=1)
    context = jnp.sum(w[:, :, None] * lstm_out, axis=1)
    return context @ params["fc_w"] + params["fc_b"]


# -----------------------------------------------------------------------------
# Parameter construction (deterministic, PyTorch-like init)
# -----------------------------------------------------------------------------
def make_params(key, vocab_size, embedding_dim, hidden_dim, output_dim,
                n_layers, bidirectional):
    num_layers = n_layers + 1
    num_dirs = 2 if bidirectional else 1
    D = hidden_dim * num_dirs
    k_lstm = 1.0 / jnp.sqrt(hidden_dim)

    keys = iter(jax.random.split(key, 8 + 8 * num_layers * num_dirs))

    def unif(shape, bound):
        return jax.random.uniform(next(keys), shape, jnp.float32, -bound, bound)

    params = {"embedding": jax.random.normal(
        next(keys), (vocab_size, embedding_dim), jnp.float32)}

    layers = []
    for li in range(num_layers):
        in_dim = embedding_dim if li == 0 else D
        layer = {}
        for tag in (["f", "b"] if bidirectional else ["f"]):
            layer[f"w_ih_{tag}"] = unif((in_dim, 4 * hidden_dim), k_lstm)
            layer[f"w_hh_{tag}"] = unif((hidden_dim, 4 * hidden_dim), k_lstm)
            b_ih = unif((1, 4 * hidden_dim), k_lstm)
            b_hh = unif((1, 4 * hidden_dim), k_lstm)
            layer[f"b_{tag}"] = b_ih + b_hh
        layers.append(layer)
    params["lstm_layers"] = layers

    k_lin = 1.0 / jnp.sqrt(D)
    params["attn_w"] = unif((1, D), k_lin)
    params["attn_b"] = unif((1, 1), k_lin)
    params["fc_w"] = unif((D, output_dim), k_lin)
    params["fc_b"] = unif((1, output_dim), k_lin)
    return params


# -----------------------------------------------------------------------------
# Main
# -----------------------------------------------------------------------------
if __name__ == "__main__":
    # Module config (small, consistent with the PyTorch forward)
    vocab_size = 50
    embedding_dim = 16
    hidden_dim = 32
    output_dim = 4
    n_layers = 1            # PyTorch module uses n_layers + 1 = 2 LSTM layers
    bidirectional = True
    dropout = 0.0           # eval-mode: identity

    batch, seq = 2, 8

    root = jax.random.PRNGKey(0)
    k_param, k_x = jax.random.split(root)
    params = make_params(k_param, vocab_size, embedding_dim, hidden_dim,
                         output_dim, n_layers, bidirectional)
    x = jax.random.randint(k_x, (batch, seq), 0, vocab_size, dtype=jnp.int32)

    fwd = jax.jit(functools.partial(x_lstm_forward, bidirectional=bidirectional))
    out = fwd(params, x)
    out = jax.block_until_ready(out)

    ref = x_lstm_forward_ref(params, x, bidirectional=bidirectional)
    assert out.shape == (batch, output_dim)
    assert jnp.allclose(out, ref, atol=2e-3, rtol=2e-3), (out, ref)

    print("KERNEL_OK")
</pallas_src>

<mosaic_0001>
module attributes {stable_mosaic.version = 11 : i64} {
  func.func @_fused_xlstm_kernel(%arg0: memref<8x2x256xf32, #tpu.memory_space<vmem>>, %arg1: memref<32x128xf32, #tpu.memory_space<vmem>>, %arg2: memref<32x128xf32, #tpu.memory_space<vmem>>, %arg3: memref<32x256xf32, #tpu.memory_space<vmem>>, %arg4: memref<32x256xf32, #tpu.memory_space<vmem>>, %arg5: memref<1x256xf32, #tpu.memory_space<vmem>>, %arg6: memref<32x128xf32, #tpu.memory_space<vmem>>, %arg7: memref<32x128xf32, #tpu.memory_space<vmem>>, %arg8: memref<1x32xf32, #tpu.memory_space<vmem>>, %arg9: memref<1x32xf32, #tpu.memory_space<vmem>>, %arg10: memref<1x1xf32, #tpu.memory_space<vmem>>, %arg11: memref<32x4xf32, #tpu.memory_space<vmem>>, %arg12: memref<32x4xf32, #tpu.memory_space<vmem>>, %arg13: memref<1x4xf32, #tpu.memory_space<vmem>>, %arg14: memref<2x4xf32, #tpu.memory_space<vmem>>) attributes {dimension_semantics = [], scalar_prefetch = 0 : i64, scratch_operands = 0 : i64, tpu.core_type = #tpu.core_type<tc>} {
    %c0 = arith.constant 0 : index
    %c0_0 = arith.constant 0 : index
    %0 = vector.load %arg1[%c0, %c0_0] : memref<32x128xf32, #tpu.memory_space<vmem>>, vector<32x128xf32>
    %c0_1 = arith.constant 0 : index
    %c0_2 = arith.constant 0 : index
    %1 = vector.load %arg2[%c0_1, %c0_2] : memref<32x128xf32, #tpu.memory_space<vmem>>, vector<32x128xf32>
    %c0_3 = arith.constant 0 : index
    %c0_4 = arith.constant 0 : index
    %c0_5 = arith.constant 0 : index
    %2 = vector.load %arg0[%c0_3, %c0_4, %c0_5] : memref<8x2x256xf32, #tpu.memory_space<vmem>>, vector<1x2x256xf32>
    %3 = vector.shape_cast %2 : vector<1x2x256xf32> to vector<2x256xf32>
    %c1 = arith.constant 1 : index
    %c0_6 = arith.constant 0 : index
    %c0_7 = arith.constant 0 : index
    %4 = vector.load %arg0[%c1, %c0_6, %c0_7] : memref<8x2x256xf32, #tpu.memory_space<vmem>>, vector<1x2x256xf32>
    %5 = vector.shape_cast %4 : vector<1x2x256xf32> to vector<2x256xf32>
    %c2 = arith.constant 2 : index
    %c0_8 = arith.constant 0 : index
    %c0_9 = arith.constant 0 : index
    %6 = vector.load %arg0[%c2, %c0_8, %c0_9] : memref<8x2x256xf32, #tpu.memory_space<vmem>>, vector<1x2x256xf32>
    %7 = vector.shape_cast %6 : vector<1x2x256xf32> to vector<2x256xf32>
    %c3 = arith.constant 3 : index
    %c0_10 = arith.constant 0 : index
    %c0_11 = arith.constant 0 : index
    %8 = vector.load %arg0[%c3, %c0_10, %c0_11] : memref<8x2x256xf32, #tpu.memory_space<vmem>>, vector<1x2x256xf32>
    %9 = vector.shape_cast %8 : vector<1x2x256xf32> to vector<2x256xf32>
    %c4 = arith.constant 4 : index
    %c0_12 = arith.constant 0 : index
    %c0_13 = arith.constant 0 : index
    %10 = vector.load %arg0[%c4, %c0_12, %c0_13] : memref<8x2x256xf32, #tpu.memory_space<vmem>>, vector<1x2x256xf32>
    %11 = vector.shape_cast %10 : vector<1x2x256xf32> to vector<2x256xf32>
    %c5 = arith.constant 5 : index
    %c0_14 = arith.constant 0 : index
    %c0_15 = arith.constant 0 : index
    %12 = vector.load %arg0[%c5, %c0_14, %c0_15] : memref<8x2x256xf32, #tpu.memory_space<vmem>>, vector<1x2x256xf32>
    %13 = vector.shape_cast %12 : vector<1x2x256xf32> to vector<2x256xf32>
    %c6 = arith.constant 6 : index
    %c0_16 = arith.constant 0 : index
    %c0_17 = arith.constant 0 : index
    %14 = vector.load %arg0[%c6, %c0_16, %c0_17] : memref<8x2x256xf32, #tpu.memory_space<vmem>>, vector<1x2x256xf32>
    %15 = vector.shape_cast %14 : vector<1x2x256xf32> to vector<2x256xf32>
    %c7 = arith.constant 7 : index
    %c0_18 = arith.constant 0 : index
    %c0_19 = arith.constant 0 : index
    %16 = vector.load %arg0[%c7, %c0_18, %c0_19] : memref<8x2x256xf32, #tpu.memory_space<vmem>>, vector<1x2x256xf32>
    %17 = vector.shape_cast %16 : vector<1x2x256xf32> to vector<2x256xf32>
    %cst = arith.constant 0.000000e+00 : f32
    %18 = vector.broadcast %cst : f32 to vector<2x32xf32>
    %cst_20 = arith.constant 0.000000e+00 : f32
    %19 = vector.broadcast %cst_20 : f32 to vector<2x32xf32>
    %cst_21 = arith.constant 0.000000e+00 : f32
    %20 = vector.broadcast %cst_21 : f32 to vector<2x32xf32>
    %cst_22 = arith.constant 0.000000e+00 : f32
    %21 = vector.broadcast %cst_22 : f32 to vector<2x32xf32>
    %cst_23 = arith.constant dense<0.000000e+00> : vector<2x128xf32>
    %22 = tpu.matmul %18, %0, %cst_23 {dimension_numbers = #tpu.dot_dimension_numbers<[1], [0], [0], [1], [0, 0, 1, 1], [], []>} : vector<2x32xf32>, vector<32x128xf32>, vector<2x128xf32> -> vector<2x128xf32>
    %23 = vector.extract_strided_slice %3 {offsets = [0, 0], sizes = [2, 128], strides = [1, 1]} : vector<2x256xf32> to vector<2x128xf32>
    %24 = arith.addf %22, %23 : vector<2x128xf32>
    %25 = arith.negf %24 : vector<2x128xf32>
    %26 = math.exp %25 : vector<2x128xf32>
    %cst_24 = arith.constant 1.000000e+00 : f32
    %27 = vector.broadcast %cst_24 : f32 to vector<2x128xf32>
    %28 = arith.addf %27, %26 : vector<2x128xf32>
    %29 = arith.divf %27, %28 : vector<2x128xf32>
    %30 = vector.extract_strided_slice %29 {offsets = [0, 0], sizes = [2, 32], strides = [1, 1]} : vector<2x128xf32> to vector<2x32xf32>
    %31 = vector.extract_strided_slice %29 {offsets = [0, 32], sizes = [2, 32], strides = [1, 1]} : vector<2x128xf32> to vector<2x32xf32>
    %32 = vector.extract_strided_slice %29 {offsets = [0, 96], sizes = [2, 32], strides = [1, 1]} : vector<2x128xf32> to vector<2x32xf32>
    %33 = vector.extract_strided_slice %29 {offsets = [0, 64], sizes = [2, 32], strides = [1, 1]} : vector<2x128xf32> to vector<2x32xf32>
    %cst_25 = arith.constant 2.000000e+00 : f32
    %34 = vector.broadcast %cst_25 : f32 to vector<2x32xf32>
    %35 = arith.mulf %33, %34 : vector<2x32xf32>
    %cst_26 = arith.constant 1.000000e+00 : f32
    %36 = vector.broadcast %cst_26 : f32 to vector<2x32xf32>
    %37 = arith.subf %35, %36 : vector<2x32xf32>
    %38 = arith.mulf %31, %20 : vector<2x32xf32>
    %39 = arith.mulf %30, %37 : vector<2x32xf32>
    %40 = arith.addf %38, %39 : vector<2x32xf32>
    %41 = math.tanh %40 : vector<2x32xf32>
    %42 = arith.mulf %32, %41 : vector<2x32xf32>
    %cst_27 = arith.constant dense<0.000000e+00> : vector<2x128xf32>
    %43 = tpu.matmul %19, %1, %cst_27 {dimension_numbers = #tpu.dot_dimension_numbers<[1], [0], [0], [1], [0, 0, 1, 1], [], []>} : vector<2x32xf32>, vector<32x128xf32>, vector<2x128xf32> -> vector<2x128xf32>
    %44 = vector.extract_strided_slice %17 {offsets = [0, 128], sizes = [2, 128], strides = [1, 1]} : vector<2x256xf32> to vector<2x128xf32>
    %45 = arith.addf %43, %44 : vector<2x128xf32>
    %46 = arith.negf %45 : vector<2x128xf32>
    %47 = math.exp %46 : vector<2x128xf32>
    %cst_28 = arith.constant 1.000000e+00 : f32
    %48 = vector.broadcast %cst_28 : f32 to vector<2x128xf32>
    %49 = arith.addf %48, %47 : vector<2x128xf32>
    %50 = arith.divf %48, %49 : vector<2x128xf32>
    %51 = vector.extract_strided_slice %50 {offsets = [0, 0], sizes = [2, 32], strides = [1, 1]} : vector<2x128xf32> to vector<2x32xf32>
    %52 = vector.extract_strided_slice %50 {offsets = [0, 32], sizes = [2, 32], strides = [1, 1]} : vector<2x128xf32> to vector<2x32xf32>
    %53 = vector.extract_strided_slice %50 {offsets = [0, 96], sizes = [2, 32], strides = [1, 1]} : vector<2x128xf32> to vector<2x32xf32>
    %54 = vector.extract_strided_slice %50 {offsets = [0, 64], sizes = [2, 32], strides = [1, 1]} : vector<2x128xf32> to vector<2x32xf32>
    %cst_29 = arith.constant 2.000000e+00 : f32
    %55 = vector.broadcast %cst_29 : f32 to vector<2x32xf32>
    %56 = arith.mulf %54, %55 : vector<2x32xf32>
    %cst_30 = arith.constant 1.000000e+00 : f32
    %57 = vector.broadcast %cst_30 : f32 to vector<2x32xf32>
    %58 = arith.subf %56, %57 : vector<2x32xf32>
    %59 = arith.mulf %52, %21 : vector<2x32xf32>
    %60 = arith.mulf %51, %58 : vector<2x32xf32>
    %61 = arith.addf %59, %60 : vector<2x32xf32>
    %62 = math.tanh %61 : vector<2x32xf32>
    %63 = arith.mulf %53, %62 : vector<2x32xf32>
    %cst_31 = arith.constant dense<0.000000e+00> : vector<2x128xf32>
    %64 = tpu.matmul %42, %0, %cst_31 {dimension_numbers = #tpu.dot_dimension_numbers<[1], [0], [0], [1], [0, 0, 1, 1], [], []>} : vector<2x32xf32>, vector<32x128xf32>, vector<2x128xf32> -> vector<2x128xf32>
    %65 = vector.extract_strided_slice %5 {offsets = [0, 0], sizes = [2, 128], strides = [1, 1]} : vector<2x256xf32> to vector<2x128xf32>
    %66 = arith.addf %64, %65 : vector<2x128xf32>
    %67 = arith.negf %66 : vector<2x128xf32>
    %68 = math.exp %67 : vector<2x128xf32>
    %cst_32 = arith.constant 1.000000e+00 : f32
    %69 = vector.broadcast %cst_32 : f32 to vector<2x128xf32>
    %70 = arith.addf %69, %68 : vector<2x128xf32>
    %71 = arith.divf %69, %70 : vector<2x128xf32>
    %72 = vector.extract_strided_slice %71 {offsets = [0, 0], sizes = [2, 32], strides = [1, 1]} : vector<2x128xf32> to vector<2x32xf32>
    %73 = vector.extract_strided_slice %71 {offsets = [0, 32], sizes = [2, 32], strides = [1, 1]} : vector<2x128xf32> to vector<2x32xf32>
    %74 = vector.extract_strided_slice %71 {offsets = [0, 96], sizes = [2, 32], strides = [1, 1]} : vector<2x128xf32> to vector<2x32xf32>
    %75 = vector.extract_strided_slice %71 {offsets = [0, 64], sizes = [2, 32], strides = [1, 1]} : vector<2x128xf32> to vector<2x32xf32>
    %cst_33 = arith.constant 2.000000e+00 : f32
    %76 = vector.broadcast %cst_33 : f32 to vector<2x32xf32>
    %77 = arith.mulf %75, %76 : vector<2x32xf32>
    %cst_34 = arith.constant 1.000000e+00 : f32
    %78 = vector.broadcast %cst_34 : f32 to vector<2x32xf32>
    %79 = arith.subf %77, %78 : vector<2x32xf32>
    %80 = arith.mulf %73, %40 : vector<2x32xf32>
    %81 = arith.mulf %72, %79 : vector<2x32xf32>
    %82 = arith.addf %80, %81 : vector<2x32xf32>
    %83 = math.tanh %82 : vector<2x32xf32>
    %84 = arith.mulf %74, %83 : vector<2x32xf32>
    %cst_35 = arith.constant dense<0.000000e+00> : vector<2x128xf32>
    %85 = tpu.matmul %63, %1, %cst_35 {dimension_numbers = #tpu.dot_dimension_numbers<[1], [0], [0], [1], [0, 0, 1, 1], [], []>} : vector<2x32xf32>, vector<32x128xf32>, vector<2x128xf32> -> vector<2x128xf32>
    %86 = vector.extract_strided_slice %15 {offsets = [0, 128], sizes = [2, 128], strides = [1, 1]} : vector<2x256xf32> to vector<2x128xf32>
    %87 = arith.addf %85, %86 : vector<2x128xf32>
    %88 = arith.negf %87 : vector<2x128xf32>
    %89 = math.exp %88 : vector<2x128xf32>
    %cst_36 = arith.constant 1.000000e+00 : f32
    %90 = vector.broadcast %cst_36 : f32 to vector<2x128xf32>
    %91 = arith.addf %90, %89 : vector<2x128xf32>
    %92 = arith.divf %90, %91 : vector<2x128xf32>
    %93 = vector.extract_strided_slice %92 {offsets = [0, 0], sizes = [2, 32], strides = [1, 1]} : vector<2x128xf32> to vector<2x32xf32>
    %94 = vector.extract_strided_slice %92 {offsets = [0, 32], sizes = [2, 32], strides = [1, 1]} : vector<2x128xf32> to vector<2x32xf32>
    %95 = vector.extract_strided_slice %92 {offsets = [0, 96], sizes = [2, 32], strides = [1, 1]} : vector<2x128xf32> to vector<2x32xf32>
    %96 = vector.extract_strided_slice %92 {offsets = [0, 64], sizes = [2, 32], strides = [1, 1]} : vector<2x128xf32> to vector<2x32xf32>
    %cst_37 = arith.constant 2.000000e+00 : f32
    %97 = vector.broadcast %cst_37 : f32 to vector<2x32xf32>
    %98 = arith.mulf %96, %97 : vector<2x32xf32>
    %cst_38 = arith.constant 1.000000e+00 : f32
    %99 = vector.broadcast %cst_38 : f32 to vector<2x32xf32>
    %100 = arith.subf %98, %99 : vector<2x32xf32>
    %101 = arith.mulf %94, %61 : vector<2x32xf32>
    %102 = arith.mulf %93, %100 : vector<2x32xf32>
    %103 = arith.addf %101, %102 : vector<2x32xf32>
    %104 = math.tanh %103 : vector<2x32xf32>
    %105 = arith.mulf %95, %104 : vector<2x32xf32>
    %cst_39 = arith.constant dense<0.000000e+00> : vector<2x128xf32>
    %106 = tpu.matmul %84, %0, %cst_39 {dimension_numbers = #tpu.dot_dimension_numbers<[1], [0], [0], [1], [0, 0, 1, 1], [], []>} : vector<2x32xf32>, vector<32x128xf32>, vector<2x128xf32> -> vector<2x128xf32>
    %107 = vector.extract_strided_slice %7 {offsets = [0, 0], sizes = [2, 128], strides = [1, 1]} : vector<2x256xf32> to vector<2x128xf32>
    %108 = arith.addf %106, %107 : vector<2x128xf32>
    %109 = arith.negf %108 : vector<2x128xf32>
    %110 = math.exp %109 : vector<2x128xf32>
    %cst_40 = arith.constant 1.000000e+00 : f32
    %111 = vector.broadcast %cst_40 : f32 to vector<2x128xf32>
    %112 = arith.addf %111, %110 : vector<2x128xf32>
    %113 = arith.divf %111, %112 : vector<2x128xf32>
    %114 = vector.extract_strided_slice %113 {offsets = [0, 0], sizes = [2, 32], strides = [1, 1]} : vector<2x128xf32> to vector<2x32xf32>
    %115 = vector.extract_strided_slice %113 {offsets = [0, 32], sizes = [2, 32], strides = [1, 1]} : vector<2x128xf32> to vector<2x32xf32>
    %116 = vector.extract_strided_slice %113 {offsets = [0, 96], sizes = [2, 32], strides = [1, 1]} : vector<2x128xf32> to vector<2x32xf32>
    %117 = vector.extract_strided_slice %113 {offsets = [0, 64], sizes = [2, 32], strides = [1, 1]} : vector<2x128xf32> to vector<2x32xf32>
    %cst_41 = arith.constant 2.000000e+00 : f32
    %118 = vector.broadcast %cst_41 : f32 to vector<2x32xf32>
    %119 = arith.mulf %117, %118 : vector<2x32xf32>
    %cst_42 = arith.constant 1.000000e+00 : f32
    %120 = vector.broadcast %cst_42 : f32 to vector<2x32xf32>
    %121 = arith.subf %119, %120 : vector<2x32xf32>
    %122 = arith.mulf %115, %82 : vector<2x32xf32>
    %123 = arith.mulf %114, %121 : vector<2x32xf32>
    %124 = arith.addf %122, %123 : vector<2x32xf32>
    %125 = math.tanh %124 : vector<2x32xf32>
    %126 = arith.mulf %116, %125 : vector<2x32xf32>
    %cst_43 = arith.constant dense<0.000000e+00> : vector<2x128xf32>
    %127 = tpu.matmul %105, %1, %cst_43 {dimension_numbers = #tpu.dot_dimension_numbers<[1], [0], [0], [1], [0, 0, 1, 1], [], []>} : vector<2x32xf32>, vector<32x128xf32>, vector<2x128xf32> -> vector<2x128xf32>
    %128 = vector.extract_strided_slice %13 {offsets = [0, 128], sizes = [2, 128], strides = [1, 1]} : vector<2x256xf32> to vector<2x128xf32>
    %129 = arith.addf %127, %128 : vector<2x128xf32>
    %130 = arith.negf %129 : vector<2x128xf32>
    %131 = math.exp %130 : vector<2x128xf32>
    %cst_44 = arith.constant 1.000000e+00 : f32
    %132 = vector.broadcast %cst_44 : f32 to vector<2x128xf32>
    %133 = arith.addf %132, %131 : vector<2x128xf32>
    %134 = arith.divf %132, %133 : vector<2x128xf32>
    %135 = vector.extract_strided_slice %134 {offsets = [0, 0], sizes = [2, 32], strides = [1, 1]} : vector<2x128xf32> to vector<2x32xf32>
    %136 = vector.extract_strided_slice %134 {offsets = [0, 32], sizes = [2, 32], strides = [1, 1]} : vector<2x128xf32> to vector<2x32xf32>
    %137 = vector.extract_strided_slice %134 {offsets = [0, 96], sizes = [2, 32], strides = [1, 1]} : vector<2x128xf32> to vector<2x32xf32>
    %138 = vector.extract_strided_slice %134 {offsets = [0, 64], sizes = [2, 32], strides = [1, 1]} : vector<2x128xf32> to vector<2x32xf32>
    %cst_45 = arith.constant 2.000000e+00 : f32
    %139 = vector.broadcast %cst_45 : f32 to vector<2x32xf32>
    %140 = arith.mulf %138, %139 : vector<2x32xf32>
    %cst_46 = arith.constant 1.000000e+00 : f32
    %141 = vector.broadcast %cst_46 : f32 to vector<2x32xf32>
    %142 = arith.subf %140, %141 : vector<2x32xf32>
    %143 = arith.mulf %136, %103 : vector<2x32xf32>
    %144 = arith.mulf %135, %142 : vector<2x32xf32>
    %145 = arith.addf %143, %144 : vector<2x32xf32>
    %146 = math.tanh %145 : vector<2x32xf32>
    %147 = arith.mulf %137, %146 : vector<2x32xf32>
    %cst_47 = arith.constant dense<0.000000e+00> : vector<2x128xf32>
    %148 = tpu.matmul %126, %0, %cst_47 {dimension_numbers = #tpu.dot_dimension_numbers<[1], [0], [0], [1], [0, 0, 1, 1], [], []>} : vector<2x32xf32>, vector<32x128xf32>, vector<2x128xf32> -> vector<2x128xf32>
    %149 = vector.extract_strided_slice %9 {offsets = [0, 0], sizes = [2, 128], strides = [1, 1]} : vector<2x256xf32> to vector<2x128xf32>
    %150 = arith.addf %148, %149 : vector<2x128xf32>
    %151 = arith.negf %150 : vector<2x128xf32>
    %152 = math.exp %151 : vector<2x128xf32>
    %cst_48 = arith.constant 1.000000e+00 : f32
    %153 = vector.broadcast %cst_48 : f32 to vector<2x128xf32>
    %154 = arith.addf %153, %152 : vector<2x128xf32>
    %155 = arith.divf %153, %154 : vector<2x128xf32>
    %156 = vector.extract_strided_slice %155 {offsets = [0, 0], sizes = [2, 32], strides = [1, 1]} : vector<2x128xf32> to vector<2x32xf32>
    %157 = vector.extract_strided_slice %155 {offsets = [0, 32], sizes = [2, 32], strides = [1, 1]} : vector<2x128xf32> to vector<2x32xf32>
    %158 = vector.extract_strided_slice %155 {offsets = [0, 96], sizes = [2, 32], strides = [1, 1]} : vector<2x128xf32> to vector<2x32xf32>
    %159 = vector.extract_strided_slice %155 {offsets = [0, 64], sizes = [2, 32], strides = [1, 1]} : vector<2x128xf32> to vector<2x32xf32>
    %cst_49 = arith.constant 2.000000e+00 : f32
    %160 = vector.broadcast %cst_49 : f32 to vector<2x32xf32>
    %161 = arith.mulf %159, %160 : vector<2x32xf32>
    %cst_50 = arith.constant 1.000000e+00 : f32
    %162 = vector.broadcast %cst_50 : f32 to vector<2x32xf32>
    %163 = arith.subf %161, %162 : vector<2x32xf32>
    %164 = arith.mulf %157, %124 : vector<2x32xf32>
    %165 = arith.mulf %156, %163 : vector<2x32xf32>
    %166 = arith.addf %164, %165 : vector<2x32xf32>
    %167 = math.tanh %166 : vector<2x32xf32>
    %168 = arith.mulf %158, %167 : vector<2x32xf32>
    %cst_51 = arith.constant dense<0.000000e+00> : vector<2x128xf32>
    %169 = tpu.matmul %147, %1, %cst_51 {dimension_numbers = #tpu.dot_dimension_numbers<[1], [0], [0], [1], [0, 0, 1, 1], [], []>} : vector<2x32xf32>, vector<32x128xf32>, vector<2x128xf32> -> vector<2x128xf32>
    %170 = vector.extract_strided_slice %11 {offsets = [0, 128], sizes = [2, 128], strides = [1, 1]} : vector<2x256xf32> to vector<2x128xf32>
    %171 = arith.addf %169, %170 : vector<2x128xf32>
    %172 = arith.negf %171 : vector<2x128xf32>
    %173 = math.exp %172 : vector<2x128xf32>
    %cst_52 = arith.constant 1.000000e+00 : f32
    %174 = vector.broadcast %cst_52 : f32 to vector<2x128xf32>
    %175 = arith.addf %174, %173 : vector<2x128xf32>
    %176 = arith.divf %174, %175 : vector<2x128xf32>
    %177 = vector.extract_strided_slice %176 {offsets = [0, 0], sizes = [2, 32], strides = [1, 1]} : vector<2x128xf32> to vector<2x32xf32>
    %178 = vector.extract_strided_slice %176 {offsets = [0, 32], sizes = [2, 32], strides = [1, 1]} : vector<2x128xf32> to vector<2x32xf32>
    %179 = vector.extract_strided_slice %176 {offsets = [0, 96], sizes = [2, 32], strides = [1, 1]} : vector<2x128xf32> to vector<2x32xf32>
    %180 = vector.extract_strided_slice %176 {offsets = [0, 64], sizes = [2, 32], strides = [1, 1]} : vector<2x128xf32> to vector<2x32xf32>
    %cst_53 = arith.constant 2.000000e+00 : f32
    %181 = vector.broadcast %cst_53 : f32 to vector<2x32xf32>
    %182 = arith.mulf %180, %181 : vector<2x32xf32>
    %cst_54 = arith.constant 1.000000e+00 : f32
    %183 = vector.broadcast %cst_54 : f32 to vector<2x32xf32>
    %184 = arith.subf %182, %183 : vector<2x32xf32>
    %185 = arith.mulf %178, %145 : vector<2x32xf32>
    %186 = arith.mulf %177, %184 : vector<2x32xf32>
    %187 = arith.addf %185, %186 : vector<2x32xf32>
    %188 = math.tanh %187 : vector<2x32xf32>
    %189 = arith.mulf %179, %188 : vector<2x32xf32>
    %cst_55 = arith.constant dense<0.000000e+00> : vector<2x128xf32>
    %190 = tpu.matmul %168, %0, %cst_55 {dimension_numbers = #tpu.dot_dimension_numbers<[1], [0], [0], [1], [0, 0, 1, 1], [], []>} : vector<2x32xf32>, vector<32x128xf32>, vector<2x128xf32> -> vector<2x128xf32>
    %191 = vector.extract_strided_slice %11 {offsets = [0, 0], sizes = [2, 128], strides = [1, 1]} : vector<2x256xf32> to vector<2x128xf32>
    %192 = arith.addf %190, %191 : vector<2x128xf32>
    %193 = arith.negf %192 : vector<2x128xf32>
    %194 = math.exp %193 : vector<2x128xf32>
    %cst_56 = arith.constant 1.000000e+00 : f32
    %195 = vector.broadcast %cst_56 : f32 to vector<2x128xf32>
    %196 = arith.addf %195, %194 : vector<2x128xf32>
    %197 = arith.divf %195, %196 : vector<2x128xf32>
    %198 = vector.extract_strided_slice %197 {offsets = [0, 0], sizes = [2, 32], strides = [1, 1]} : vector<2x128xf32> to vector<2x32xf32>
    %199 = vector.extract_strided_slice %197 {offsets = [0, 32], sizes = [2, 32], strides = [1, 1]} : vector<2x128xf32> to vector<2x32xf32>
    %200 = vector.extract_strided_slice %197 {offsets = [0, 96], sizes = [2, 32], strides = [1, 1]} : vector<2x128xf32> to vector<2x32xf32>
    %201 = vector.extract_strided_slice %197 {offsets = [0, 64], sizes = [2, 32], strides = [1, 1]} : vector<2x128xf32> to vector<2x32xf32>
    %cst_57 = arith.constant 2.000000e+00 : f32
    %202 = vector.broadcast %cst_57 : f32 to vector<2x32xf32>
    %203 = arith.mulf %201, %202 : vector<2x32xf32>
    %cst_58 = arith.constant 1.000000e+00 : f32
    %204 = vector.broadcast %cst_58 : f32 to vector<2x32xf32>
    %205 = arith.subf %203, %204 : vector<2x32xf32>
    %206 = arith.mulf %199, %166 : vector<2x32xf32>
    %207 = arith.mulf %198, %205 : vector<2x32xf32>
    %208 = arith.addf %206, %207 : vector<2x32xf32>
    %209 = math.tanh %208 : vector<2x32xf32>
    %210 = arith.mulf %200, %209 : vector<2x32xf32>
    %cst_59 = arith.constant dense<0.000000e+00> : vector<2x128xf32>
    %211 = tpu.matmul %189, %1, %cst_59 {dimension_numbers = #tpu.dot_dimension_numbers<[1], [0], [0], [1], [0, 0, 1, 1], [], []>} : vector<2x32xf32>, vector<32x128xf32>, vector<2x128xf32> -> vector<2x128xf32>
    %212 = vector.extract_strided_slice %9 {offsets = [0, 128], sizes = [2, 128], strides = [1, 1]} : vector<2x256xf32> to vector<2x128xf32>
    %213 = arith.addf %211, %212 : vector<2x128xf32>
    %214 = arith.negf %213 : vector<2x128xf32>
    %215 = math.exp %214 : vector<2x128xf32>
    %cst_60 = arith.constant 1.000000e+00 : f32
    %216 = vector.broadcast %cst_60 : f32 to vector<2x128xf32>
    %217 = arith.addf %216, %215 : vector<2x128xf32>
    %218 = arith.divf %216, %217 : vector<2x128xf32>
    %219 = vector.extract_strided_slice %218 {offsets = [0, 0], sizes = [2, 32], strides = [1, 1]} : vector<2x128xf32> to vector<2x32xf32>
    %220 = vector.extract_strided_slice %218 {offsets = [0, 32], sizes = [2, 32], strides = [1, 1]} : vector<2x128xf32> to vector<2x32xf32>
    %221 = vector.extract_strided_slice %218 {offsets = [0, 96], sizes = [2, 32], strides = [1, 1]} : vector<2x128xf32> to vector<2x32xf32>
    %222 = vector.extract_strided_slice %218 {offsets = [0, 64], sizes = [2, 32], strides = [1, 1]} : vector<2x128xf32> to vector<2x32xf32>
    %cst_61 = arith.constant 2.000000e+00 : f32
    %223 = vector.broadcast %cst_61 : f32 to vector<2x32xf32>
    %224 = arith.mulf %222, %223 : vector<2x32xf32>
    %cst_62 = arith.constant 1.000000e+00 : f32
    %225 = vector.broadcast %cst_62 : f32 to vector<2x32xf32>
    %226 = arith.subf %224, %225 : vector<2x32xf32>
    %227 = arith.mulf %220, %187 : vector<2x32xf32>
    %228 = arith.mulf %219, %226 : vector<2x32xf32>
    %229 = arith.addf %227, %228 : vector<2x32xf32>
    %230 = math.tanh %229 : vector<2x32xf32>
    %231 = arith.mulf %221, %230 : vector<2x32xf32>
    %cst_63 = arith.constant dense<0.000000e+00> : vector<2x128xf32>
    %232 = tpu.matmul %210, %0, %cst_63 {dimension_numbers = #tpu.dot_dimension_numbers<[1], [0], [0], [1], [0, 0, 1, 1], [], []>} : vector<2x32xf32>, vector<32x128xf32>, vector<2x128xf32> -> vector<2x128xf32>
    %233 = vector.extract_strided_slice %13 {offsets = [0, 0], sizes = [2, 128], strides = [1, 1]} : vector<2x256xf32> to vector<2x128xf32>
    %234 = arith.addf %232, %233 : vector<2x128xf32>
    %235 = arith.negf %234 : vector<2x128xf32>
    %236 = math.exp %235 : vector<2x128xf32>
    %cst_64 = arith.constant 1.000000e+00 : f32
    %237 = vector.broadcast %cst_64 : f32 to vector<2x128xf32>
    %238 = arith.addf %237, %236 : vector<2x128xf32>
    %239 = arith.divf %237, %238 : vector<2x128xf32>
    %240 = vector.extract_strided_slice %239 {offsets = [0, 0], sizes = [2, 32], strides = [1, 1]} : vector<2x128xf32> to vector<2x32xf32>
    %241 = vector.extract_strided_slice %239 {offsets = [0, 32], sizes = [2, 32], strides = [1, 1]} : vector<2x128xf32> to vector<2x32xf32>
    %242 = vector.extract_strided_slice %239 {offsets = [0, 96], sizes = [2, 32], strides = [1, 1]} : vector<2x128xf32> to vector<2x32xf32>
    %243 = vector.extract_strided_slice %239 {offsets = [0, 64], sizes = [2, 32], strides = [1, 1]} : vector<2x128xf32> to vector<2x32xf32>
    %cst_65 = arith.constant 2.000000e+00 : f32
    %244 = vector.broadcast %cst_65 : f32 to vector<2x32xf32>
    %245 = arith.mulf %243, %244 : vector<2x32xf32>
    %cst_66 = arith.constant 1.000000e+00 : f32
    %246 = vector.broadcast %cst_66 : f32 to vector<2x32xf32>
    %247 = arith.subf %245, %246 : vector<2x32xf32>
    %248 = arith.mulf %241, %208 : vector<2x32xf32>
    %249 = arith.mulf %240, %247 : vector<2x32xf32>
    %250 = arith.addf %248, %249 : vector<2x32xf32>
    %251 = math.tanh %250 : vector<2x32xf32>
    %252 = arith.mulf %242, %251 : vector<2x32xf32>
    %cst_67 = arith.constant dense<0.000000e+00> : vector<2x128xf32>
    %253 = tpu.matmul %231, %1, %cst_67 {dimension_numbers = #tpu.dot_dimension_numbers<[1], [0], [0], [1], [0, 0, 1, 1], [], []>} : vector<2x32xf32>, vector<32x128xf32>, vector<2x128xf32> -> vector<2x128xf32>
    %254 = vector.extract_strided_slice %7 {offsets = [0, 128], sizes = [2, 128], strides = [1, 1]} : vector<2x256xf32> to vector<2x128xf32>
    %255 = arith.addf %253, %254 : vector<2x128xf32>
    %256 = arith.negf %255 : vector<2x128xf32>
    %257 = math.exp %256 : vector<2x128xf32>
    %cst_68 = arith.constant 1.000000e+00 : f32
    %258 = vector.broadcast %cst_68 : f32 to vector<2x128xf32>
    %259 = arith.addf %258, %257 : vector<2x128xf32>
    %260 = arith.divf %258, %259 : vector<2x128xf32>
    %261 = vector.extract_strided_slice %260 {offsets = [0, 0], sizes = [2, 32], strides = [1, 1]} : vector<2x128xf32> to vector<2x32xf32>
    %262 = vector.extract_strided_slice %260 {offsets = [0, 32], sizes = [2, 32], strides = [1, 1]} : vector<2x128xf32> to vector<2x32xf32>
    %263 = vector.extract_strided_slice %260 {offsets = [0, 96], sizes = [2, 32], strides = [1, 1]} : vector<2x128xf32> to vector<2x32xf32>
    %264 = vector.extract_strided_slice %260 {offsets = [0, 64], sizes = [2, 32], strides = [1, 1]} : vector<2x128xf32> to vector<2x32xf32>
    %cst_69 = arith.constant 2.000000e+00 : f32
    %265 = vector.broadcast %cst_69 : f32 to vector<2x32xf32>
    %266 = arith.mulf %264, %265 : vector<2x32xf32>
    %cst_70 = arith.constant 1.000000e+00 : f32
    %267 = vector.broadcast %cst_70 : f32 to vector<2x32xf32>
    %268 = arith.subf %266, %267 : vector<2x32xf32>
    %269 = arith.mulf %262, %229 : vector<2x32xf32>
    %270 = arith.mulf %261, %268 : vector<2x32xf32>
    %271 = arith.addf %269, %270 : vector<2x32xf32>
    %272 = math.tanh %271 : vector<2x32xf32>
    %273 = arith.mulf %263, %272 : vector<2x32xf32>
    %cst_71 = arith.constant dense<0.000000e+00> : vector<2x128xf32>
    %274 = tpu.matmul %252, %0, %cst_71 {dimension_numbers = #tpu.dot_dimension_numbers<[1], [0], [0], [1], [0, 0, 1, 1], [], []>} : vector<2x32xf32>, vector<32x128xf32>, vector<2x128xf32> -> vector<2x128xf32>
    %275 = vector.extract_strided_slice %15 {offsets = [0, 0], sizes = [2, 128], strides = [1, 1]} : vector<2x256xf32> to vector<2x128xf32>
    %276 = arith.addf %274, %275 : vector<2x128xf32>
    %277 = arith.negf %276 : vector<2x128xf32>
    %278 = math.exp %277 : vector<2x128xf32>
    %cst_72 = arith.constant 1.000000e+00 : f32
    %279 = vector.broadcast %cst_72 : f32 to vector<2x128xf32>
    %280 = arith.addf %279, %278 : vector<2x128xf32>
    %281 = arith.divf %279, %280 : vector<2x128xf32>
    %282 = vector.extract_strided_slice %281 {offsets = [0, 0], sizes = [2, 32], strides = [1, 1]} : vector<2x128xf32> to vector<2x32xf32>
    %283 = vector.extract_strided_slice %281 {offsets = [0, 32], sizes = [2, 32], strides = [1, 1]} : vector<2x128xf32> to vector<2x32xf32>
    %284 = vector.extract_strided_slice %281 {offsets = [0, 96], sizes = [2, 32], strides = [1, 1]} : vector<2x128xf32> to vector<2x32xf32>
    %285 = vector.extract_strided_slice %281 {offsets = [0, 64], sizes = [2, 32], strides = [1, 1]} : vector<2x128xf32> to vector<2x32xf32>
    %cst_73 = arith.constant 2.000000e+00 : f32
    %286 = vector.broadcast %cst_73 : f32 to vector<2x32xf32>
    %287 = arith.mulf %285, %286 : vector<2x32xf32>
    %cst_74 = arith.constant 1.000000e+00 : f32
    %288 = vector.broadcast %cst_74 : f32 to vector<2x32xf32>
    %289 = arith.subf %287, %288 : vector<2x32xf32>
    %290 = arith.mulf %283, %250 : vector<2x32xf32>
    %291 = arith.mulf %282, %289 : vector<2x32xf32>
    %292 = arith.addf %290, %291 : vector<2x32xf32>
    %293 = math.tanh %292 : vector<2x32xf32>
    %294 = arith.mulf %284, %293 : vector<2x32xf32>
    %cst_75 = arith.constant dense<0.000000e+00> : vector<2x128xf32>
    %295 = tpu.matmul %273, %1, %cst_75 {dimension_numbers = #tpu.dot_dimension_numbers<[1], [0], [0], [1], [0, 0, 1, 1], [], []>} : vector<2x32xf32>, vector<32x128xf32>, vector<2x128xf32> -> vector<2x128xf32>
    %296 = vector.extract_strided_slice %5 {offsets = [0, 128], sizes = [2, 128], strides = [1, 1]} : vector<2x256xf32> to vector<2x128xf32>
    %297 = arith.addf %295, %296 : vector<2x128xf32>
    %298 = arith.negf %297 : vector<2x128xf32>
    %299 = math.exp %298 : vector<2x128xf32>
    %cst_76 = arith.constant 1.000000e+00 : f32
    %300 = vector.broadcast %cst_76 : f32 to vector<2x128xf32>
    %301 = arith.addf %300, %299 : vector<2x128xf32>
    %302 = arith.divf %300, %301 : vector<2x128xf32>
    %303 = vector.extract_strided_slice %302 {offsets = [0, 0], sizes = [2, 32], strides = [1, 1]} : vector<2x128xf32> to vector<2x32xf32>
    %304 = vector.extract_strided_slice %302 {offsets = [0, 32], sizes = [2, 32], strides = [1, 1]} : vector<2x128xf32> to vector<2x32xf32>
    %305 = vector.extract_strided_slice %302 {offsets = [0, 96], sizes = [2, 32], strides = [1, 1]} : vector<2x128xf32> to vector<2x32xf32>
    %306 = vector.extract_strided_slice %302 {offsets = [0, 64], sizes = [2, 32], strides = [1, 1]} : vector<2x128xf32> to vector<2x32xf32>
    %cst_77 = arith.constant 2.000000e+00 : f32
    %307 = vector.broadcast %cst_77 : f32 to vector<2x32xf32>
    %308 = arith.mulf %306, %307 : vector<2x32xf32>
    %cst_78 = arith.constant 1.000000e+00 : f32
    %309 = vector.broadcast %cst_78 : f32 to vector<2x32xf32>
    %310 = arith.subf %308, %309 : vector<2x32xf32>
    %311 = arith.mulf %304, %271 : vector<2x32xf32>
    %312 = arith.mulf %303, %310 : vector<2x32xf32>
    %313 = arith.addf %311, %312 : vector<2x32xf32>
    %314 = math.tanh %313 : vector<2x32xf32>
    %315 = arith.mulf %305, %314 : vector<2x32xf32>
    %cst_79 = arith.constant dense<0.000000e+00> : vector<2x128xf32>
    %316 = tpu.matmul %294, %0, %cst_79 {dimension_numbers = #tpu.dot_dimension_numbers<[1], [0], [0], [1], [0, 0, 1, 1], [], []>} : vector<2x32xf32>, vector<32x128xf32>, vector<2x128xf32> -> vector<2x128xf32>
    %317 = vector.extract_strided_slice %17 {offsets = [0, 0], sizes = [2, 128], strides = [1, 1]} : vector<2x256xf32> to vector<2x128xf32>
    %318 = arith.addf %316, %317 : vector<2x128xf32>
    %319 = arith.negf %318 : vector<2x128xf32>
    %320 = math.exp %319 : vector<2x128xf32>
    %cst_80 = arith.constant 1.000000e+00 : f32
    %321 = vector.broadcast %cst_80 : f32 to vector<2x128xf32>
    %322 = arith.addf %321, %320 : vector<2x128xf32>
    %323 = arith.divf %321, %322 : vector<2x128xf32>
    %324 = vector.extract_strided_slice %323 {offsets = [0, 0], sizes = [2, 32], strides = [1, 1]} : vector<2x128xf32> to vector<2x32xf32>
    %325 = vector.extract_strided_slice %323 {offsets = [0, 32], sizes = [2, 32], strides = [1, 1]} : vector<2x128xf32> to vector<2x32xf32>
    %326 = vector.extract_strided_slice %323 {offsets = [0, 96], sizes = [2, 32], strides = [1, 1]} : vector<2x128xf32> to vector<2x32xf32>
    %327 = vector.extract_strided_slice %323 {offsets = [0, 64], sizes = [2, 32], strides = [1, 1]} : vector<2x128xf32> to vector<2x32xf32>
    %cst_81 = arith.constant 2.000000e+00 : f32
    %328 = vector.broadcast %cst_81 : f32 to vector<2x32xf32>
    %329 = arith.mulf %327, %328 : vector<2x32xf32>
    %cst_82 = arith.constant 1.000000e+00 : f32
    %330 = vector.broadcast %cst_82 : f32 to vector<2x32xf32>
    %331 = arith.subf %329, %330 : vector<2x32xf32>
    %332 = arith.mulf %325, %292 : vector<2x32xf32>
    %333 = arith.mulf %324, %331 : vector<2x32xf32>
    %334 = arith.addf %332, %333 : vector<2x32xf32>
    %335 = math.tanh %334 : vector<2x32xf32>
    %336 = arith.mulf %326, %335 : vector<2x32xf32>
    %cst_83 = arith.constant dense<0.000000e+00> : vector<2x128xf32>
    %337 = tpu.matmul %315, %1, %cst_83 {dimension_numbers = #tpu.dot_dimension_numbers<[1], [0], [0], [1], [0, 0, 1, 1], [], []>} : vector<2x32xf32>, vector<32x128xf32>, vector<2x128xf32> -> vector<2x128xf32>
    %338 = vector.extract_strided_slice %3 {offsets = [0, 128], sizes = [2, 128], strides = [1, 1]} : vector<2x256xf32> to vector<2x128xf32>
    %339 = arith.addf %337, %338 : vector<2x128xf32>
    %340 = arith.negf %339 : vector<2x128xf32>
    %341 = math.exp %340 : vector<2x128xf32>
    %cst_84 = arith.constant 1.000000e+00 : f32
    %342 = vector.broadcast %cst_84 : f32 to vector<2x128xf32>
    %343 = arith.addf %342, %341 : vector<2x128xf32>
    %344 = arith.divf %342, %343 : vector<2x128xf32>
    %345 = vector.extract_strided_slice %344 {offsets = [0, 0], sizes = [2, 32], strides = [1, 1]} : vector<2x128xf32> to vector<2x32xf32>
    %346 = vector.extract_strided_slice %344 {offsets = [0, 32], sizes = [2, 32], strides = [1, 1]} : vector<2x128xf32> to vector<2x32xf32>
    %347 = vector.extract_strided_slice %344 {offsets = [0, 96], sizes = [2, 32], strides = [1, 1]} : vector<2x128xf32> to vector<2x32xf32>
    %348 = vector.extract_strided_slice %344 {offsets = [0, 64], sizes = [2, 32], strides = [1, 1]} : vector<2x128xf32> to vector<2x32xf32>
    %cst_85 = arith.constant 2.000000e+00 : f32
    %349 = vector.broadcast %cst_85 : f32 to vector<2x32xf32>
    %350 = arith.mulf %348, %349 : vector<2x32xf32>
    %cst_86 = arith.constant 1.000000e+00 : f32
    %351 = vector.broadcast %cst_86 : f32 to vector<2x32xf32>
    %352 = arith.subf %350, %351 : vector<2x32xf32>
    %353 = arith.mulf %346, %313 : vector<2x32xf32>
    %354 = arith.mulf %345, %352 : vector<2x32xf32>
    %355 = arith.addf %353, %354 : vector<2x32xf32>
    %356 = math.tanh %355 : vector<2x32xf32>
    %357 = arith.mulf %347, %356 : vector<2x32xf32>
    %c0_87 = arith.constant 0 : index
    %c0_88 = arith.constant 0 : index
    %358 = vector.load %arg6[%c0_87, %c0_88] : memref<32x128xf32, #tpu.memory_space<vmem>>, vector<32x128xf32>
    %c0_89 = arith.constant 0 : index
    %c0_90 = arith.constant 0 : index
    %359 = vector.load %arg7[%c0_89, %c0_90] : memref<32x128xf32, #tpu.memory_space<vmem>>, vector<32x128xf32>
    %c0_91 = arith.constant 0 : index
    %c0_92 = arith.constant 0 : index
    %360 = vector.load %arg3[%c0_91, %c0_92] : memref<32x256xf32, #tpu.memory_space<vmem>>, vector<32x256xf32>
    %c0_93 = arith.constant 0 : index
    %c0_94 = arith.constant 0 : index
    %361 = vector.load %arg4[%c0_93, %c0_94] : memref<32x256xf32, #tpu.memory_space<vmem>>, vector<32x256xf32>
    %c0_95 = arith.constant 0 : index
    %c0_96 = arith.constant 0 : index
    %362 = vector.load %arg5[%c0_95, %c0_96] : memref<1x256xf32, #tpu.memory_space<vmem>>, vector<1x256xf32>
    %cst_97 = arith.constant dense<0.000000e+00> : vector<2x256xf32>
    %363 = tpu.matmul %42, %360, %cst_97 {dimension_numbers = #tpu.dot_dimension_numbers<[1], [0], [0], [1], [0, 0, 1, 1], [], []>} : vector<2x32xf32>, vector<32x256xf32>, vector<2x256xf32> -> vector<2x256xf32>
    %364 = vector.broadcast %362 : vector<1x256xf32> to vector<2x256xf32>
    %365 = arith.addf %364, %363 : vector<2x256xf32>
    %cst_98 = arith.constant dense<0.000000e+00> : vector<2x256xf32>
    %366 = tpu.matmul %357, %361, %cst_98 {dimension_numbers = #tpu.dot_dimension_numbers<[1], [0], [0], [1], [0, 0, 1, 1], [], []>} : vector<2x32xf32>, vector<32x256xf32>, vector<2x256xf32> -> vector<2x256xf32>
    %367 = arith.addf %365, %366 : vector<2x256xf32>
    %cst_99 = arith.constant dense<0.000000e+00> : vector<2x256xf32>
    %368 = tpu.matmul %84, %360, %cst_99 {dimension_numbers = #tpu.dot_dimension_numbers<[1], [0], [0], [1], [0, 0, 1, 1], [], []>} : vector<2x32xf32>, vector<32x256xf32>, vector<2x256xf32> -> vector<2x256xf32>
    %369 = vector.broadcast %362 : vector<1x256xf32> to vector<2x256xf32>
    %370 = arith.addf %369, %368 : vector<2x256xf32>
    %cst_100 = arith.constant dense<0.000000e+00> : vector<2x256xf32>
    %371 = tpu.matmul %315, %361, %cst_100 {dimension_numbers = #tpu.dot_dimension_numbers<[1], [0], [0], [1], [0, 0, 1, 1], [], []>} : vector<2x32xf32>, vector<32x256xf32>, vector<2x256xf32> -> vector<2x256xf32>
    %372 = arith.addf %370, %371 : vector<2x256xf32>
    %cst_101 = arith.constant dense<0.000000e+00> : vector<2x256xf32>
    %373 = tpu.matmul %126, %360, %cst_101 {dimension_numbers = #tpu.dot_dimension_numbers<[1], [0], [0], [1], [0, 0, 1, 1], [], []>} : vector<2x32xf32>, vector<32x256xf32>, vector<2x256xf32> -> vector<2x256xf32>
    %374 = vector.broadcast %362 : vector<1x256xf32> to vector<2x256xf32>
    %375 = arith.addf %374, %373 : vector<2x256xf32>
    %cst_102 = arith.constant dense<0.000000e+00> : vector<2x256xf32>
    %376 = tpu.matmul %273, %361, %cst_102 {dimension_numbers = #tpu.dot_dimension_numbers<[1], [0], [0], [1], [0, 0, 1, 1], [], []>} : vector<2x32xf32>, vector<32x256xf32>, vector<2x256xf32> -> vector<2x256xf32>
    %377 = arith.addf %375, %376 : vector<2x256xf32>
    %cst_103 = arith.constant dense<0.000000e+00> : vector<2x256xf32>
    %378 = tpu.matmul %168, %360, %cst_103 {dimension_numbers = #tpu.dot_dimension_numbers<[1], [0], [0], [1], [0, 0, 1, 1], [], []>} : vector<2x32xf32>, vector<32x256xf32>, vector<2x256xf32> -> vector<2x256xf32>
    %379 = vector.broadcast %362 : vector<1x256xf32> to vector<2x256xf32>
    %380 = arith.addf %379, %378 : vector<2x256xf32>
    %cst_104 = arith.constant dense<0.000000e+00> : vector<2x256xf32>
    %381 = tpu.matmul %231, %361, %cst_104 {dimension_numbers = #tpu.dot_dimension_numbers<[1], [0], [0], [1], [0, 0, 1, 1], [], []>} : vector<2x32xf32>, vector<32x256xf32>, vector<2x256xf32> -> vector<2x256xf32>
    %382 = arith.addf %380, %381 : vector<2x256xf32>
    %cst_105 = arith.constant dense<0.000000e+00> : vector<2x256xf32>
    %383 = tpu.matmul %210, %360, %cst_105 {dimension_numbers = #tpu.dot_dimension_numbers<[1], [0], [0], [1], [0, 0, 1, 1], [], []>} : vector<2x32xf32>, vector<32x256xf32>, vector<2x256xf32> -> vector<2x256xf32>
    %384 = vector.broadcast %362 : vector<1x256xf32> to vector<2x256xf32>
    %385 = arith.addf %384, %383 : vector<2x256xf32>
    %cst_106 = arith.constant dense<0.000000e+00> : vector<2x256xf32>
    %386 = tpu.matmul %189, %361, %cst_106 {dimension_numbers = #tpu.dot_dimension_numbers<[1], [0], [0], [1], [0, 0, 1, 1], [], []>} : vector<2x32xf32>, vector<32x256xf32>, vector<2x256xf32> -> vector<2x256xf32>
    %387 = arith.addf %385, %386 : vector<2x256xf32>
    %cst_107 = arith.constant dense<0.000000e+00> : vector<2x256xf32>
    %388 = tpu.matmul %252, %360, %cst_107 {dimension_numbers = #tpu.dot_dimension_numbers<[1], [0], [0], [1], [0, 0, 1, 1], [], []>} : vector<2x32xf32>, vector<32x256xf32>, vector<2x256xf32> -> vector<2x256xf32>
    %389 = vector.broadcast %362 : vector<1x256xf32> to vector<2x256xf32>
    %390 = arith.addf %389, %388 : vector<2x256xf32>
    %cst_108 = arith.constant dense<0.000000e+00> : vector<2x256xf32>
    %391 = tpu.matmul %147, %361, %cst_108 {dimension_numbers = #tpu.dot_dimension_numbers<[1], [0], [0], [1], [0, 0, 1, 1], [], []>} : vector<2x32xf32>, vector<32x256xf32>, vector<2x256xf32> -> vector<2x256xf32>
    %392 = arith.addf %390, %391 : vector<2x256xf32>
    %cst_109 = arith.constant dense<0.000000e+00> : vector<2x256xf32>
    %393 = tpu.matmul %294, %360, %cst_109 {dimension_numbers = #tpu.dot_dimension_numbers<[1], [0], [0], [1], [0, 0, 1, 1], [], []>} : vector<2x32xf32>, vector<32x256xf32>, vector<2x256xf32> -> vector<2x256xf32>
    %394 = vector.broadcast %362 : vector<1x256xf32> to vector<2x256xf32>
    %395 = arith.addf %394, %393 : vector<2x256xf32>
    %cst_110 = arith.constant dense<0.000000e+00> : vector<2x256xf32>
    %396 = tpu.matmul %105, %361, %cst_110 {dimension_numbers = #tpu.dot_dimension_numbers<[1], [0], [0], [1], [0, 0, 1, 1], [], []>} : vector<2x32xf32>, vector<32x256xf32>, vector<2x256xf32> -> vector<2x256xf32>
    %397 = arith.addf %395, %396 : vector<2x256xf32>
    %cst_111 = arith.constant dense<0.000000e+00> : vector<2x256xf32>
    %398 = tpu.matmul %336, %360, %cst_111 {dimension_numbers = #tpu.dot_dimension_numbers<[1], [0], [0], [1], [0, 0, 1, 1], [], []>} : vector<2x32xf32>, vector<32x256xf32>, vector<2x256xf32> -> vector<2x256xf32>
    %399 = vector.broadcast %362 : vector<1x256xf32> to vector<2x256xf32>
    %400 = arith.addf %399, %398 : vector<2x256xf32>
    %cst_112 = arith.constant dense<0.000000e+00> : vector<2x256xf32>
    %401 = tpu.matmul %63, %361, %cst_112 {dimension_numbers = #tpu.dot_dimension_numbers<[1], [0], [0], [1], [0, 0, 1, 1], [], []>} : vector<2x32xf32>, vector<32x256xf32>, vector<2x256xf32> -> vector<2x256xf32>
    %402 = arith.addf %400, %401 : vector<2x256xf32>
    %cst_113 = arith.constant 0.000000e+00 : f32
    %403 = vector.broadcast %cst_113 : f32 to vector<2x32xf32>
    %cst_114 = arith.constant 0.000000e+00 : f32
    %404 = vector.broadcast %cst_114 : f32 to vector<2x32xf32>
    %cst_115 = arith.constant 0.000000e+00 : f32
    %405 = vector.broadcast %cst_115 : f32 to vector<2x32xf32>
    %cst_116 = arith.constant 0.000000e+00 : f32
    %406 = vector.broadcast %cst_116 : f32 to vector<2x32xf32>
    %cst_117 = arith.constant dense<0.000000e+00> : vector<2x128xf32>
    %407 = tpu.matmul %403, %358, %cst_117 {dimension_numbers = #tpu.dot_dimension_numbers<[1], [0], [0], [1], [0, 0, 1, 1], [], []>} : vector<2x32xf32>, vector<32x128xf32>, vector<2x128xf32> -> vector<2x128xf32>
    %408 = vector.extract_strided_slice %367 {offsets = [0, 0], sizes = [2, 128], strides = [1, 1]} : vector<2x256xf32> to vector<2x128xf32>
    %409 = arith.addf %407, %408 : vector<2x128xf32>
    %410 = arith.negf %409 : vector<2x128xf32>
    %411 = math.exp %410 : vector<2x128xf32>
    %cst_118 = arith.constant 1.000000e+00 : f32
    %412 = vector.broadcast %cst_118 : f32 to vector<2x128xf32>
    %413 = arith.addf %412, %411 : vector<2x128xf32>
    %414 = arith.divf %412, %413 : vector<2x128xf32>
    %415 = vector.extract_strided_slice %414 {offsets = [0, 0], sizes = [2, 32], strides = [1, 1]} : vector<2x128xf32> to vector<2x32xf32>
    %416 = vector.extract_strided_slice %414 {offsets = [0, 32], sizes = [2, 32], strides = [1, 1]} : vector<2x128xf32> to vector<2x32xf32>
    %417 = vector.extract_strided_slice %414 {offsets = [0, 96], sizes = [2, 32], strides = [1, 1]} : vector<2x128xf32> to vector<2x32xf32>
    %418 = vector.extract_strided_slice %414 {offsets = [0, 64], sizes = [2, 32], strides = [1, 1]} : vector<2x128xf32> to vector<2x32xf32>
    %cst_119 = arith.constant 2.000000e+00 : f32
    %419 = vector.broadcast %cst_119 : f32 to vector<2x32xf32>
    %420 = arith.mulf %418, %419 : vector<2x32xf32>
    %cst_120 = arith.constant 1.000000e+00 : f32
    %421 = vector.broadcast %cst_120 : f32 to vector<2x32xf32>
    %422 = arith.subf %420, %421 : vector<2x32xf32>
    %423 = arith.mulf %416, %405 : vector<2x32xf32>
    %424 = arith.mulf %415, %422 : vector<2x32xf32>
    %425 = arith.addf %423, %424 : vector<2x32xf32>
    %426 = math.tanh %425 : vector<2x32xf32>
    %427 = arith.mulf %417, %426 : vector<2x32xf32>
    %cst_121 = arith.constant dense<0.000000e+00> : vector<2x128xf32>
    %428 = tpu.matmul %404, %359, %cst_121 {dimension_numbers = #tpu.dot_dimension_numbers<[1], [0], [0], [1], [0, 0, 1, 1], [], []>} : vector<2x32xf32>, vector<32x128xf32>, vector<2x128xf32> -> vector<2x128xf32>
    %429 = vector.extract_strided_slice %402 {offsets = [0, 128], sizes = [2, 128], strides = [1, 1]} : vector<2x256xf32> to vector<2x128xf32>
    %430 = arith.addf %428, %429 : vector<2x128xf32>
    %431 = arith.negf %430 : vector<2x128xf32>
    %432 = math.exp %431 : vector<2x128xf32>
    %cst_122 = arith.constant 1.000000e+00 : f32
    %433 = vector.broadcast %cst_122 : f32 to vector<2x128xf32>
    %434 = arith.addf %433, %432 : vector<2x128xf32>
    %435 = arith.divf %433, %434 : vector<2x128xf32>
    %436 = vector.extract_strided_slice %435 {offsets = [0, 0], sizes = [2, 32], strides = [1, 1]} : vector<2x128xf32> to vector<2x32xf32>
    %437 = vector.extract_strided_slice %435 {offsets = [0, 32], sizes = [2, 32], strides = [1, 1]} : vector<2x128xf32> to vector<2x32xf32>
    %438 = vector.extract_strided_slice %435 {offsets = [0, 96], sizes = [2, 32], strides = [1, 1]} : vector<2x128xf32> to vector<2x32xf32>
    %439 = vector.extract_strided_slice %435 {offsets = [0, 64], sizes = [2, 32], strides = [1, 1]} : vector<2x128xf32> to vector<2x32xf32>
    %cst_123 = arith.constant 2.000000e+00 : f32
    %440 = vector.broadcast %cst_123 : f32 to vector<2x32xf32>
    %441 = arith.mulf %439, %440 : vector<2x32xf32>
    %cst_124 = arith.constant 1.000000e+00 : f32
    %442 = vector.broadcast %cst_124 : f32 to vector<2x32xf32>
    %443 = arith.subf %441, %442 : vector<2x32xf32>
    %444 = arith.mulf %437, %406 : vector<2x32xf32>
    %445 = arith.mulf %436, %443 : vector<2x32xf32>
    %446 = arith.addf %444, %445 : vector<2x32xf32>
    %447 = math.tanh %446 : vector<2x32xf32>
    %448 = arith.mulf %438, %447 : vector<2x32xf32>
    %cst_125 = arith.constant dense<0.000000e+00> : vector<2x128xf32>
    %449 = tpu.matmul %427, %358, %cst_125 {dimension_numbers = #tpu.dot_dimension_numbers<[1], [0], [0], [1], [0, 0, 1, 1], [], []>} : vector<2x32xf32>, vector<32x128xf32>, vector<2x128xf32> -> vector<2x128xf32>
    %450 = vector.extract_strided_slice %372 {offsets = [0, 0], sizes = [2, 128], strides = [1, 1]} : vector<2x256xf32> to vector<2x128xf32>
    %451 = arith.addf %449, %450 : vector<2x128xf32>
    %452 = arith.negf %451 : vector<2x128xf32>
    %453 = math.exp %452 : vector<2x128xf32>
    %cst_126 = arith.constant 1.000000e+00 : f32
    %454 = vector.broadcast %cst_126 : f32 to vector<2x128xf32>
    %455 = arith.addf %454, %453 : vector<2x128xf32>
    %456 = arith.divf %454, %455 : vector<2x128xf32>
    %457 = vector.extract_strided_slice %456 {offsets = [0, 0], sizes = [2, 32], strides = [1, 1]} : vector<2x128xf32> to vector<2x32xf32>
    %458 = vector.extract_strided_slice %456 {offsets = [0, 32], sizes = [2, 32], strides = [1, 1]} : vector<2x128xf32> to vector<2x32xf32>
    %459 = vector.extract_strided_slice %456 {offsets = [0, 96], sizes = [2, 32], strides = [1, 1]} : vector<2x128xf32> to vector<2x32xf32>
    %460 = vector.extract_strided_slice %456 {offsets = [0, 64], sizes = [2, 32], strides = [1, 1]} : vector<2x128xf32> to vector<2x32xf32>
    %cst_127 = arith.constant 2.000000e+00 : f32
    %461 = vector.broadcast %cst_127 : f32 to vector<2x32xf32>
    %462 = arith.mulf %460, %461 : vector<2x32xf32>
    %cst_128 = arith.constant 1.000000e+00 : f32
    %463 = vector.broadcast %cst_128 : f32 to vector<2x32xf32>
    %464 = arith.subf %462, %463 : vector<2x32xf32>
    %465 = arith.mulf %458, %425 : vector<2x32xf32>
    %466 = arith.mulf %457, %464 : vector<2x32xf32>
    %467 = arith.addf %465, %466 : vector<2x32xf32>
    %468 = math.tanh %467 : vector<2x32xf32>
    %469 = arith.mulf %459, %468 : vector<2x32xf32>
    %cst_129 = arith.constant dense<0.000000e+00> : vector<2x128xf32>
    %470 = tpu.matmul %448, %359, %cst_129 {dimension_numbers = #tpu.dot_dimension_numbers<[1], [0], [0], [1], [0, 0, 1, 1], [], []>} : vector<2x32xf32>, vector<32x128xf32>, vector<2x128xf32> -> vector<2x128xf32>
    %471 = vector.extract_strided_slice %397 {offsets = [0, 128], sizes = [2, 128], strides = [1, 1]} : vector<2x256xf32> to vector<2x128xf32>
    %472 = arith.addf %470, %471 : vector<2x128xf32>
    %473 = arith.negf %472 : vector<2x128xf32>
    %474 = math.exp %473 : vector<2x128xf32>
    %cst_130 = arith.constant 1.000000e+00 : f32
    %475 = vector.broadcast %cst_130 : f32 to vector<2x128xf32>
    %476 = arith.addf %475, %474 : vector<2x128xf32>
    %477 = arith.divf %475, %476 : vector<2x128xf32>
    %478 = vector.extract_strided_slice %477 {offsets = [0, 0], sizes = [2, 32], strides = [1, 1]} : vector<2x128xf32> to vector<2x32xf32>
    %479 = vector.extract_strided_slice %477 {offsets = [0, 32], sizes = [2, 32], strides = [1, 1]} : vector<2x128xf32> to vector<2x32xf32>
    %480 = vector.extract_strided_slice %477 {offsets = [0, 96], sizes = [2, 32], strides = [1, 1]} : vector<2x128xf32> to vector<2x32xf32>
    %481 = vector.extract_strided_slice %477 {offsets = [0, 64], sizes = [2, 32], strides = [1, 1]} : vector<2x128xf32> to vector<2x32xf32>
    %cst_131 = arith.constant 2.000000e+00 : f32
    %482 = vector.broadcast %cst_131 : f32 to vector<2x32xf32>
    %483 = arith.mulf %481, %482 : vector<2x32xf32>
    %cst_132 = arith.constant 1.000000e+00 : f32
    %484 = vector.broadcast %cst_132 : f32 to vector<2x32xf32>
    %485 = arith.subf %483, %484 : vector<2x32xf32>
    %486 = arith.mulf %479, %446 : vector<2x32xf32>
    %487 = arith.mulf %478, %485 : vector<2x32xf32>
    %488 = arith.addf %486, %487 : vector<2x32xf32>
    %489 = math.tanh %488 : vector<2x32xf32>
    %490 = arith.mulf %480, %489 : vector<2x32xf32>
    %cst_133 = arith.constant dense<0.000000e+00> : vector<2x128xf32>
    %491 = tpu.matmul %469, %358, %cst_133 {dimension_numbers = #tpu.dot_dimension_numbers<[1], [0], [0], [1], [0, 0, 1, 1], [], []>} : vector<2x32xf32>, vector<32x128xf32>, vector<2x128xf32> -> vector<2x128xf32>
    %492 = vector.extract_strided_slice %377 {offsets = [0, 0], sizes = [2, 128], strides = [1, 1]} : vector<2x256xf32> to vector<2x128xf32>
    %493 = arith.addf %491, %492 : vector<2x128xf32>
    %494 = arith.negf %493 : vector<2x128xf32>
    %495 = math.exp %494 : vector<2x128xf32>
    %cst_134 = arith.constant 1.000000e+00 : f32
    %496 = vector.broadcast %cst_134 : f32 to vector<2x128xf32>
    %497 = arith.addf %496, %495 : vector<2x128xf32>
    %498 = arith.divf %496, %497 : vector<2x128xf32>
    %499 = vector.extract_strided_slice %498 {offsets = [0, 0], sizes = [2, 32], strides = [1, 1]} : vector<2x128xf32> to vector<2x32xf32>
    %500 = vector.extract_strided_slice %498 {offsets = [0, 32], sizes = [2, 32], strides = [1, 1]} : vector<2x128xf32> to vector<2x32xf32>
    %501 = vector.extract_strided_slice %498 {offsets = [0, 96], sizes = [2, 32], strides = [1, 1]} : vector<2x128xf32> to vector<2x32xf32>
    %502 = vector.extract_strided_slice %498 {offsets = [0, 64], sizes = [2, 32], strides = [1, 1]} : vector<2x128xf32> to vector<2x32xf32>
    %cst_135 = arith.constant 2.000000e+00 : f32
    %503 = vector.broadcast %cst_135 : f32 to vector<2x32xf32>
    %504 = arith.mulf %502, %503 : vector<2x32xf32>
    %cst_136 = arith.constant 1.000000e+00 : f32
    %505 = vector.broadcast %cst_136 : f32 to vector<2x32xf32>
    %506 = arith.subf %504, %505 : vector<2x32xf32>
    %507 = arith.mulf %500, %467 : vector<2x32xf32>
    %508 = arith.mulf %499, %506 : vector<2x32xf32>
    %509 = arith.addf %507, %508 : vector<2x32xf32>
    %510 = math.tanh %509 : vector<2x32xf32>
    %511 = arith.mulf %501, %510 : vector<2x32xf32>
    %cst_137 = arith.constant dense<0.000000e+00> : vector<2x128xf32>
    %512 = tpu.matmul %490, %359, %cst_137 {dimension_numbers = #tpu.dot_dimension_numbers<[1], [0], [0], [1], [0, 0, 1, 1], [], []>} : vector<2x32xf32>, vector<32x128xf32>, vector<2x128xf32> -> vector<2x128xf32>
    %513 = vector.extract_strided_slice %392 {offsets = [0, 128], sizes = [2, 128], strides = [1, 1]} : vector<2x256xf32> to vector<2x128xf32>
    %514 = arith.addf %512, %513 : vector<2x128xf32>
    %515 = arith.negf %514 : vector<2x128xf32>
    %516 = math.exp %515 : vector<2x128xf32>
    %cst_138 = arith.constant 1.000000e+00 : f32
    %517 = vector.broadcast %cst_138 : f32 to vector<2x128xf32>
    %518 = arith.addf %517, %516 : vector<2x128xf32>
    %519 = arith.divf %517, %518 : vector<2x128xf32>
    %520 = vector.extract_strided_slice %519 {offsets = [0, 0], sizes = [2, 32], strides = [1, 1]} : vector<2x128xf32> to vector<2x32xf32>
    %521 = vector.extract_strided_slice %519 {offsets = [0, 32], sizes = [2, 32], strides = [1, 1]} : vector<2x128xf32> to vector<2x32xf32>
    %522 = vector.extract_strided_slice %519 {offsets = [0, 96], sizes = [2, 32], strides = [1, 1]} : vector<2x128xf32> to vector<2x32xf32>
    %523 = vector.extract_strided_slice %519 {offsets = [0, 64], sizes = [2, 32], strides = [1, 1]} : vector<2x128xf32> to vector<2x32xf32>
    %cst_139 = arith.constant 2.000000e+00 : f32
    %524 = vector.broadcast %cst_139 : f32 to vector<2x32xf32>
    %525 = arith.mulf %523, %524 : vector<2x32xf32>
    %cst_140 = arith.constant 1.000000e+00 : f32
    %526 = vector.broadcast %cst_140 : f32 to vector<2x32xf32>
    %527 = arith.subf %525, %526 : vector<2x32xf32>
    %528 = arith.mulf %521, %488 : vector<2x32xf32>
    %529 = arith.mulf %520, %527 : vector<2x32xf32>
    %530 = arith.addf %528, %529 : vector<2x32xf32>
    %531 = math.tanh %530 : vector<2x32xf32>
    %532 = arith.mulf %522, %531 : vector<2x32xf32>
    %cst_141 = arith.constant dense<0.000000e+00> : vector<2x128xf32>
    %533 = tpu.matmul %511, %358, %cst_141 {dimension_numbers = #tpu.dot_dimension_numbers<[1], [0], [0], [1], [0, 0, 1, 1], [], []>} : vector<2x32xf32>, vector<32x128xf32>, vector<2x128xf32> -> vector<2x128xf32>
    %534 = vector.extract_strided_slice %382 {offsets = [0, 0], sizes = [2, 128], strides = [1, 1]} : vector<2x256xf32> to vector<2x128xf32>
    %535 = arith.addf %533, %534 : vector<2x128xf32>
    %536 = arith.negf %535 : vector<2x128xf32>
    %537 = math.exp %536 : vector<2x128xf32>
    %cst_142 = arith.constant 1.000000e+00 : f32
    %538 = vector.broadcast %cst_142 : f32 to vector<2x128xf32>
    %539 = arith.addf %538, %537 : vector<2x128xf32>
    %540 = arith.divf %538, %539 : vector<2x128xf32>
    %541 = vector.extract_strided_slice %540 {offsets = [0, 0], sizes = [2, 32], strides = [1, 1]} : vector<2x128xf32> to vector<2x32xf32>
    %542 = vector.extract_strided_slice %540 {offsets = [0, 32], sizes = [2, 32], strides = [1, 1]} : vector<2x128xf32> to vector<2x32xf32>
    %543 = vector.extract_strided_slice %540 {offsets = [0, 96], sizes = [2, 32], strides = [1, 1]} : vector<2x128xf32> to vector<2x32xf32>
    %544 = vector.extract_strided_slice %540 {offsets = [0, 64], sizes = [2, 32], strides = [1, 1]} : vector<2x128xf32> to vector<2x32xf32>
    %cst_143 = arith.constant 2.000000e+00 : f32
    %545 = vector.broadcast %cst_143 : f32 to vector<2x32xf32>
    %546 = arith.mulf %544, %545 : vector<2x32xf32>
    %cst_144 = arith.constant 1.000000e+00 : f32
    %547 = vector.broadcast %cst_144 : f32 to vector<2x32xf32>
    %548 = arith.subf %546, %547 : vector<2x32xf32>
    %549 = arith.mulf %542, %509 : vector<2x32xf32>
    %550 = arith.mulf %541, %548 : vector<2x32xf32>
    %551 = arith.addf %549, %550 : vector<2x32xf32>
    %552 = math.tanh %551 : vector<2x32xf32>
    %553 = arith.mulf %543, %552 : vector<2x32xf32>
    %cst_145 = arith.constant dense<0.000000e+00> : vector<2x128xf32>
    %554 = tpu.matmul %532, %359, %cst_145 {dimension_numbers = #tpu.dot_dimension_numbers<[1], [0], [0], [1], [0, 0, 1, 1], [], []>} : vector<2x32xf32>, vector<32x128xf32>, vector<2x128xf32> -> vector<2x128xf32>
    %555 = vector.extract_strided_slice %387 {offsets = [0, 128], sizes = [2, 128], strides = [1, 1]} : vector<2x256xf32> to vector<2x128xf32>
    %556 = arith.addf %554, %555 : vector<2x128xf32>
    %557 = arith.negf %556 : vector<2x128xf32>
    %558 = math.exp %557 : vector<2x128xf32>
    %cst_146 = arith.constant 1.000000e+00 : f32
    %559 = vector.broadcast %cst_146 : f32 to vector<2x128xf32>
    %560 = arith.addf %559, %558 : vector<2x128xf32>
    %561 = arith.divf %559, %560 : vector<2x128xf32>
    %562 = vector.extract_strided_slice %561 {offsets = [0, 0], sizes = [2, 32], strides = [1, 1]} : vector<2x128xf32> to vector<2x32xf32>
    %563 = vector.extract_strided_slice %561 {offsets = [0, 32], sizes = [2, 32], strides = [1, 1]} : vector<2x128xf32> to vector<2x32xf32>
    %564 = vector.extract_strided_slice %561 {offsets = [0, 96], sizes = [2, 32], strides = [1, 1]} : vector<2x128xf32> to vector<2x32xf32>
    %565 = vector.extract_strided_slice %561 {offsets = [0, 64], sizes = [2, 32], strides = [1, 1]} : vector<2x128xf32> to vector<2x32xf32>
    %cst_147 = arith.constant 2.000000e+00 : f32
    %566 = vector.broadcast %cst_147 : f32 to vector<2x32xf32>
    %567 = arith.mulf %565, %566 : vector<2x32xf32>
    %cst_148 = arith.constant 1.000000e+00 : f32
    %568 = vector.broadcast %cst_148 : f32 to vector<2x32xf32>
    %569 = arith.subf %567, %568 : vector<2x32xf32>
    %570 = arith.mulf %563, %530 : vector<2x32xf32>
    %571 = arith.mulf %562, %569 : vector<2x32xf32>
    %572 = arith.addf %570, %571 : vector<2x32xf32>
    %573 = math.tanh %572 : vector<2x32xf32>
    %574 = arith.mulf %564, %573 : vector<2x32xf32>
    %cst_149 = arith.constant dense<0.000000e+00> : vector<2x128xf32>
    %575 = tpu.matmul %553, %358, %cst_149 {dimension_numbers = #tpu.dot_dimension_numbers<[1], [0], [0], [1], [0, 0, 1, 1], [], []>} : vector<2x32xf32>, vector<32x128xf32>, vector<2x128xf32> -> vector<2x128xf32>
    %576 = vector.extract_strided_slice %387 {offsets = [0, 0], sizes = [2, 128], strides = [1, 1]} : vector<2x256xf32> to vector<2x128xf32>
    %577 = arith.addf %575, %576 : vector<2x128xf32>
    %578 = arith.negf %577 : vector<2x128xf32>
    %579 = math.exp %578 : vector<2x128xf32>
    %cst_150 = arith.constant 1.000000e+00 : f32
    %580 = vector.broadcast %cst_150 : f32 to vector<2x128xf32>
    %581 = arith.addf %580, %579 : vector<2x128xf32>
    %582 = arith.divf %580, %581 : vector<2x128xf32>
    %583 = vector.extract_strided_slice %582 {offsets = [0, 0], sizes = [2, 32], strides = [1, 1]} : vector<2x128xf32> to vector<2x32xf32>
    %584 = vector.extract_strided_slice %582 {offsets = [0, 32], sizes = [2, 32], strides = [1, 1]} : vector<2x128xf32> to vector<2x32xf32>
    %585 = vector.extract_strided_slice %582 {offsets = [0, 96], sizes = [2, 32], strides = [1, 1]} : vector<2x128xf32> to vector<2x32xf32>
    %586 = vector.extract_strided_slice %582 {offsets = [0, 64], sizes = [2, 32], strides = [1, 1]} : vector<2x128xf32> to vector<2x32xf32>
    %cst_151 = arith.constant 2.000000e+00 : f32
    %587 = vector.broadcast %cst_151 : f32 to vector<2x32xf32>
    %588 = arith.mulf %586, %587 : vector<2x32xf32>
    %cst_152 = arith.constant 1.000000e+00 : f32
    %589 = vector.broadcast %cst_152 : f32 to vector<2x32xf32>
    %590 = arith.subf %588, %589 : vector<2x32xf32>
    %591 = arith.mulf %584, %551 : vector<2x32xf32>
    %592 = arith.mulf %583, %590 : vector<2x32xf32>
    %593 = arith.addf %591, %592 : vector<2x32xf32>
    %594 = math.tanh %593 : vector<2x32xf32>
    %595 = arith.mulf %585, %594 : vector<2x32xf32>
    %cst_153 = arith.constant dense<0.000000e+00> : vector<2x128xf32>
    %596 = tpu.matmul %574, %359, %cst_153 {dimension_numbers = #tpu.dot_dimension_numbers<[1], [0], [0], [1], [0, 0, 1, 1], [], []>} : vector<2x32xf32>, vector<32x128xf32>, vector<2x128xf32> -> vector<2x128xf32>
    %597 = vector.extract_strided_slice %382 {offsets = [0, 128], sizes = [2, 128], strides = [1, 1]} : vector<2x256xf32> to vector<2x128xf32>
    %598 = arith.addf %596, %597 : vector<2x128xf32>
    %599 = arith.negf %598 : vector<2x128xf32>
    %600 = math.exp %599 : vector<2x128xf32>
    %cst_154 = arith.constant 1.000000e+00 : f32
    %601 = vector.broadcast %cst_154 : f32 to vector<2x128xf32>
    %602 = arith.addf %601, %600 : vector<2x128xf32>
    %603 = arith.divf %601, %602 : vector<2x128xf32>
    %604 = vector.extract_strided_slice %603 {offsets = [0, 0], sizes = [2, 32], strides = [1, 1]} : vector<2x128xf32> to vector<2x32xf32>
    %605 = vector.extract_strided_slice %603 {offsets = [0, 32], sizes = [2, 32], strides = [1, 1]} : vector<2x128xf32> to vector<2x32xf32>
    %606 = vector.extract_strided_slice %603 {offsets = [0, 96], sizes = [2, 32], strides = [1, 1]} : vector<2x128xf32> to vector<2x32xf32>
    %607 = vector.extract_strided_slice %603 {offsets = [0, 64], sizes = [2, 32], strides = [1, 1]} : vector<2x128xf32> to vector<2x32xf32>
    %cst_155 = arith.constant 2.000000e+00 : f32
    %608 = vector.broadcast %cst_155 : f32 to vector<2x32xf32>
    %609 = arith.mulf %607, %608 : vector<2x32xf32>
    %cst_156 = arith.constant 1.000000e+00 : f32
    %610 = vector.broadcast %cst_156 : f32 to vector<2x32xf32>
    %611 = arith.subf %609, %610 : vector<2x32xf32>
    %612 = arith.mulf %605, %572 : vector<2x32xf32>
    %613 = arith.mulf %604, %611 : vector<2x32xf32>
    %614 = arith.addf %612, %613 : vector<2x32xf32>
    %615 = math.tanh %614 : vector<2x32xf32>
    %616 = arith.mulf %606, %615 : vector<2x32xf32>
    %cst_157 = arith.constant dense<0.000000e+00> : vector<2x128xf32>
    %617 = tpu.matmul %595, %358, %cst_157 {dimension_numbers = #tpu.dot_dimension_numbers<[1], [0], [0], [1], [0, 0, 1, 1], [], []>} : vector<2x32xf32>, vector<32x128xf32>, vector<2x128xf32> -> vector<2x128xf32>
    %618 = vector.extract_strided_slice %392 {offsets = [0, 0], sizes = [2, 128], strides = [1, 1]} : vector<2x256xf32> to vector<2x128xf32>
    %619 = arith.addf %617, %618 : vector<2x128xf32>
    %620 = arith.negf %619 : vector<2x128xf32>
    %621 = math.exp %620 : vector<2x128xf32>
    %cst_158 = arith.constant 1.000000e+00 : f32
    %622 = vector.broadcast %cst_158 : f32 to vector<2x128xf32>
    %623 = arith.addf %622, %621 : vector<2x128xf32>
    %624 = arith.divf %622, %623 : vector<2x128xf32>
    %625 = vector.extract_strided_slice %624 {offsets = [0, 0], sizes = [2, 32], strides = [1, 1]} : vector<2x128xf32> to vector<2x32xf32>
    %626 = vector.extract_strided_slice %624 {offsets = [0, 32], sizes = [2, 32], strides = [1, 1]} : vector<2x128xf32> to vector<2x32xf32>
    %627 = vector.extract_strided_slice %624 {offsets = [0, 96], sizes = [2, 32], strides = [1, 1]} : vector<2x128xf32> to vector<2x32xf32>
    %628 = vector.extract_strided_slice %624 {offsets = [0, 64], sizes = [2, 32], strides = [1, 1]} : vector<2x128xf32> to vector<2x32xf32>
    %cst_159 = arith.constant 2.000000e+00 : f32
    %629 = vector.broadcast %cst_159 : f32 to vector<2x32xf32>
    %630 = arith.mulf %628, %629 : vector<2x32xf32>
    %cst_160 = arith.constant 1.000000e+00 : f32
    %631 = vector.broadcast %cst_160 : f32 to vector<2x32xf32>
    %632 = arith.subf %630, %631 : vector<2x32xf32>
    %633 = arith.mulf %626, %593 : vector<2x32xf32>
    %634 = arith.mulf %625, %632 : vector<2x32xf32>
    %635 = arith.addf %633, %634 : vector<2x32xf32>
    %636 = math.tanh %635 : vector<2x32xf32>
    %637 = arith.mulf %627, %636 : vector<2x32xf32>
    %cst_161 = arith.constant dense<0.000000e+00> : vector<2x128xf32>
    %638 = tpu.matmul %616, %359, %cst_161 {dimension_numbers = #tpu.dot_dimension_numbers<[1], [0], [0], [1], [0, 0, 1, 1], [], []>} : vector<2x32xf32>, vector<32x128xf32>, vector<2x128xf32> -> vector<2x128xf32>
    %639 = vector.extract_strided_slice %377 {offsets = [0, 128], sizes = [2, 128], strides = [1, 1]} : vector<2x256xf32> to vector<2x128xf32>
    %640 = arith.addf %638, %639 : vector<2x128xf32>
    %641 = arith.negf %640 : vector<2x128xf32>
    %642 = math.exp %641 : vector<2x128xf32>
    %cst_162 = arith.constant 1.000000e+00 : f32
    %643 = vector.broadcast %cst_162 : f32 to vector<2x128xf32>
    %644 = arith.addf %643, %642 : vector<2x128xf32>
    %645 = arith.divf %643, %644 : vector<2x128xf32>
    %646 = vector.extract_strided_slice %645 {offsets = [0, 0], sizes = [2, 32], strides = [1, 1]} : vector<2x128xf32> to vector<2x32xf32>
    %647 = vector.extract_strided_slice %645 {offsets = [0, 32], sizes = [2, 32], strides = [1, 1]} : vector<2x128xf32> to vector<2x32xf32>
    %648 = vector.extract_strided_slice %645 {offsets = [0, 96], sizes = [2, 32], strides = [1, 1]} : vector<2x128xf32> to vector<2x32xf32>
    %649 = vector.extract_strided_slice %645 {offsets = [0, 64], sizes = [2, 32], strides = [1, 1]} : vector<2x128xf32> to vector<2x32xf32>
    %cst_163 = arith.constant 2.000000e+00 : f32
    %650 = vector.broadcast %cst_163 : f32 to vector<2x32xf32>
    %651 = arith.mulf %649, %650 : vector<2x32xf32>
    %cst_164 = arith.constant 1.000000e+00 : f32
    %652 = vector.broadcast %cst_164 : f32 to vector<2x32xf32>
    %653 = arith.subf %651, %652 : vector<2x32xf32>
    %654 = arith.mulf %647, %614 : vector<2x32xf32>
    %655 = arith.mulf %646, %653 : vector<2x32xf32>
    %656 = arith.addf %654, %655 : vector<2x32xf32>
    %657 = math.tanh %656 : vector<2x32xf32>
    %658 = arith.mulf %648, %657 : vector<2x32xf32>
    %cst_165 = arith.constant dense<0.000000e+00> : vector<2x128xf32>
    %659 = tpu.matmul %637, %358, %cst_165 {dimension_numbers = #tpu.dot_dimension_numbers<[1], [0], [0], [1], [0, 0, 1, 1], [], []>} : vector<2x32xf32>, vector<32x128xf32>, vector<2x128xf32> -> vector<2x128xf32>
    %660 = vector.extract_strided_slice %397 {offsets = [0, 0], sizes = [2, 128], strides = [1, 1]} : vector<2x256xf32> to vector<2x128xf32>
    %661 = arith.addf %659, %660 : vector<2x128xf32>
    %662 = arith.negf %661 : vector<2x128xf32>
    %663 = math.exp %662 : vector<2x128xf32>
    %cst_166 = arith.constant 1.000000e+00 : f32
    %664 = vector.broadcast %cst_166 : f32 to vector<2x128xf32>
    %665 = arith.addf %664, %663 : vector<2x128xf32>
    %666 = arith.divf %664, %665 : vector<2x128xf32>
    %667 = vector.extract_strided_slice %666 {offsets = [0, 0], sizes = [2, 32], strides = [1, 1]} : vector<2x128xf32> to vector<2x32xf32>
    %668 = vector.extract_strided_slice %666 {offsets = [0, 32], sizes = [2, 32], strides = [1, 1]} : vector<2x128xf32> to vector<2x32xf32>
    %669 = vector.extract_strided_slice %666 {offsets = [0, 96], sizes = [2, 32], strides = [1, 1]} : vector<2x128xf32> to vector<2x32xf32>
    %670 = vector.extract_strided_slice %666 {offsets = [0, 64], sizes = [2, 32], strides = [1, 1]} : vector<2x128xf32> to vector<2x32xf32>
    %cst_167 = arith.constant 2.000000e+00 : f32
    %671 = vector.broadcast %cst_167 : f32 to vector<2x32xf32>
    %672 = arith.mulf %670, %671 : vector<2x32xf32>
    %cst_168 = arith.constant 1.000000e+00 : f32
    %673 = vector.broadcast %cst_168 : f32 to vector<2x32xf32>
    %674 = arith.subf %672, %673 : vector<2x32xf32>
    %675 = arith.mulf %668, %635 : vector<2x32xf32>
    %676 = arith.mulf %667, %674 : vector<2x32xf32>
    %677 = arith.addf %675, %676 : vector<2x32xf32>
    %678 = math.tanh %677 : vector<2x32xf32>
    %679 = arith.mulf %669, %678 : vector<2x32xf32>
    %cst_169 = arith.constant dense<0.000000e+00> : vector<2x128xf32>
    %680 = tpu.matmul %658, %359, %cst_169 {dimension_numbers = #tpu.dot_dimension_numbers<[1], [0], [0], [1], [0, 0, 1, 1], [], []>} : vector<2x32xf32>, vector<32x128xf32>, vector<2x128xf32> -> vector<2x128xf32>
    %681 = vector.extract_strided_slice %372 {offsets = [0, 128], sizes = [2, 128], strides = [1, 1]} : vector<2x256xf32> to vector<2x128xf32>
    %682 = arith.addf %680, %681 : vector<2x128xf32>
    %683 = arith.negf %682 : vector<2x128xf32>
    %684 = math.exp %683 : vector<2x128xf32>
    %cst_170 = arith.constant 1.000000e+00 : f32
    %685 = vector.broadcast %cst_170 : f32 to vector<2x128xf32>
    %686 = arith.addf %685, %684 : vector<2x128xf32>
    %687 = arith.divf %685, %686 : vector<2x128xf32>
    %688 = vector.extract_strided_slice %687 {offsets = [0, 0], sizes = [2, 32], strides = [1, 1]} : vector<2x128xf32> to vector<2x32xf32>
    %689 = vector.extract_strided_slice %687 {offsets = [0, 32], sizes = [2, 32], strides = [1, 1]} : vector<2x128xf32> to vector<2x32xf32>
    %690 = vector.extract_strided_slice %687 {offsets = [0, 96], sizes = [2, 32], strides = [1, 1]} : vector<2x128xf32> to vector<2x32xf32>
    %691 = vector.extract_strided_slice %687 {offsets = [0, 64], sizes = [2, 32], strides = [1, 1]} : vector<2x128xf32> to vector<2x32xf32>
    %cst_171 = arith.constant 2.000000e+00 : f32
    %692 = vector.broadcast %cst_171 : f32 to vector<2x32xf32>
    %693 = arith.mulf %691, %692 : vector<2x32xf32>
    %cst_172 = arith.constant 1.000000e+00 : f32
    %694 = vector.broadcast %cst_172 : f32 to vector<2x32xf32>
    %695 = arith.subf %693, %694 : vector<2x32xf32>
    %696 = arith.mulf %689, %656 : vector<2x32xf32>
    %697 = arith.mulf %688, %695 : vector<2x32xf32>
    %698 = arith.addf %696, %697 : vector<2x32xf32>
    %699 = math.tanh %698 : vector<2x32xf32>
    %700 = arith.mulf %690, %699 : vector<2x32xf32>
    %cst_173 = arith.constant dense<0.000000e+00> : vector<2x128xf32>
    %701 = tpu.matmul %679, %358, %cst_173 {dimension_numbers = #tpu.dot_dimension_numbers<[1], [0], [0], [1], [0, 0, 1, 1], [], []>} : vector<2x32xf32>, vector<32x128xf32>, vector<2x128xf32> -> vector<2x128xf32>
    %702 = vector.extract_strided_slice %402 {offsets = [0, 0], sizes = [2, 128], strides = [1, 1]} : vector<2x256xf32> to vector<2x128xf32>
    %703 = arith.addf %701, %702 : vector<2x128xf32>
    %704 = arith.negf %703 : vector<2x128xf32>
    %705 = math.exp %704 : vector<2x128xf32>
    %cst_174 = arith.constant 1.000000e+00 : f32
    %706 = vector.broadcast %cst_174 : f32 to vector<2x128xf32>
    %707 = arith.addf %706, %705 : vector<2x128xf32>
    %708 = arith.divf %706, %707 : vector<2x128xf32>
    %709 = vector.extract_strided_slice %708 {offsets = [0, 0], sizes = [2, 32], strides = [1, 1]} : vector<2x128xf32> to vector<2x32xf32>
    %710 = vector.extract_strided_slice %708 {offsets = [0, 32], sizes = [2, 32], strides = [1, 1]} : vector<2x128xf32> to vector<2x32xf32>
    %711 = vector.extract_strided_slice %708 {offsets = [0, 96], sizes = [2, 32], strides = [1, 1]} : vector<2x128xf32> to vector<2x32xf32>
    %712 = vector.extract_strided_slice %708 {offsets = [0, 64], sizes = [2, 32], strides = [1, 1]} : vector<2x128xf32> to vector<2x32xf32>
    %cst_175 = arith.constant 2.000000e+00 : f32
    %713 = vector.broadcast %cst_175 : f32 to vector<2x32xf32>
    %714 = arith.mulf %712, %713 : vector<2x32xf32>
    %cst_176 = arith.constant 1.000000e+00 : f32
    %715 = vector.broadcast %cst_176 : f32 to vector<2x32xf32>
    %716 = arith.subf %714, %715 : vector<2x32xf32>
    %717 = arith.mulf %710, %677 : vector<2x32xf32>
    %718 = arith.mulf %709, %716 : vector<2x32xf32>
    %719 = arith.addf %717, %718 : vector<2x32xf32>
    %720 = math.tanh %719 : vector<2x32xf32>
    %721 = arith.mulf %711, %720 : vector<2x32xf32>
    %cst_177 = arith.constant dense<0.000000e+00> : vector<2x128xf32>
    %722 = tpu.matmul %700, %359, %cst_177 {dimension_numbers = #tpu.dot_dimension_numbers<[1], [0], [0], [1], [0, 0, 1, 1], [], []>} : vector<2x32xf32>, vector<32x128xf32>, vector<2x128xf32> -> vector<2x128xf32>
    %723 = vector.extract_strided_slice %367 {offsets = [0, 128], sizes = [2, 128], strides = [1, 1]} : vector<2x256xf32> to vector<2x128xf32>
    %724 = arith.addf %722, %723 : vector<2x128xf32>
    %725 = arith.negf %724 : vector<2x128xf32>
    %726 = math.exp %725 : vector<2x128xf32>
    %cst_178 = arith.constant 1.000000e+00 : f32
    %727 = vector.broadcast %cst_178 : f32 to vector<2x128xf32>
    %728 = arith.addf %727, %726 : vector<2x128xf32>
    %729 = arith.divf %727, %728 : vector<2x128xf32>
    %730 = vector.extract_strided_slice %729 {offsets = [0, 0], sizes = [2, 32], strides = [1, 1]} : vector<2x128xf32> to vector<2x32xf32>
    %731 = vector.extract_strided_slice %729 {offsets = [0, 32], sizes = [2, 32], strides = [1, 1]} : vector<2x128xf32> to vector<2x32xf32>
    %732 = vector.extract_strided_slice %729 {offsets = [0, 96], sizes = [2, 32], strides = [1, 1]} : vector<2x128xf32> to vector<2x32xf32>
    %733 = vector.extract_strided_slice %729 {offsets = [0, 64], sizes = [2, 32], strides = [1, 1]} : vector<2x128xf32> to vector<2x32xf32>
    %cst_179 = arith.constant 2.000000e+00 : f32
    %734 = vector.broadcast %cst_179 : f32 to vector<2x32xf32>
    %735 = arith.mulf %733, %734 : vector<2x32xf32>
    %cst_180 = arith.constant 1.000000e+00 : f32
    %736 = vector.broadcast %cst_180 : f32 to vector<2x32xf32>
    %737 = arith.subf %735, %736 : vector<2x32xf32>
    %738 = arith.mulf %731, %698 : vector<2x32xf32>
    %739 = arith.mulf %730, %737 : vector<2x32xf32>
    %740 = arith.addf %738, %739 : vector<2x32xf32>
    %741 = math.tanh %740 : vector<2x32xf32>
    %742 = arith.mulf %732, %741 : vector<2x32xf32>
    %c0_181 = arith.constant 0 : index
    %c0_182 = arith.constant 0 : index
    %743 = vector.load %arg8[%c0_181, %c0_182] : memref<1x32xf32, #tpu.memory_space<vmem>>, vector<1x32xf32>
    %c0_183 = arith.constant 0 : index
    %c0_184 = arith.constant 0 : index
    %744 = vector.load %arg9[%c0_183, %c0_184] : memref<1x32xf32, #tpu.memory_space<vmem>>, vector<1x32xf32>
    %c0_185 = arith.constant 0 : index
    %c0_186 = arith.constant 0 : index
    %745 = vector.load %arg10[%c0_185, %c0_186] : memref<1x1xf32, #tpu.memory_space<vmem>>, vector<1x1xf32>
    %746 = vector.broadcast %743 : vector<1x32xf32> to vector<2x32xf32>
    %747 = arith.mulf %427, %746 : vector<2x32xf32>
    %cst_187 = arith.constant dense<0.000000e+00> : vector<2xf32>
    %748 = vector.multi_reduction <add>, %747, %cst_187 [1] : vector<2x32xf32> to vector<2xf32>
    %749 = vector.shape_cast %748 : vector<2xf32> to vector<2x1xf32>
    %750 = vector.broadcast %745 : vector<1x1xf32> to vector<2x1xf32>
    %751 = arith.addf %750, %749 : vector<2x1xf32>
    %752 = vector.broadcast %744 : vector<1x32xf32> to vector<2x32xf32>
    %753 = arith.mulf %742, %752 : vector<2x32xf32>
    %cst_188 = arith.constant dense<0.000000e+00> : vector<2xf32>
    %754 = vector.multi_reduction <add>, %753, %cst_188 [1] : vector<2x32xf32> to vector<2xf32>
    %755 = vector.shape_cast %754 : vector<2xf32> to vector<2x1xf32>
    %756 = arith.addf %751, %755 : vector<2x1xf32>
    %757 = vector.broadcast %743 : vector<1x32xf32> to vector<2x32xf32>
    %758 = arith.mulf %469, %757 : vector<2x32xf32>
    %cst_189 = arith.constant dense<0.000000e+00> : vector<2xf32>
    %759 = vector.multi_reduction <add>, %758, %cst_189 [1] : vector<2x32xf32> to vector<2xf32>
    %760 = vector.shape_cast %759 : vector<2xf32> to vector<2x1xf32>
    %761 = vector.broadcast %745 : vector<1x1xf32> to vector<2x1xf32>
    %762 = arith.addf %761, %760 : vector<2x1xf32>
    %763 = vector.broadcast %744 : vector<1x32xf32> to vector<2x32xf32>
    %764 = arith.mulf %700, %763 : vector<2x32xf32>
    %cst_190 = arith.constant dense<0.000000e+00> : vector<2xf32>
    %765 = vector.multi_reduction <add>, %764, %cst_190 [1] : vector<2x32xf32> to vector<2xf32>
    %766 = vector.shape_cast %765 : vector<2xf32> to vector<2x1xf32>
    %767 = arith.addf %762, %766 : vector<2x1xf32>
    %768 = vector.broadcast %743 : vector<1x32xf32> to vector<2x32xf32>
    %769 = arith.mulf %511, %768 : vector<2x32xf32>
    %cst_191 = arith.constant dense<0.000000e+00> : vector<2xf32>
    %770 = vector.multi_reduction <add>, %769, %cst_191 [1] : vector<2x32xf32> to vector<2xf32>
    %771 = vector.shape_cast %770 : vector<2xf32> to vector<2x1xf32>
    %772 = vector.broadcast %745 : vector<1x1xf32> to vector<2x1xf32>
    %773 = arith.addf %772, %771 : vector<2x1xf32>
    %774 = vector.broadcast %744 : vector<1x32xf32> to vector<2x32xf32>
    %775 = arith.mulf %658, %774 : vector<2x32xf32>
    %cst_192 = arith.constant dense<0.000000e+00> : vector<2xf32>
    %776 = vector.multi_reduction <add>, %775, %cst_192 [1] : vector<2x32xf32> to vector<2xf32>
    %777 = vector.shape_cast %776 : vector<2xf32> to vector<2x1xf32>
    %778 = arith.addf %773, %777 : vector<2x1xf32>
    %779 = vector.broadcast %743 : vector<1x32xf32> to vector<2x32xf32>
    %780 = arith.mulf %553, %779 : vector<2x32xf32>
    %cst_193 = arith.constant dense<0.000000e+00> : vector<2xf32>
    %781 = vector.multi_reduction <add>, %780, %cst_193 [1] : vector<2x32xf32> to vector<2xf32>
    %782 = vector.shape_cast %781 : vector<2xf32> to vector<2x1xf32>
    %783 = vector.broadcast %745 : vector<1x1xf32> to vector<2x1xf32>
    %784 = arith.addf %783, %782 : vector<2x1xf32>
    %785 = vector.broadcast %744 : vector<1x32xf32> to vector<2x32xf32>
    %786 = arith.mulf %616, %785 : vector<2x32xf32>
    %cst_194 = arith.constant dense<0.000000e+00> : vector<2xf32>
    %787 = vector.multi_reduction <add>, %786, %cst_194 [1] : vector<2x32xf32> to vector<2xf32>
    %788 = vector.shape_cast %787 : vector<2xf32> to vector<2x1xf32>
    %789 = arith.addf %784, %788 : vector<2x1xf32>
    %790 = vector.broadcast %743 : vector<1x32xf32> to vector<2x32xf32>
    %791 = arith.mulf %595, %790 : vector<2x32xf32>
    %cst_195 = arith.constant dense<0.000000e+00> : vector<2xf32>
    %792 = vector.multi_reduction <add>, %791, %cst_195 [1] : vector<2x32xf32> to vector<2xf32>
    %793 = vector.shape_cast %792 : vector<2xf32> to vector<2x1xf32>
    %794 = vector.broadcast %745 : vector<1x1xf32> to vector<2x1xf32>
    %795 = arith.addf %794, %793 : vector<2x1xf32>
    %796 = vector.broadcast %744 : vector<1x32xf32> to vector<2x32xf32>
    %797 = arith.mulf %574, %796 : vector<2x32xf32>
    %cst_196 = arith.constant dense<0.000000e+00> : vector<2xf32>
    %798 = vector.multi_reduction <add>, %797, %cst_196 [1] : vector<2x32xf32> to vector<2xf32>
    %799 = vector.shape_cast %798 : vector<2xf32> to vector<2x1xf32>
    %800 = arith.addf %795, %799 : vector<2x1xf32>
    %801 = vector.broadcast %743 : vector<1x32xf32> to vector<2x32xf32>
    %802 = arith.mulf %637, %801 : vector<2x32xf32>
    %cst_197 = arith.constant dense<0.000000e+00> : vector<2xf32>
    %803 = vector.multi_reduction <add>, %802, %cst_197 [1] : vector<2x32xf32> to vector<2xf32>
    %804 = vector.shape_cast %803 : vector<2xf32> to vector<2x1xf32>
    %805 = vector.broadcast %745 : vector<1x1xf32> to vector<2x1xf32>
    %806 = arith.addf %805, %804 : vector<2x1xf32>
    %807 = vector.broadcast %744 : vector<1x32xf32> to vector<2x32xf32>
    %808 = arith.mulf %532, %807 : vector<2x32xf32>
    %cst_198 = arith.constant dense<0.000000e+00> : vector<2xf32>
    %809 = vector.multi_reduction <add>, %808, %cst_198 [1] : vector<2x32xf32> to vector<2xf32>
    %810 = vector.shape_cast %809 : vector<2xf32> to vector<2x1xf32>
    %811 = arith.addf %806, %810 : vector<2x1xf32>
    %812 = vector.broadcast %743 : vector<1x32xf32> to vector<2x32xf32>
    %813 = arith.mulf %679, %812 : vector<2x32xf32>
    %cst_199 = arith.constant dense<0.000000e+00> : vector<2xf32>
    %814 = vector.multi_reduction <add>, %813, %cst_199 [1] : vector<2x32xf32> to vector<2xf32>
    %815 = vector.shape_cast %814 : vector<2xf32> to vector<2x1xf32>
    %816 = vector.broadcast %745 : vector<1x1xf32> to vector<2x1xf32>
    %817 = arith.addf %816, %815 : vector<2x1xf32>
    %818 = vector.broadcast %744 : vector<1x32xf32> to vector<2x32xf32>
    %819 = arith.mulf %490, %818 : vector<2x32xf32>
    %cst_200 = arith.constant dense<0.000000e+00> : vector<2xf32>
    %820 = vector.multi_reduction <add>, %819, %cst_200 [1] : vector<2x32xf32> to vector<2xf32>
    %821 = vector.shape_cast %820 : vector<2xf32> to vector<2x1xf32>
    %822 = arith.addf %817, %821 : vector<2x1xf32>
    %823 = vector.broadcast %743 : vector<1x32xf32> to vector<2x32xf32>
    %824 = arith.mulf %721, %823 : vector<2x32xf32>
    %cst_201 = arith.constant dense<0.000000e+00> : vector<2xf32>
    %825 = vector.multi_reduction <add>, %824, %cst_201 [1] : vector<2x32xf32> to vector<2xf32>
    %826 = vector.shape_cast %825 : vector<2xf32> to vector<2x1xf32>
    %827 = vector.broadcast %745 : vector<1x1xf32> to vector<2x1xf32>
    %828 = arith.addf %827, %826 : vector<2x1xf32>
    %829 = vector.broadcast %744 : vector<1x32xf32> to vector<2x32xf32>
    %830 = arith.mulf %448, %829 : vector<2x32xf32>
    %cst_202 = arith.constant dense<0.000000e+00> : vector<2xf32>
    %831 = vector.multi_reduction <add>, %830, %cst_202 [1] : vector<2x32xf32> to vector<2xf32>
    %832 = vector.shape_cast %831 : vector<2xf32> to vector<2x1xf32>
    %833 = arith.addf %828, %832 : vector<2x1xf32>
    %834 = arith.maximumf %756, %767 : vector<2x1xf32>
    %835 = arith.maximumf %834, %778 : vector<2x1xf32>
    %836 = arith.maximumf %835, %789 : vector<2x1xf32>
    %837 = arith.maximumf %836, %800 : vector<2x1xf32>
    %838 = arith.maximumf %837, %811 : vector<2x1xf32>
    %839 = arith.maximumf %838, %822 : vector<2x1xf32>
    %840 = arith.maximumf %839, %833 : vector<2x1xf32>
    %841 = arith.subf %756, %840 : vector<2x1xf32>
    %842 = math.exp %841 : vector<2x1xf32>
    %843 = arith.subf %767, %840 : vector<2x1xf32>
    %844 = math.exp %843 : vector<2x1xf32>
    %845 = arith.subf %778, %840 : vector<2x1xf32>
    %846 = math.exp %845 : vector<2x1xf32>
    %847 = arith.subf %789, %840 : vector<2x1xf32>
    %848 = math.exp %847 : vector<2x1xf32>
    %849 = arith.subf %800, %840 : vector<2x1xf32>
    %850 = math.exp %849 : vector<2x1xf32>
    %851 = arith.subf %811, %840 : vector<2x1xf32>
    %852 = math.exp %851 : vector<2x1xf32>
    %853 = arith.subf %822, %840 : vector<2x1xf32>
    %854 = math.exp %853 : vector<2x1xf32>
    %855 = arith.subf %833, %840 : vector<2x1xf32>
    %856 = math.exp %855 : vector<2x1xf32>
    %857 = arith.addf %842, %844 : vector<2x1xf32>
    %858 = arith.addf %857, %846 : vector<2x1xf32>
    %859 = arith.addf %858, %848 : vector<2x1xf32>
    %860 = arith.addf %859, %850 : vector<2x1xf32>
    %861 = arith.addf %860, %852 : vector<2x1xf32>
    %862 = arith.addf %861, %854 : vector<2x1xf32>
    %863 = arith.addf %862, %856 : vector<2x1xf32>
    %cst_203 = arith.constant 1.000000e+00 : f32
    %864 = vector.broadcast %cst_203 : f32 to vector<2x1xf32>
    %865 = arith.divf %864, %863 : vector<2x1xf32>
    %c0_204 = arith.constant 0 : index
    %c0_205 = arith.constant 0 : index
    %866 = vector.load %arg13[%c0_204, %c0_205] : memref<1x4xf32, #tpu.memory_space<vmem>>, vector<1x4xf32>
    %867 = vector.broadcast %842 : vector<2x1xf32> to vector<2x32xf32>
    %868 = arith.mulf %867, %427 : vector<2x32xf32>
    %869 = vector.broadcast %844 : vector<2x1xf32> to vector<2x32xf32>
    %870 = arith.mulf %869, %469 : vector<2x32xf32>
    %871 = arith.addf %868, %870 : vector<2x32xf32>
    %872 = vector.broadcast %846 : vector<2x1xf32> to vector<2x32xf32>
    %873 = arith.mulf %872, %511 : vector<2x32xf32>
    %874 = arith.addf %871, %873 : vector<2x32xf32>
    %875 = vector.broadcast %848 : vector<2x1xf32> to vector<2x32xf32>
    %876 = arith.mulf %875, %553 : vector<2x32xf32>
    %877 = arith.addf %874, %876 : vector<2x32xf32>
    %878 = vector.broadcast %850 : vector<2x1xf32> to vector<2x32xf32>
    %879 = arith.mulf %878, %595 : vector<2x32xf32>
    %880 = arith.addf %877, %879 : vector<2x32xf32>
    %881 = vector.broadcast %852 : vector<2x1xf32> to vector<2x32xf32>
    %882 = arith.mulf %881, %637 : vector<2x32xf32>
    %883 = arith.addf %880, %882 : vector<2x32xf32>
    %884 = vector.broadcast %854 : vector<2x1xf32> to vector<2x32xf32>
    %885 = arith.mulf %884, %679 : vector<2x32xf32>
    %886 = arith.addf %883, %885 : vector<2x32xf32>
    %887 = vector.broadcast %856 : vector<2x1xf32> to vector<2x32xf32>
    %888 = arith.mulf %887, %721 : vector<2x32xf32>
    %889 = arith.addf %886, %888 : vector<2x32xf32>
    %890 = vector.broadcast %865 : vector<2x1xf32> to vector<2x32xf32>
    %891 = arith.mulf %889, %890 : vector<2x32xf32>
    %c0_206 = arith.constant 0 : index
    %c0_207 = arith.constant 0 : index
    %892 = vector.load %arg11[%c0_206, %c0_207] : memref<32x4xf32, #tpu.memory_space<vmem>>, vector<32x4xf32>
    %cst_208 = arith.constant dense<0.000000e+00> : vector<2x4xf32>
    %893 = tpu.matmul %891, %892, %cst_208 {dimension_numbers = #tpu.dot_dimension_numbers<[1], [0], [0], [1], [0, 0, 1, 1], [], []>} : vector<2x32xf32>, vector<32x4xf32>, vector<2x4xf32> -> vector<2x4xf32>
    %894 = vector.broadcast %866 : vector<1x4xf32> to vector<2x4xf32>
    %895 = arith.addf %894, %893 : vector<2x4xf32>
    %896 = vector.broadcast %842 : vector<2x1xf32> to vector<2x32xf32>
    %897 = arith.mulf %896, %742 : vector<2x32xf32>
    %898 = vector.broadcast %844 : vector<2x1xf32> to vector<2x32xf32>
    %899 = arith.mulf %898, %700 : vector<2x32xf32>
    %900 = arith.addf %897, %899 : vector<2x32xf32>
    %901 = vector.broadcast %846 : vector<2x1xf32> to vector<2x32xf32>
    %902 = arith.mulf %901, %658 : vector<2x32xf32>
    %903 = arith.addf %900, %902 : vector<2x32xf32>
    %904 = vector.broadcast %848 : vector<2x1xf32> to vector<2x32xf32>
    %905 = arith.mulf %904, %616 : vector<2x32xf32>
    %906 = arith.addf %903, %905 : vector<2x32xf32>
    %907 = vector.broadcast %850 : vector<2x1xf32> to vector<2x32xf32>
    %908 = arith.mulf %907, %574 : vector<2x32xf32>
    %909 = arith.addf %906, %908 : vector<2x32xf32>
    %910 = vector.broadcast %852 : vector<2x1xf32> to vector<2x32xf32>
    %911 = arith.mulf %910, %532 : vector<2x32xf32>
    %912 = arith.addf %909, %911 : vector<2x32xf32>
    %913 = vector.broadcast %854 : vector<2x1xf32> to vector<2x32xf32>
    %914 = arith.mulf %913, %490 : vector<2x32xf32>
    %915 = arith.addf %912, %914 : vector<2x32xf32>
    %916 = vector.broadcast %856 : vector<2x1xf32> to vector<2x32xf32>
    %917 = arith.mulf %916, %448 : vector<2x32xf32>
    %918 = arith.addf %915, %917 : vector<2x32xf32>
    %919 = vector.broadcast %865 : vector<2x1xf32> to vector<2x32xf32>
    %920 = arith.mulf %918, %919 : vector<2x32xf32>
    %c0_209 = arith.constant 0 : index
    %c0_210 = arith.constant 0 : index
    %921 = vector.load %arg12[%c0_209, %c0_210] : memref<32x4xf32, #tpu.memory_space<vmem>>, vector<32x4xf32>
    %cst_211 = arith.constant dense<0.000000e+00> : vector<2x4xf32>
    %922 = tpu.matmul %920, %921, %cst_211 {dimension_numbers = #tpu.dot_dimension_numbers<[1], [0], [0], [1], [0, 0, 1, 1], [], []>} : vector<2x32xf32>, vector<32x4xf32>, vector<2x4xf32> -> vector<2x4xf32>
    %923 = arith.addf %895, %922 : vector<2x4xf32>
    %c0_212 = arith.constant 0 : index
    %c0_213 = arith.constant 0 : index
    %924 = vector.load %arg14[%c0_212, %c0_213] : memref<2x4xf32, #tpu.memory_space<vmem>>, vector<2x4xf32>
    tpu.vector_store %arg14[%c0_212, %c0_213], %923 {strides = array<i32>} : memref<2x4xf32, #tpu.memory_space<vmem>>, vector<2x4xf32>,
    return
  }
}

</mosaic_0001>

<llo_original>
// kernel: tile.6
$region0: #{tile.6}
  #allocation0 [shape = 's32[1]{0}', space=sflag, size = 0x4, scoped, tag = 'scoped memory for tile.6']
  %s0 = inlined_call_operand.vmem [shape: f32[128], index: 0, kind: input, shape index: {}]
  %s1 = inlined_call_operand.vmem [shape: f32[2,128], index: 1, kind: output, shape index: {}]
  // Predicated region
  $region2: #{tile.6} parent=0 // pred_check
    _
  $region3: #{tile.6} parent=0 // pred_check_branch
    %3 = sbr.rel (0) target = $region5
  $region4: #{tile.6} parent=0 // pred_region
    _
  $region5: #{tile.6} parent=0 // pred_fallthru
    _
  %v4 = vld [vmem:[%s0] ss:$0 sm:$0xff]
  %5 = vst [vmem:[%s1] sm:$0x3] %v4

// kernel: x_lstm_forward.1
$region0: #{x_lstm_forward.1}
  #allocation0 [shape = 'u32[]', space=smem, size = 0x4, offset = 0x4, fixed_abs, tag = 'smem constant byte address 0x4 - core index']
  #allocation1 [shape = 'u32[72,128]{1,0:T(1,128)}', space=vmem, size = 0x9000, scoped, tag = 'internal scratch']
  #allocation2 [shape = 'f32[1,1]{1,0:T(1,128)S(1)}', space=vmem, size = 0x200, scoped, tag = 'scoped memory for x_lstm_forward.1']
  %s0 = inlined_call_operand.vmem [shape: f32[8,2,256], index: 0, kind: input, shape index: {}]
  %s1 = inlined_call_operand.vmem [shape: f32[32,128], index: 1, kind: input, shape index: {}]
  %s2 = inlined_call_operand.vmem [shape: f32[32,128], index: 2, kind: input, shape index: {}]
  %s3 = inlined_call_operand.vmem [shape: f32[32,256], index: 3, kind: input, shape index: {}]
  %s4 = inlined_call_operand.vmem [shape: f32[32,256], index: 4, kind: input, shape index: {}]
  %s5 = inlined_call_operand.vmem [shape: f32[1,256], index: 5, kind: input, shape index: {}]
  %s6 = inlined_call_operand.vmem [shape: f32[32,128], index: 6, kind: input, shape index: {}]
  %s7 = inlined_call_operand.vmem [shape: f32[32,128], index: 7, kind: input, shape index: {}]
  %s8 = inlined_call_operand.vmem [shape: f32[1,32], index: 8, kind: input, shape index: {}]
  %s9 = inlined_call_operand.vmem [shape: f32[1,32], index: 9, kind: input, shape index: {}]
  %s10 = inlined_call_operand.<no memory space> [shape: f32[1,1], index: 10, kind: input, shape index: {}]
  %s11 = inlined_call_operand.vmem [shape: f32[32,4], index: 11, kind: input, shape index: {}]
  %s12 = inlined_call_operand.vmem [shape: f32[32,4], index: 12, kind: input, shape index: {}]
  %s13 = inlined_call_operand.vmem [shape: f32[1,4], index: 13, kind: input, shape index: {}]
  %s14 = inlined_call_operand.hbm [shape: f32[2,4], index: 14, kind: output, shape index: {}]
  %s15 = sld [smem:[#allocation0]]
  $region66: #{x_lstm_forward.1} parent=0
    _
  %s17 = ssub.s32 1, %s15
  %s18 = scalar_select 0, %s17, %s15
  %v19 = vstv %s10
  %20 = vst [vmem:[#allocation2] sm:$0x1] %v19
  $region1: #{x_lstm_forward.1} parent=0
    #allocation3 [shape = 'u8[1024]{0}', space=vmem, size = 0x400, scoped, tag = 'output window, operand 0, single buffered']
    #allocation4 [shape = 's32[1]{0}', space=sflag, size = 0x4, scoped, tag = 'scoped memory for x_lstm_forward.1']
    %21 = vsyncpa [#allocation4], 0
    // Predicated region
    $region2: #{x_lstm_forward.1} parent=1 // pred_check
      _
    $region3: #{x_lstm_forward.1} parent=1 // pred_check_branch
      %23 = sbr.rel (0) target = $region5
    $region4: #{x_lstm_forward.1} parent=1 // pred_region
      _
    $region5: #{x_lstm_forward.1} parent=1 // pred_fallthru
      _
    // Predicated region
    $region6: #{x_lstm_forward.1} parent=1 // pred_check
      _
    $region7: #{x_lstm_forward.1} parent=1 // pred_check_branch
      %25 = sbr.rel (0) target = $region9
    $region8: #{x_lstm_forward.1} parent=1 // pred_region
      _
    $region9: #{x_lstm_forward.1} parent=1 // pred_fallthru
      _
    // Predicated region
    $region10: #{x_lstm_forward.1} parent=1 // pred_check
      _
    $region11: #{x_lstm_forward.1} parent=1 // pred_check_branch
      %27 = sbr.rel (0) target = $region13
    $region12: #{x_lstm_forward.1} parent=1 // pred_region
      _
    $region13: #{x_lstm_forward.1} parent=1 // pred_fallthru
      _
    // Predicated region
    $region14: #{x_lstm_forward.1} parent=1 // pred_check
      _
    $region15: #{x_lstm_forward.1} parent=1 // pred_check_branch
      %29 = sbr.rel (0) target = $region17
    $region16: #{x_lstm_forward.1} parent=1 // pred_region
      _
    $region17: #{x_lstm_forward.1} parent=1 // pred_fallthru
      _
    // Predicated region
    $region18: #{x_lstm_forward.1} parent=1 // pred_check
      _
    $region19: #{x_lstm_forward.1} parent=1 // pred_check_branch
      %31 = sbr.rel (0) target = $region21
    $region20: #{x_lstm_forward.1} parent=1 // pred_region
      _
    $region21: #{x_lstm_forward.1} parent=1 // pred_fallthru
      _
    // Predicated region
    $region22: #{x_lstm_forward.1} parent=1 // pred_check
      _
    $region23: #{x_lstm_forward.1} parent=1 // pred_check_branch
      %33 = sbr.rel (0) target = $region25
    $region24: #{x_lstm_forward.1} parent=1 // pred_region
      _
    $region25: #{x_lstm_forward.1} parent=1 // pred_fallthru
      _
    // Predicated region
    $region26: #{x_lstm_forward.1} parent=1 // pred_check
      _
    $region27: #{x_lstm_forward.1} parent=1 // pred_check_branch
      %35 = sbr.rel (0) target = $region29
    $region28: #{x_lstm_forward.1} parent=1 // pred_region
      _
    $region29: #{x_lstm_forward.1} parent=1 // pred_fallthru
      _
    // Predicated region
    $region30: #{x_lstm_forward.1} parent=1 // pred_check
      _
    $region31: #{x_lstm_forward.1} parent=1 // pred_check_branch
      %37 = sbr.rel (0) target = $region33
    $region32: #{x_lstm_forward.1} parent=1 // pred_region
      _
    $region33: #{x_lstm_forward.1} parent=1 // pred_fallthru
      _
    // Predicated region
    $region34: #{x_lstm_forward.1} parent=1 // pred_check
      _
    $region35: #{x_lstm_forward.1} parent=1 // pred_check_branch
      %39 = sbr.rel (0) target = $region37
    $region36: #{x_lstm_forward.1} parent=1 // pred_region
      _
    $region37: #{x_lstm_forward.1} parent=1 // pred_fallthru
      _
    // Predicated region
    $region38: #{x_lstm_forward.1} parent=1 // pred_check
      _
    $region39: #{x_lstm_forward.1} parent=1 // pred_check_branch
      %41 = sbr.rel (0) target = $region41
    $region40: #{x_lstm_forward.1} parent=1 // pred_region
      _
    $region41: #{x_lstm_forward.1} parent=1 // pred_fallthru
      _
    // Predicated region
    $region42: #{x_lstm_forward.1} parent=1 // pred_check
      _
    $region43: #{x_lstm_forward.1} parent=1 // pred_check_branch
      %43 = sbr.rel (0) target = $region45
    $region44: #{x_lstm_forward.1} parent=1 // pred_region
      _
    $region45: #{x_lstm_forward.1} parent=1 // pred_fallthru
      _
    // Predicated region
    $region46: #{x_lstm_forward.1} parent=1 // pred_check
      _
    $region47: #{x_lstm_forward.1} parent=1 // pred_check_branch
      %45 = sbr.rel (0) target = $region49
    $region48: #{x_lstm_forward.1} parent=1 // pred_region
      _
    $region49: #{x_lstm_forward.1} parent=1 // pred_fallthru
      _
    // Predicated region
    $region50: #{x_lstm_forward.1} parent=1 // pred_check
      _
    $region51: #{x_lstm_forward.1} parent=1 // pred_check_branch
      %47 = sbr.rel (0) target = $region53
    $region52: #{x_lstm_forward.1} parent=1 // pred_region
      _
    $region53: #{x_lstm_forward.1} parent=1 // pred_fallthru
      _
    // Predicated region
    $region54: #{x_lstm_forward.1} parent=1 // pred_check
      _
    $region55: #{x_lstm_forward.1} parent=1 // pred_check_branch
      %49 = sbr.rel (0) target = $region57
    $region56: #{x_lstm_forward.1} parent=1 // pred_region
      _
    $region57: #{x_lstm_forward.1} parent=1 // pred_fallthru
      _
    %v50 = vld [vmem:[%s1] sm:$0xff]
    %v51 = vld [vmem:[%s1 + $0x8] sm:$0xff]
    %v52 = vld [vmem:[%s1 + $0x10] sm:$0xff]
    %v53 = vld [vmem:[%s1 + $0x18] sm:$0xff]
    %v54 = vld [vmem:[%s2] sm:$0xff]
    %v55 = vld [vmem:[%s2 + $0x8] sm:$0xff]
    %v56 = vld [vmem:[%s2 + $0x10] sm:$0xff]
    %v57 = vld [vmem:[%s2 + $0x18] sm:$0xff]
    %v58 = vld [vmem:[%s0] sm:$0xf]
    %s59 = scalar_lea.vmem %s0, 4
    %v60 = vld [vmem:[%s59] sm:$0xf]
    %s61 = scalar_lea.vmem %s0, 8
    %v62 = vld [vmem:[%s61] sm:$0xf]
    %s63 = scalar_lea.vmem %s0, 12
    %v64 = vld [vmem:[%s63] sm:$0xf]
    %s65 = scalar_lea.vmem %s0, 16
    %v66 = vld [vmem:[%s65] sm:$0xf]
    %s67 = scalar_lea.vmem %s0, 20
    %v68 = vld [vmem:[%s67] sm:$0xf]
    %s69 = scalar_lea.vmem %s0, 24
    %v70 = vld [vmem:[%s69] sm:$0xf]
    %s71 = scalar_lea.vmem %s0, 28
    %v72 = vld [vmem:[%s71] sm:$0xf]
    %vm73 = vcmask 261120
    %v75 = vsel %vm73, 0.0, 0
    %77 = vmatpush.msra.mxu0 0.0
    %78 = vmatpush.msra.mxu0 0.0
    %79 = vmatpush.msra.mxu0 0.0
    %80 = vmatpush.msra.mxu0 0.0
    %81 = vmatpush.msra.mxu0 0.0
    %82 = vmatpush.msra.mxu0 0.0
    %83 = vmatpush.msra.mxu0 0.0
    %84 = vmatpush.msra.mxu0 0.0
    %85 = vmatpush.msra.mxu0 0.0
    %86 = vmatpush.msra.mxu0 0.0
    %87 = vmatpush.msra.mxu0 0.0
    %88 = vmatpush.msra.mxu0 0.0
    %89 = vmatpush.msra.mxu0 %v53
    %90 = vmatpush.msra.mxu0 %v52
    %91 = vmatpush.msra.mxu0 %v51
    %92 = vmatpush.msra.mxu0 %v50
    %93 = vmatmul.f32.gmra.mxu0 %v75
    %v94 = vpop.f32.mrf.mxu0
    %v95 = vadd.f32 %v58, %v94
    %96 = vdwg.mxu0
    %v97 = vxor.u32 %v95, 2147483648
    %v98 = vmul.f32 %v97, 1.442695
    %v99 = vpow.pop %v98
    %v100 = vadd.f32 %v99, 1.0
    %v101 = vrcp.pop %v100
    %v102 = vmul.f32 %v100, %v101
    %v103 = vsub.f32 1.0, %v102
    %v104 = vmul.f32 %v101, %v103
    %v105 = vadd.f32 %v101, %v104
    %vm106 = vweird.f32 %v100
    %vm107 = vweird.f32 %v101
    %vm108 = vmor %vm106, %vm107
    %v109 = vsel %vm108, %v101, %v105
    %v110 = vand.u32 2147483647, %v100
    %vm111 = vcmp.eq.f32.partialorder %v110, 8.507059e+37
    %v112 = vand.u32 %v100, 2147483648
    %v113 = vor.u32 1.1754944e-38, %v112
    %v114 = vsel %vm111, %v113, %v109
    %v115 = vmul.f32 1.0, %v114
    %v116 = vmul.f32 %v115, 2.0
    %v117 = vsub.f32 %v116, 1.0
    %v118 = vmul.f32 %v115, 0.0
    %120 = vrot.lane.b32.xlu0 %v117, 64
    %v121 = vpop.permute.xlu0 %120
    %v123 = vmul.f32 %v115, %v121
    %125 = vrot.lane.b32.xlu0 %v123, 32
    %v126 = vpop.permute.xlu0 %125
    %v128 = vadd.f32 %v118, %v126
    %v129 = vtanh.pop %v128
    %131 = vrot.lane.b32.xlu0 %v129, 64
    %v132 = vpop.permute.xlu0 %131
    %v134 = vmul.f32 %v115, %v132
    %136 = vst [vmem:[#allocation1] ss:$4 sm:$0xff] %v72
    %v137 = vld.sshfl [vmem:[#allocation1 + $0x8] sm:$0xff pattern:$0x73625140]
    %139 = vmatpush.msra.mxu0 0.0
    %140 = vmatpush.msra.mxu0 0.0
    %141 = vmatpush.msra.mxu0 0.0
    %142 = vmatpush.msra.mxu0 0.0
    %143 = vmatpush.msra.mxu0 0.0
    %144 = vmatpush.msra.mxu0 0.0
    %145 = vmatpush.msra.mxu0 0.0
    %146 = vmatpush.msra.mxu0 0.0
    %147 = vmatpush.msra.mxu0 0.0
    %148 = vmatpush.msra.mxu0 0.0
    %149 = vmatpush.msra.mxu0 0.0
    %150 = vmatpush.msra.mxu0 0.0
    %151 = vmatpush.msra.mxu0 %v57
    %152 = vmatpush.msra.mxu0 %v56
    %153 = vmatpush.msra.mxu0 %v55
    %154 = vmatpush.msra.mxu0 %v54
    %155 = vmatmul.f32.gmra.mxu0 %v75
    %v156 = vpop.f32.mrf.mxu0
    %v157 = vadd.f32 %v137, %v156
    %158 = vdwg.mxu0
    %v159 = vxor.u32 %v157, 2147483648
    %v160 = vmul.f32 %v159, 1.442695
    %v161 = vpow.pop %v160
    %v162 = vadd.f32 %v161, 1.0
    %v163 = vrcp.pop %v162
    %v164 = vmul.f32 %v162, %v163
    %v165 = vsub.f32 1.0, %v164
    %v166 = vmul.f32 %v163, %v165
    %v167 = vadd.f32 %v163, %v166
    %vm168 = vweird.f32 %v162
    %vm169 = vweird.f32 %v163
    %vm170 = vmor %vm168, %vm169
    %v171 = vsel %vm170, %v163, %v167
    %v172 = vand.u32 2147483647, %v162
    %vm173 = vcmp.eq.f32.partialorder %v172, 8.507059e+37
    %v174 = vand.u32 %v162, 2147483648
    %v175 = vor.u32 1.1754944e-38, %v174
    %v176 = vsel %vm173, %v175, %v171
    %v177 = vmul.f32 1.0, %v176
    %v178 = vmul.f32 %v177, 2.0
    %v179 = vsub.f32 %v178, 1.0
    %v180 = vmul.f32 %v177, 0.0
    %182 = vrot.lane.b32.xlu0 %v179, 64
    %v183 = vpop.permute.xlu0 %182
    %v185 = vmul.f32 %v177, %v183
    %187 = vrot.lane.b32.xlu0 %v185, 32
    %v188 = vpop.permute.xlu0 %187
    %v190 = vadd.f32 %v180, %v188
    %v191 = vtanh.pop %v190
    %193 = vrot.lane.b32.xlu0 %v191, 64
    %v194 = vpop.permute.xlu0 %193
    %v196 = vmul.f32 %v177, %v194
    %198 = vrot.lane.b32.xlu0 %v134, 32
    %v199 = vpop.permute.xlu0 %198
    %v200 = vsel %vm73, %v199, 0
    %202 = vmatpush.msra.mxu0 0.0
    %203 = vmatpush.msra.mxu0 0.0
    %204 = vmatpush.msra.mxu0 0.0
    %205 = vmatpush.msra.mxu0 0.0
    %206 = vmatpush.msra.mxu0 0.0
    %207 = vmatpush.msra.mxu0 0.0
    %208 = vmatpush.msra.mxu0 0.0
    %209 = vmatpush.msra.mxu0 0.0
    %210 = vmatpush.msra.mxu0 0.0
    %211 = vmatpush.msra.mxu0 0.0
    %212 = vmatpush.msra.mxu0 0.0
    %213 = vmatpush.msra.mxu0 0.0
    %214 = vmatpush.msra.mxu0 %v53
    %215 = vmatpush.msra.mxu0 %v52
    %216 = vmatpush.msra.mxu0 %v51
    %217 = vmatpush.msra.mxu0 %v50
    %218 = vmatmul.f32.gmra.mxu0 %v200
    %v219 = vpop.f32.mrf.mxu0
    %v220 = vadd.f32 %v60, %v219
    %221 = vdwg.mxu0
    %v222 = vxor.u32 %v220, 2147483648
    %v223 = vmul.f32 %v222, 1.442695
    %v224 = vpow.pop %v223
    %v225 = vadd.f32 %v224, 1.0
    %v226 = vrcp.pop %v225
    %v227 = vmul.f32 %v225, %v226
    %v228 = vsub.f32 1.0, %v227
    %v229 = vmul.f32 %v226, %v228
    %v230 = vadd.f32 %v226, %v229
    %vm231 = vweird.f32 %v225
    %vm232 = vweird.f32 %v226
    %vm233 = vmor %vm231, %vm232
    %v234 = vsel %vm233, %v226, %v230
    %v235 = vand.u32 2147483647, %v225
    %vm236 = vcmp.eq.f32.partialorder %v235, 8.507059e+37
    %v237 = vand.u32 %v225, 2147483648
    %v238 = vor.u32 1.1754944e-38, %v237
    %v239 = vsel %vm236, %v238, %v234
    %v240 = vmul.f32 1.0, %v239
    %v241 = vmul.f32 %v240, 2.0
    %v242 = vsub.f32 %v241, 1.0
    %v243 = vmul.f32 %v240, %v128
    %245 = vrot.lane.b32.xlu0 %v242, 64
    %v246 = vpop.permute.xlu0 %245
    %v248 = vmul.f32 %v240, %v246
    %250 = vrot.lane.b32.xlu0 %v248, 32
    %v251 = vpop.permute.xlu0 %250
    %v253 = vadd.f32 %v243, %v251
    %v254 = vtanh.pop %v253
    %256 = vrot.lane.b32.xlu0 %v254, 64
    %v257 = vpop.permute.xlu0 %256
    %v259 = vmul.f32 %v240, %v257
    %261 = vrot.lane.b32.xlu0 %v196, 32
    %v262 = vpop.permute.xlu0 %261
    %264 = vst [vmem:[#allocation1] ss:$4 sm:$0xff] %v70
    %v265 = vld.sshfl [vmem:[#allocation1 + $0x8] sm:$0xff pattern:$0x73625140]
    %v267 = vsel %vm73, %v262, 0
    %269 = vmatpush.msra.mxu0 0.0
    %270 = vmatpush.msra.mxu0 0.0
    %271 = vmatpush.msra.mxu0 0.0
    %272 = vmatpush.msra.mxu0 0.0
    %273 = vmatpush.msra.mxu0 0.0
    %274 = vmatpush.msra.mxu0 0.0
    %275 = vmatpush.msra.mxu0 0.0
    %276 = vmatpush.msra.mxu0 0.0
    %277 = vmatpush.msra.mxu0 0.0
    %278 = vmatpush.msra.mxu0 0.0
    %279 = vmatpush.msra.mxu0 0.0
    %280 = vmatpush.msra.mxu0 0.0
    %281 = vmatpush.msra.mxu0 %v57
    %282 = vmatpush.msra.mxu0 %v56
    %283 = vmatpush.msra.mxu0 %v55
    %284 = vmatpush.msra.mxu0 %v54
    %285 = vmatmul.f32.gmra.mxu0 %v267
    %v286 = vpop.f32.mrf.mxu0
    %v287 = vadd.f32 %v265, %v286
    %288 = vdwg.mxu0
    %v289 = vxor.u32 %v287, 2147483648
    %v290 = vmul.f32 %v289, 1.442695
    %v291 = vpow.pop %v290
    %v292 = vadd.f32 %v291, 1.0
    %v293 = vrcp.pop %v292
    %v294 = vmul.f32 %v292, %v293
    %v295 = vsub.f32 1.0, %v294
    %v296 = vmul.f32 %v293, %v295
    %v297 = vadd.f32 %v293, %v296
    %vm298 = vweird.f32 %v292
    %vm299 = vweird.f32 %v293
    %vm300 = vmor %vm298, %vm299
    %v301 = vsel %vm300, %v293, %v297
    %v302 = vand.u32 2147483647, %v292
    %vm303 = vcmp.eq.f32.partialorder %v302, 8.507059e+37
    %v304 = vand.u32 %v292, 2147483648
    %v305 = vor.u32 1.1754944e-38, %v304
    %v306 = vsel %vm303, %v305, %v301
    %v307 = vmul.f32 1.0, %v306
    %v308 = vmul.f32 %v307, 2.0
    %v309 = vsub.f32 %v308, 1.0
    %v310 = vmul.f32 %v307, %v190
    %312 = vrot.lane.b32.xlu0 %v309, 64
    %v313 = vpop.permute.xlu0 %312
    %v315 = vmul.f32 %v307, %v313
    %317 = vrot.lane.b32.xlu0 %v315, 32
    %v318 = vpop.permute.xlu0 %317
    %v320 = vadd.f32 %v310, %v318
    %v321 = vtanh.pop %v320
    %323 = vrot.lane.b32.xlu0 %v321, 64
    %v324 = vpop.permute.xlu0 %323
    %v326 = vmul.f32 %v307, %v324
    %328 = vrot.lane.b32.xlu0 %v259, 32
    %v329 = vpop.permute.xlu0 %328
    %v330 = vsel %vm73, %v329, 0
    %332 = vmatpush.msra.mxu0 0.0
    %333 = vmatpush.msra.mxu0 0.0
    %334 = vmatpush.msra.mxu0 0.0
    %335 = vmatpush.msra.mxu0 0.0
    %336 = vmatpush.msra.mxu0 0.0
    %337 = vmatpush.msra.mxu0 0.0
    %338 = vmatpush.msra.mxu0 0.0
    %339 = vmatpush.msra.mxu0 0.0
    %340 = vmatpush.msra.mxu0 0.0
    %341 = vmatpush.msra.mxu0 0.0
    %342 = vmatpush.msra.mxu0 0.0
    %343 = vmatpush.msra.mxu0 0.0
    %344 = vmatpush.msra.mxu0 %v53
    %345 = vmatpush.msra.mxu0 %v52
    %346 = vmatpush.msra.mxu0 %v51
    %347 = vmatpush.msra.mxu0 %v50
    %348 = vmatmul.f32.gmra.mxu0 %v330
    %v349 = vpop.f32.mrf.mxu0
    %v350 = vadd.f32 %v62, %v349
    %351 = vdwg.mxu0
    %v352 = vxor.u32 %v350, 2147483648
    %v353 = vmul.f32 %v352, 1.442695
    %v354 = vpow.pop %v353
    %v355 = vadd.f32 %v354, 1.0
    %v356 = vrcp.pop %v355
    %v357 = vmul.f32 %v355, %v356
    %v358 = vsub.f32 1.0, %v357
    %v359 = vmul.f32 %v356, %v358
    %v360 = vadd.f32 %v356, %v359
    %vm361 = vweird.f32 %v355
    %vm362 = vweird.f32 %v356
    %vm363 = vmor %vm361, %vm362
    %v364 = vsel %vm363, %v356, %v360
    %v365 = vand.u32 2147483647, %v355
    %vm366 = vcmp.eq.f32.partialorder %v365, 8.507059e+37
    %v367 = vand.u32 %v355, 2147483648
    %v368 = vor.u32 1.1754944e-38, %v367
    %v369 = vsel %vm366, %v368, %v364
    %v370 = vmul.f32 1.0, %v369
    %v371 = vmul.f32 %v370, 2.0
    %v372 = vsub.f32 %v371, 1.0
    %v373 = vmul.f32 %v370, %v253
    %375 = vrot.lane.b32.xlu0 %v372, 64
    %v376 = vpop.permute.xlu0 %375
    %v378 = vmul.f32 %v370, %v376
    %380 = vrot.lane.b32.xlu0 %v378, 32
    %v381 = vpop.permute.xlu0 %380
    %v383 = vadd.f32 %v373, %v381
    %v384 = vtanh.pop %v383
    %386 = vrot.lane.b32.xlu0 %v384, 64
    %v387 = vpop.permute.xlu0 %386
    %v389 = vmul.f32 %v370, %v387
    %391 = vrot.lane.b32.xlu0 %v326, 32
    %v392 = vpop.permute.xlu0 %391
    %394 = vst [vmem:[#allocation1] ss:$4 sm:$0xff] %v68
    %v395 = vld.sshfl [vmem:[#allocation1 + $0x8] sm:$0xff pattern:$0x73625140]
    %v397 = vsel %vm73, %v392, 0
    %399 = vmatpush.msra.mxu0 0.0
    %400 = vmatpush.msra.mxu0 0.0
    %401 = vmatpush.msra.mxu0 0.0
    %402 = vmatpush.msra.mxu0 0.0
    %403 = vmatpush.msra.mxu0 0.0
    %404 = vmatpush.msra.mxu0 0.0
    %405 = vmatpush.msra.mxu0 0.0
    %406 = vmatpush.msra.mxu0 0.0
    %407 = vmatpush.msra.mxu0 0.0
    %408 = vmatpush.msra.mxu0 0.0
    %409 = vmatpush.msra.mxu0 0.0
    %410 = vmatpush.msra.mxu0 0.0
    %411 = vmatpush.msra.mxu0 %v57
    %412 = vmatpush.msra.mxu0 %v56
    %413 = vmatpush.msra.mxu0 %v55
    %414 = vmatpush.msra.mxu0 %v54
    %415 = vmatmul.f32.gmra.mxu0 %v397
    %v416 = vpop.f32.mrf.mxu0
    %v417 = vadd.f32 %v395, %v416
    %418 = vdwg.mxu0
    %v419 = vxor.u32 %v417, 2147483648
    %v420 = vmul.f32 %v419, 1.442695
    %v421 = vpow.pop %v420
    %v422 = vadd.f32 %v421, 1.0
    %v423 = vrcp.pop %v422
    %v424 = vmul.f32 %v422, %v423
    %v425 = vsub.f32 1.0, %v424
    %v426 = vmul.f32 %v423, %v425
    %v427 = vadd.f32 %v423, %v426
    %vm428 = vweird.f32 %v422
    %vm429 = vweird.f32 %v423
    %vm430 = vmor %vm428, %vm429
    %v431 = vsel %vm430, %v423, %v427
    %v432 = vand.u32 2147483647, %v422
    %vm433 = vcmp.eq.f32.partialorder %v432, 8.507059e+37
    %v434 = vand.u32 %v422, 2147483648
    %v435 = vor.u32 1.1754944e-38, %v434
    %v436 = vsel %vm433, %v435, %v431
    %v437 = vmul.f32 1.0, %v436
    %v438 = vmul.f32 %v437, 2.0
    %v439 = vsub.f32 %v438, 1.0
    %v440 = vmul.f32 %v437, %v320
    %442 = vrot.lane.b32.xlu0 %v439, 64
    %v443 = vpop.permute.xlu0 %442
    %v445 = vmul.f32 %v437, %v443
    %447 = vrot.lane.b32.xlu0 %v445, 32
    %v448 = vpop.permute.xlu0 %447
    %v450 = vadd.f32 %v440, %v448
    %v451 = vtanh.pop %v450
    %453 = vrot.lane.b32.xlu0 %v451, 64
    %v454 = vpop.permute.xlu0 %453
    %v456 = vmul.f32 %v437, %v454
    %458 = vrot.lane.b32.xlu0 %v389, 32
    %v459 = vpop.permute.xlu0 %458
    %v460 = vsel %vm73, %v459, 0
    %462 = vmatpush.msra.mxu0 0.0
    %463 = vmatpush.msra.mxu0 0.0
    %464 = vmatpush.msra.mxu0 0.0
    %465 = vmatpush.msra.mxu0 0.0
    %466 = vmatpush.msra.mxu0 0.0
    %467 = vmatpush.msra.mxu0 0.0
    %468 = vmatpush.msra.mxu0 0.0
    %469 = vmatpush.msra.mxu0 0.0
    %470 = vmatpush.msra.mxu0 0.0
    %471 = vmatpush.msra.mxu0 0.0
    %472 = vmatpush.msra.mxu0 0.0
    %473 = vmatpush.msra.mxu0 0.0
    %474 = vmatpush.msra.mxu0 %v53
    %475 = vmatpush.msra.mxu0 %v52
    %476 = vmatpush.msra.mxu0 %v51
    %477 = vmatpush.msra.mxu0 %v50
    %478 = vmatmul.f32.gmra.mxu0 %v460
    %v479 = vpop.f32.mrf.mxu0
    %v480 = vadd.f32 %v64, %v479
    %481 = vdwg.mxu0
    %v482 = vxor.u32 %v480, 2147483648
    %v483 = vmul.f32 %v482, 1.442695
    %v484 = vpow.pop %v483
    %v485 = vadd.f32 %v484, 1.0
    %v486 = vrcp.pop %v485
    %v487 = vmul.f32 %v485, %v486
    %v488 = vsub.f32 1.0, %v487
    %v489 = vmul.f32 %v486, %v488
    %v490 = vadd.f32 %v486, %v489
    %vm491 = vweird.f32 %v485
    %vm492 = vweird.f32 %v486
    %vm493 = vmor %vm491, %vm492
    %v494 = vsel %vm493, %v486, %v490
    %v495 = vand.u32 2147483647, %v485
    %vm496 = vcmp.eq.f32.partialorder %v495, 8.507059e+37
    %v497 = vand.u32 %v485, 2147483648
    %v498 = vor.u32 1.1754944e-38, %v497
    %v499 = vsel %vm496, %v498, %v494
    %v500 = vmul.f32 1.0, %v499
    %v501 = vmul.f32 %v500, 2.0
    %v502 = vsub.f32 %v501, 1.0
    %v503 = vmul.f32 %v500, %v383
    %505 = vrot.lane.b32.xlu0 %v502, 64
    %v506 = vpop.permute.xlu0 %505
    %v508 = vmul.f32 %v500, %v506
    %510 = vrot.lane.b32.xlu0 %v508, 32
    %v511 = vpop.permute.xlu0 %510
    %v513 = vadd.f32 %v503, %v511
    %v514 = vtanh.pop %v513
    %516 = vrot.lane.b32.xlu0 %v514, 64
    %v517 = vpop.permute.xlu0 %516
    %v519 = vmul.f32 %v500, %v517
    %521 = vrot.lane.b32.xlu0 %v456, 32
    %v522 = vpop.permute.xlu0 %521
    %524 = vst [vmem:[#allocation1] ss:$4 sm:$0xff] %v66
    %v525 = vld.sshfl [vmem:[#allocation1 + $0x8] sm:$0xff pattern:$0x73625140]
    %v527 = vsel %vm73, %v522, 0
    %529 = vmatpush.msra.mxu0 0.0
    %530 = vmatpush.msra.mxu0 0.0
    %531 = vmatpush.msra.mxu0 0.0
    %532 = vmatpush.msra.mxu0 0.0
    %533 = vmatpush.msra.mxu0 0.0
    %534 = vmatpush.msra.mxu0 0.0
    %535 = vmatpush.msra.mxu0 0.0
    %536 = vmatpush.msra.mxu0 0.0
    %537 = vmatpush.msra.mxu0 0.0
    %538 = vmatpush.msra.mxu0 0.0
    %539 = vmatpush.msra.mxu0 0.0
    %540 = vmatpush.msra.mxu0 0.0
    %541 = vmatpush.msra.mxu0 %v57
    %542 = vmatpush.msra.mxu0 %v56
    %543 = vmatpush.msra.mxu0 %v55
    %544 = vmatpush.msra.mxu0 %v54
    %545 = vmatmul.f32.gmra.mxu0 %v527
    %v546 = vpop.f32.mrf.mxu0
    %v547 = vadd.f32 %v525, %v546
    %548 = vdwg.mxu0
    %v549 = vxor.u32 %v547, 2147483648
    %v550 = vmul.f32 %v549, 1.442695
    %v551 = vpow.pop %v550
    %v552 = vadd.f32 %v551, 1.0
    %v553 = vrcp.pop %v552
    %v554 = vmul.f32 %v552, %v553
    %v555 = vsub.f32 1.0, %v554
    %v556 = vmul.f32 %v553, %v555
    %v557 = vadd.f32 %v553, %v556
    %vm558 = vweird.f32 %v552
    %vm559 = vweird.f32 %v553
    %vm560 = vmor %vm558, %vm559
    %v561 = vsel %vm560, %v553, %v557
    %v562 = vand.u32 2147483647, %v552
    %vm563 = vcmp.eq.f32.partialorder %v562, 8.507059e+37
    %v564 = vand.u32 %v552, 2147483648
    %v565 = vor.u32 1.1754944e-38, %v564
    %v566 = vsel %vm563, %v565, %v561
    %v567 = vmul.f32 1.0, %v566
    %v568 = vmul.f32 %v567, 2.0
    %v569 = vsub.f32 %v568, 1.0
    %v570 = vmul.f32 %v567, %v450
    %572 = vrot.lane.b32.xlu0 %v569, 64
    %v573 = vpop.permute.xlu0 %572
    %v575 = vmul.f32 %v567, %v573
    %577 = vrot.lane.b32.xlu0 %v575, 32
    %v578 = vpop.permute.xlu0 %577
    %v580 = vadd.f32 %v570, %v578
    %v581 = vtanh.pop %v580
    %583 = vrot.lane.b32.xlu0 %v581, 64
    %v584 = vpop.permute.xlu0 %583
    %v586 = vmul.f32 %v567, %v584
    %588 = vrot.lane.b32.xlu0 %v519, 32
    %v589 = vpop.permute.xlu0 %588
    %v590 = vsel %vm73, %v589, 0
    %592 = vmatpush.msra.mxu0 0.0
    %593 = vmatpush.msra.mxu0 0.0
    %594 = vmatpush.msra.mxu0 0.0
    %595 = vmatpush.msra.mxu0 0.0
    %596 = vmatpush.msra.mxu0 0.0
    %597 = vmatpush.msra.mxu0 0.0
    %598 = vmatpush.msra.mxu0 0.0
    %599 = vmatpush.msra.mxu0 0.0
    %600 = vmatpush.msra.mxu0 0.0
    %601 = vmatpush.msra.mxu0 0.0
    %602 = vmatpush.msra.mxu0 0.0
    %603 = vmatpush.msra.mxu0 0.0
    %604 = vmatpush.msra.mxu0 %v53
    %605 = vmatpush.msra.mxu0 %v52
    %606 = vmatpush.msra.mxu0 %v51
    %607 = vmatpush.msra.mxu0 %v50
    %608 = vmatmul.f32.gmra.mxu0 %v590
    %v609 = vpop.f32.mrf.mxu0
    %v610 = vadd.f32 %v66, %v609
    %611 = vdwg.mxu0
    %v612 = vxor.u32 %v610, 2147483648
    %v613 = vmul.f32 %v612, 1.442695
    %v614 = vpow.pop %v613
    %v615 = vadd.f32 %v614, 1.0
    %v616 = vrcp.pop %v615
    %v617 = vmul.f32 %v615, %v616
    %v618 = vsub.f32 1.0, %v617
    %v619 = vmul.f32 %v616, %v618
    %v620 = vadd.f32 %v616, %v619
    %vm621 = vweird.f32 %v615
    %vm622 = vweird.f32 %v616
    %vm623 = vmor %vm621, %vm622
    %v624 = vsel %vm623, %v616, %v620
    %v625 = vand.u32 2147483647, %v615
    %vm626 = vcmp.eq.f32.partialorder %v625, 8.507059e+37
    %v627 = vand.u32 %v615, 2147483648
    %v628 = vor.u32 1.1754944e-38, %v627
    %v629 = vsel %vm626, %v628, %v624
    %v630 = vmul.f32 1.0, %v629
    %v631 = vmul.f32 %v630, 2.0
    %v632 = vsub.f32 %v631, 1.0
    %v633 = vmul.f32 %v630, %v513
    %635 = vrot.lane.b32.xlu0 %v632, 64
    %v636 = vpop.permute.xlu0 %635
    %v638 = vmul.f32 %v630, %v636
    %640 = vrot.lane.b32.xlu0 %v638, 32
    %v641 = vpop.permute.xlu0 %640
    %v643 = vadd.f32 %v633, %v641
    %v644 = vtanh.pop %v643
    %646 = vrot.lane.b32.xlu0 %v644, 64
    %v647 = vpop.permute.xlu0 %646
    %v649 = vmul.f32 %v630, %v647
    %651 = vrot.lane.b32.xlu0 %v586, 32
    %v652 = vpop.permute.xlu0 %651
    %654 = vst [vmem:[#allocation1] ss:$4 sm:$0xff] %v64
    %v655 = vld.sshfl [vmem:[#allocation1 + $0x8] sm:$0xff pattern:$0x73625140]
    %v657 = vsel %vm73, %v652, 0
    %659 = vmatpush.msra.mxu0 0.0
    %660 = vmatpush.msra.mxu0 0.0
    %661 = vmatpush.msra.mxu0 0.0
    %662 = vmatpush.msra.mxu0 0.0
    %663 = vmatpush.msra.mxu0 0.0
    %664 = vmatpush.msra.mxu0 0.0
    %665 = vmatpush.msra.mxu0 0.0
    %666 = vmatpush.msra.mxu0 0.0
    %667 = vmatpush.msra.mxu0 0.0
    %668 = vmatpush.msra.mxu0 0.0
    %669 = vmatpush.msra.mxu0 0.0
    %670 = vmatpush.msra.mxu0 0.0
    %671 = vmatpush.msra.mxu0 %v57
    %672 = vmatpush.msra.mxu0 %v56
    %673 = vmatpush.msra.mxu0 %v55
    %674 = vmatpush.msra.mxu0 %v54
    %675 = vmatmul.f32.gmra.mxu0 %v657
    %v676 = vpop.f32.mrf.mxu0
    %v677 = vadd.f32 %v655, %v676
    %678 = vdwg.mxu0
    %v679 = vxor.u32 %v677, 2147483648
    %v680 = vmul.f32 %v679, 1.442695
    %v681 = vpow.pop %v680
    %v682 = vadd.f32 %v681, 1.0
    %v683 = vrcp.pop %v682
    %v684 = vmul.f32 %v682, %v683
    %v685 = vsub.f32 1.0, %v684
    %v686 = vmul.f32 %v683, %v685
    %v687 = vadd.f32 %v683, %v686
    %vm688 = vweird.f32 %v682
    %vm689 = vweird.f32 %v683
    %vm690 = vmor %vm688, %vm689
    %v691 = vsel %vm690, %v683, %v687
    %v692 = vand.u32 2147483647, %v682
    %vm693 = vcmp.eq.f32.partialorder %v692, 8.507059e+37
    %v694 = vand.u32 %v682, 2147483648
    %v695 = vor.u32 1.1754944e-38, %v694
    %v696 = vsel %vm693, %v695, %v691
    %v697 = vmul.f32 1.0, %v696
    %v698 = vmul.f32 %v697, 2.0
    %v699 = vsub.f32 %v698, 1.0
    %v700 = vmul.f32 %v697, %v580
    %702 = vrot.lane.b32.xlu0 %v699, 64
    %v703 = vpop.permute.xlu0 %702
    %v705 = vmul.f32 %v697, %v703
    %707 = vrot.lane.b32.xlu0 %v705, 32
    %v708 = vpop.permute.xlu0 %707
    %v710 = vadd.f32 %v700, %v708
    %v711 = vtanh.pop %v710
    %713 = vrot.lane.b32.xlu0 %v711, 64
    %v714 = vpop.permute.xlu0 %713
    %v716 = vmul.f32 %v697, %v714
    %718 = vrot.lane.b32.xlu0 %v649, 32
    %v719 = vpop.permute.xlu0 %718
    %v720 = vsel %vm73, %v719, 0
    %722 = vmatpush.msra.mxu0 0.0
    %723 = vmatpush.msra.mxu0 0.0
    %724 = vmatpush.msra.mxu0 0.0
    %725 = vmatpush.msra.mxu0 0.0
    %726 = vmatpush.msra.mxu0 0.0
    %727 = vmatpush.msra.mxu0 0.0
    %728 = vmatpush.msra.mxu0 0.0
    %729 = vmatpush.msra.mxu0 0.0
    %730 = vmatpush.msra.mxu0 0.0
    %731 = vmatpush.msra.mxu0 0.0
    %732 = vmatpush.msra.mxu0 0.0
    %733 = vmatpush.msra.mxu0 0.0
    %734 = vmatpush.msra.mxu0 %v53
    %735 = vmatpush.msra.mxu0 %v52
    %736 = vmatpush.msra.mxu0 %v51
    %737 = vmatpush.msra.mxu0 %v50
    %738 = vmatmul.f32.gmra.mxu0 %v720
    %v739 = vpop.f32.mrf.mxu0
    %v740 = vadd.f32 %v68, %v739
    %741 = vdwg.mxu0
    %v742 = vxor.u32 %v740, 2147483648
    %v743 = vmul.f32 %v742, 1.442695
    %v744 = vpow.pop %v743
    %v745 = vadd.f32 %v744, 1.0
    %v746 = vrcp.pop %v745
    %v747 = vmul.f32 %v745, %v746
    %v748 = vsub.f32 1.0, %v747
    %v749 = vmul.f32 %v746, %v748
    %v750 = vadd.f32 %v746, %v749
    %vm751 = vweird.f32 %v745
    %vm752 = vweird.f32 %v746
    %vm753 = vmor %vm751, %vm752
    %v754 = vsel %vm753, %v746, %v750
    %v755 = vand.u32 2147483647, %v745
    %vm756 = vcmp.eq.f32.partialorder %v755, 8.507059e+37
    %v757 = vand.u32 %v745, 2147483648
    %v758 = vor.u32 1.1754944e-38, %v757
    %v759 = vsel %vm756, %v758, %v754
    %v760 = vmul.f32 1.0, %v759
    %v761 = vmul.f32 %v760, 2.0
    %v762 = vsub.f32 %v761, 1.0
    %v763 = vmul.f32 %v760, %v643
    %765 = vrot.lane.b32.xlu0 %v762, 64
    %v766 = vpop.permute.xlu0 %765
    %v768 = vmul.f32 %v760, %v766
    %770 = vrot.lane.b32.xlu0 %v768, 32
    %v771 = vpop.permute.xlu0 %770
    %v773 = vadd.f32 %v763, %v771
    %v774 = vtanh.pop %v773
    %776 = vrot.lane.b32.xlu0 %v774, 64
    %v777 = vpop.permute.xlu0 %776
    %v779 = vmul.f32 %v760, %v777
    %781 = vrot.lane.b32.xlu0 %v716, 32
    %v782 = vpop.permute.xlu0 %781
    %784 = vst [vmem:[#allocation1] ss:$4 sm:$0xff] %v62
    %v785 = vld.sshfl [vmem:[#allocation1 + $0x8] sm:$0xff pattern:$0x73625140]
    %v787 = vsel %vm73, %v782, 0
    %789 = vmatpush.msra.mxu0 0.0
    %790 = vmatpush.msra.mxu0 0.0
    %791 = vmatpush.msra.mxu0 0.0
    %792 = vmatpush.msra.mxu0 0.0
    %793 = vmatpush.msra.mxu0 0.0
    %794 = vmatpush.msra.mxu0 0.0
    %795 = vmatpush.msra.mxu0 0.0
    %796 = vmatpush.msra.mxu0 0.0
    %797 = vmatpush.msra.mxu0 0.0
    %798 = vmatpush.msra.mxu0 0.0
    %799 = vmatpush.msra.mxu0 0.0
    %800 = vmatpush.msra.mxu0 0.0
    %801 = vmatpush.msra.mxu0 %v57
    %802 = vmatpush.msra.mxu0 %v56
    %803 = vmatpush.msra.mxu0 %v55
    %804 = vmatpush.msra.mxu0 %v54
    %805 = vmatmul.f32.gmra.mxu0 %v787
    %v806 = vpop.f32.mrf.mxu0
    %v807 = vadd.f32 %v785, %v806
    %808 = vdwg.mxu0
    %v809 = vxor.u32 %v807, 2147483648
    %v810 = vmul.f32 %v809, 1.442695
    %v811 = vpow.pop %v810
    %v812 = vadd.f32 %v811, 1.0
    %v813 = vrcp.pop %v812
    %v814 = vmul.f32 %v812, %v813
    %v815 = vsub.f32 1.0, %v814
    %v816 = vmul.f32 %v813, %v815
    %v817 = vadd.f32 %v813, %v816
    %vm818 = vweird.f32 %v812
    %vm819 = vweird.f32 %v813
    %vm820 = vmor %vm818, %vm819
    %v821 = vsel %vm820, %v813, %v817
    %v822 = vand.u32 2147483647, %v812
    %vm823 = vcmp.eq.f32.partialorder %v822, 8.507059e+37
    %v824 = vand.u32 %v812, 2147483648
    %v825 = vor.u32 1.1754944e-38, %v824
    %v826 = vsel %vm823, %v825, %v821
    %v827 = vmul.f32 1.0, %v826
    %v828 = vmul.f32 %v827, 2.0
    %v829 = vsub.f32 %v828, 1.0
    %v830 = vmul.f32 %v827, %v710
    %832 = vrot.lane.b32.xlu0 %v829, 64
    %v833 = vpop.permute.xlu0 %832
    %v835 = vmul.f32 %v827, %v833
    %837 = vrot.lane.b32.xlu0 %v835, 32
    %v838 = vpop.permute.xlu0 %837
    %v840 = vadd.f32 %v830, %v838
    %v841 = vtanh.pop %v840
    %843 = vrot.lane.b32.xlu0 %v841, 64
    %v844 = vpop.permute.xlu0 %843
    %v846 = vmul.f32 %v827, %v844
    %848 = vrot.lane.b32.xlu0 %v779, 32
    %v849 = vpop.permute.xlu0 %848
    %v850 = vsel %vm73, %v849, 0
    %852 = vmatpush.msra.mxu0 0.0
    %853 = vmatpush.msra.mxu0 0.0
    %854 = vmatpush.msra.mxu0 0.0
    %855 = vmatpush.msra.mxu0 0.0
    %856 = vmatpush.msra.mxu0 0.0
    %857 = vmatpush.msra.mxu0 0.0
    %858 = vmatpush.msra.mxu0 0.0
    %859 = vmatpush.msra.mxu0 0.0
    %860 = vmatpush.msra.mxu0 0.0
    %861 = vmatpush.msra.mxu0 0.0
    %862 = vmatpush.msra.mxu0 0.0
    %863 = vmatpush.msra.mxu0 0.0
    %864 = vmatpush.msra.mxu0 %v53
    %865 = vmatpush.msra.mxu0 %v52
    %866 = vmatpush.msra.mxu0 %v51
    %867 = vmatpush.msra.mxu0 %v50
    %868 = vmatmul.f32.gmra.mxu0 %v850
    %v869 = vpop.f32.mrf.mxu0
    %v870 = vadd.f32 %v70, %v869
    %871 = vdwg.mxu0
    %v872 = vxor.u32 %v870, 2147483648
    %v873 = vmul.f32 %v872, 1.442695
    %v874 = vpow.pop %v873
    %v875 = vadd.f32 %v874, 1.0
    %v876 = vrcp.pop %v875
    %v877 = vmul.f32 %v875, %v876
    %v878 = vsub.f32 1.0, %v877
    %v879 = vmul.f32 %v876, %v878
    %v880 = vadd.f32 %v876, %v879
    %vm881 = vweird.f32 %v875
    %vm882 = vweird.f32 %v876
    %vm883 = vmor %vm881, %vm882
    %v884 = vsel %vm883, %v876, %v880
    %v885 = vand.u32 2147483647, %v875
    %vm886 = vcmp.eq.f32.partialorder %v885, 8.507059e+37
    %v887 = vand.u32 %v875, 2147483648
    %v888 = vor.u32 1.1754944e-38, %v887
    %v889 = vsel %vm886, %v888, %v884
    %v890 = vmul.f32 1.0, %v889
    %v891 = vmul.f32 %v890, 2.0
    %v892 = vsub.f32 %v891, 1.0
    %v893 = vmul.f32 %v890, %v773
    %895 = vrot.lane.b32.xlu0 %v892, 64
    %v896 = vpop.permute.xlu0 %895
    %v898 = vmul.f32 %v890, %v896
    %900 = vrot.lane.b32.xlu0 %v898, 32
    %v901 = vpop.permute.xlu0 %900
    %v903 = vadd.f32 %v893, %v901
    %v904 = vtanh.pop %v903
    %906 = vrot.lane.b32.xlu0 %v904, 64
    %v907 = vpop.permute.xlu0 %906
    %v909 = vmul.f32 %v890, %v907
    %911 = vrot.lane.b32.xlu0 %v846, 32
    %v912 = vpop.permute.xlu0 %911
    %914 = vst [vmem:[#allocation1] ss:$4 sm:$0xff] %v60
    %v915 = vld.sshfl [vmem:[#allocation1 + $0x8] sm:$0xff pattern:$0x73625140]
    %v917 = vsel %vm73, %v912, 0
    %919 = vmatpush.msra.mxu0 0.0
    %920 = vmatpush.msra.mxu0 0.0
    %921 = vmatpush.msra.mxu0 0.0
    %922 = vmatpush.msra.mxu0 0.0
    %923 = vmatpush.msra.mxu0 0.0
    %924 = vmatpush.msra.mxu0 0.0
    %925 = vmatpush.msra.mxu0 0.0
    %926 = vmatpush.msra.mxu0 0.0
    %927 = vmatpush.msra.mxu0 0.0
    %928 = vmatpush.msra.mxu0 0.0
    %929 = vmatpush.msra.mxu0 0.0
    %930 = vmatpush.msra.mxu0 0.0
    %931 = vmatpush.msra.mxu0 %v57
    %932 = vmatpush.msra.mxu0 %v56
    %933 = vmatpush.msra.mxu0 %v55
    %934 = vmatpush.msra.mxu0 %v54
    %935 = vmatmul.f32.gmra.mxu0 %v917
    %v936 = vpop.f32.mrf.mxu0
    %v937 = vadd.f32 %v915, %v936
    %938 = vdwg.mxu0
    %v939 = vxor.u32 %v937, 2147483648
    %v940 = vmul.f32 %v939, 1.442695
    %v941 = vpow.pop %v940
    %v942 = vadd.f32 %v941, 1.0
    %v943 = vrcp.pop %v942
    %v944 = vmul.f32 %v942, %v943
    %v945 = vsub.f32 1.0, %v944
    %v946 = vmul.f32 %v943, %v945
    %v947 = vadd.f32 %v943, %v946
    %vm948 = vweird.f32 %v942
    %vm949 = vweird.f32 %v943
    %vm950 = vmor %vm948, %vm949
    %v951 = vsel %vm950, %v943, %v947
    %v952 = vand.u32 2147483647, %v942
    %vm953 = vcmp.eq.f32.partialorder %v952, 8.507059e+37
    %v954 = vand.u32 %v942, 2147483648
    %v955 = vor.u32 1.1754944e-38, %v954
    %v956 = vsel %vm953, %v955, %v951
    %v957 = vmul.f32 1.0, %v956
    %v958 = vmul.f32 %v957, 2.0
    %v959 = vsub.f32 %v958, 1.0
    %v960 = vmul.f32 %v957, %v840
    %962 = vrot.lane.b32.xlu0 %v959, 64
    %v963 = vpop.permute.xlu0 %962
    %v965 = vmul.f32 %v957, %v963
    %967 = vrot.lane.b32.xlu0 %v965, 32
    %v968 = vpop.permute.xlu0 %967
    %v970 = vadd.f32 %v960, %v968
    %v971 = vtanh.pop %v970
    %973 = vrot.lane.b32.xlu0 %v971, 64
    %v974 = vpop.permute.xlu0 %973
    %v976 = vmul.f32 %v957, %v974
    %978 = vrot.lane.b32.xlu0 %v909, 32
    %v979 = vpop.permute.xlu0 %978
    %v980 = vsel %vm73, %v979, 0
    %982 = vmatpush.msra.mxu0 0.0
    %983 = vmatpush.msra.mxu0 0.0
    %984 = vmatpush.msra.mxu0 0.0
    %985 = vmatpush.msra.mxu0 0.0
    %986 = vmatpush.msra.mxu0 0.0
    %987 = vmatpush.msra.mxu0 0.0
    %988 = vmatpush.msra.mxu0 0.0
    %989 = vmatpush.msra.mxu0 0.0
    %990 = vmatpush.msra.mxu0 0.0
    %991 = vmatpush.msra.mxu0 0.0
    %992 = vmatpush.msra.mxu0 0.0
    %993 = vmatpush.msra.mxu0 0.0
    %994 = vmatpush.msra.mxu0 %v53
    %995 = vmatpush.msra.mxu0 %v52
    %996 = vmatpush.msra.mxu0 %v51
    %997 = vmatpush.msra.mxu0 %v50
    %998 = vmatmul.f32.gmra.mxu0 %v980
    %v999 = vpop.f32.mrf.mxu0
    %v1000 = vadd.f32 %v72, %v999
    %1001 = vdwg.mxu0
    %v1002 = vxor.u32 %v1000, 2147483648
    %v1003 = vmul.f32 %v1002, 1.442695
    %v1004 = vpow.pop %v1003
    %v1005 = vadd.f32 %v1004, 1.0
    %v1006 = vrcp.pop %v1005
    %v1007 = vmul.f32 %v1005, %v1006
    %v1008 = vsub.f32 1.0, %v1007
    %v1009 = vmul.f32 %v1006, %v1008
    %v1010 = vadd.f32 %v1006, %v1009
    %vm1011 = vweird.f32 %v1005
    %vm1012 = vweird.f32 %v1006
    %vm1013 = vmor %vm1011, %vm1012
    %v1014 = vsel %vm1013, %v1006, %v1010
    %v1015 = vand.u32 2147483647, %v1005
    %vm1016 = vcmp.eq.f32.partialorder %v1015, 8.507059e+37
    %v1017 = vand.u32 %v1005, 2147483648
    %v1018 = vor.u32 1.1754944e-38, %v1017
    %v1019 = vsel %vm1016, %v1018, %v1014
    %v1020 = vmul.f32 1.0, %v1019
    %v1021 = vmul.f32 %v1020, 2.0
    %v1022 = vsub.f32 %v1021, 1.0
    %v1023 = vmul.f32 %v1020, %v903
    %1025 = vrot.lane.b32.xlu0 %v1022, 64
    %v1026 = vpop.permute.xlu0 %1025
    %v1028 = vmul.f32 %v1020, %v1026
    %1030 = vrot.lane.b32.xlu0 %v1028, 32
    %v1031 = vpop.permute.xlu0 %1030
    %v1033 = vadd.f32 %v1023, %v1031
    %v1034 = vtanh.pop %v1033
    %1036 = vrot.lane.b32.xlu0 %v1034, 64
    %v1037 = vpop.permute.xlu0 %1036
    %v1039 = vmul.f32 %v1020, %v1037
    %1041 = vrot.lane.b32.xlu0 %v976, 32
    %v1042 = vpop.permute.xlu0 %1041
    %1044 = vst [vmem:[#allocation1] ss:$4 sm:$0xff] %v58
    %v1045 = vld.sshfl [vmem:[#allocation1 + $0x8] sm:$0xff pattern:$0x73625140]
    %v1047 = vsel %vm73, %v1042, 0
    %1049 = vmatpush.msra.mxu0 0.0
    %1050 = vmatpush.msra.mxu0 0.0
    %1051 = vmatpush.msra.mxu0 0.0
    %1052 = vmatpush.msra.mxu0 0.0
    %1053 = vmatpush.msra.mxu0 0.0
    %1054 = vmatpush.msra.mxu0 0.0
    %1055 = vmatpush.msra.mxu0 0.0
    %1056 = vmatpush.msra.mxu0 0.0
    %1057 = vmatpush.msra.mxu0 0.0
    %1058 = vmatpush.msra.mxu0 0.0
    %1059 = vmatpush.msra.mxu0 0.0
    %1060 = vmatpush.msra.mxu0 0.0
    %1061 = vmatpush.msra.mxu0 %v57
    %1062 = vmatpush.msra.mxu0 %v56
    %1063 = vmatpush.msra.mxu0 %v55
    %1064 = vmatpush.msra.mxu0 %v54
    %1065 = vmatmul.f32.gmra.mxu0 %v1047
    %v1066 = vpop.f32.mrf.mxu0
    %v1067 = vadd.f32 %v1045, %v1066
    %1068 = vdwg.mxu0
    %v1069 = vxor.u32 %v1067, 2147483648
    %v1070 = vmul.f32 %v1069, 1.442695
    %v1071 = vpow.pop %v1070
    %v1072 = vadd.f32 %v1071, 1.0
    %v1073 = vrcp.pop %v1072
    %v1074 = vmul.f32 %v1072, %v1073
    %v1075 = vsub.f32 1.0, %v1074
    %v1076 = vmul.f32 %v1073, %v1075
    %v1077 = vadd.f32 %v1073, %v1076
    %vm1078 = vweird.f32 %v1072
    %vm1079 = vweird.f32 %v1073
    %vm1080 = vmor %vm1078, %vm1079
    %v1081 = vsel %vm1080, %v1073, %v1077
    %v1082 = vand.u32 2147483647, %v1072
    %vm1083 = vcmp.eq.f32.partialorder %v1082, 8.507059e+37
    %v1084 = vand.u32 %v1072, 2147483648
    %v1085 = vor.u32 1.1754944e-38, %v1084
    %v1086 = vsel %vm1083, %v1085, %v1081
    %v1087 = vmul.f32 1.0, %v1086
    %v1088 = vmul.f32 %v1087, 2.0
    %v1089 = vsub.f32 %v1088, 1.0
    %v1090 = vmul.f32 %v1087, %v970
    %1092 = vrot.lane.b32.xlu0 %v1089, 64
    %v1093 = vpop.permute.xlu0 %1092
    %v1095 = vmul.f32 %v1087, %v1093
    %1097 = vrot.lane.b32.xlu0 %v1095, 32
    %v1098 = vpop.permute.xlu0 %1097
    %v1100 = vadd.f32 %v1090, %v1098
    %v1101 = vtanh.pop %v1100
    %1103 = vrot.lane.b32.xlu0 %v1101, 64
    %v1104 = vpop.permute.xlu0 %1103
    %v1106 = vmul.f32 %v1087, %v1104
    %v1107 = vld [vmem:[%s6] sm:$0xff]
    %v1108 = vld [vmem:[%s6 + $0x8] sm:$0xff]
    %v1109 = vld [vmem:[%s6 + $0x10] sm:$0xff]
    %v1110 = vld [vmem:[%s6 + $0x18] sm:$0xff]
    %v1111 = vld [vmem:[%s7] sm:$0xff]
    %v1112 = vld [vmem:[%s7 + $0x8] sm:$0xff]
    %v1113 = vld [vmem:[%s7 + $0x10] sm:$0xff]
    %v1114 = vld [vmem:[%s7 + $0x18] sm:$0xff]
    %v1115 = vld [vmem:[%s3] sm:$0xff]
    %v1116 = vld [vmem:[%s3 + $0x8] sm:$0xff]
    %v1117 = vld [vmem:[%s3 + $0x10] sm:$0xff]
    %v1118 = vld [vmem:[%s3 + $0x18] sm:$0xff]
    %v1119 = vld [vmem:[%s3 + $0x20] sm:$0xff]
    %v1120 = vld [vmem:[%s3 + $0x28] sm:$0xff]
    %v1121 = vld [vmem:[%s3 + $0x30] sm:$0xff]
    %v1122 = vld [vmem:[%s3 + $0x38] sm:$0xff]
    %v1123 = vld [vmem:[%s4] sm:$0xff]
    %v1124 = vld [vmem:[%s4 + $0x8] sm:$0xff]
    %v1125 = vld [vmem:[%s4 + $0x10] sm:$0xff]
    %v1126 = vld [vmem:[%s4 + $0x18] sm:$0xff]
    %v1127 = vld [vmem:[%s4 + $0x20] sm:$0xff]
    %v1128 = vld [vmem:[%s4 + $0x28] sm:$0xff]
    %v1129 = vld [vmem:[%s4 + $0x30] sm:$0xff]
    %v1130 = vld [vmem:[%s4 + $0x38] sm:$0xff]
    %v1131 = vld [vmem:[%s5] sm:$0x3]
    %1132 = vmatpush.msra.mxu0 0.0
    %1133 = vmatpush.msra.mxu0 0.0
    %1134 = vmatpush.msra.mxu0 0.0
    %1135 = vmatpush.msra.mxu0 0.0
    %1136 = vmatpush.msra.mxu0 0.0
    %1137 = vmatpush.msra.mxu0 0.0
    %1138 = vmatpush.msra.mxu0 0.0
    %1139 = vmatpush.msra.mxu0 0.0
    %1140 = vmatpush.msra.mxu0 0.0
    %1141 = vmatpush.msra.mxu0 0.0
    %1142 = vmatpush.msra.mxu0 0.0
    %1143 = vmatpush.msra.mxu0 0.0
    %1144 = vmatpush.msra.mxu0 %v1121
    %1145 = vmatpush.msra.mxu0 %v1119
    %1146 = vmatpush.msra.mxu0 %v1117
    %1147 = vmatpush.msra.mxu0 %v1115
    %1148 = vmatmul.f32.gmra.mxu0 %v200
    %v1149 = vpop.f32.mrf.mxu0
    %v1150 = vadd.f32 0.0, %v1149
    %1151 = vdwg.mxu0
    %1152 = vmatpush.msra.mxu0 0.0
    %1153 = vmatpush.msra.mxu0 0.0
    %1154 = vmatpush.msra.mxu0 0.0
    %1155 = vmatpush.msra.mxu0 0.0
    %1156 = vmatpush.msra.mxu0 0.0
    %1157 = vmatpush.msra.mxu0 0.0
    %1158 = vmatpush.msra.mxu0 0.0
    %1159 = vmatpush.msra.mxu0 0.0
    %1160 = vmatpush.msra.mxu0 0.0
    %1161 = vmatpush.msra.mxu0 0.0
    %1162 = vmatpush.msra.mxu0 0.0
    %1163 = vmatpush.msra.mxu0 0.0
    %1164 = vmatpush.msra.mxu0 %v1122
    %1165 = vmatpush.msra.mxu0 %v1120
    %1166 = vmatpush.msra.mxu0 %v1118
    %1167 = vmatpush.msra.mxu0 %v1116
    %1168 = vmatmul.f32.gmra.mxu0 %v200
    %v1169 = vpop.f32.mrf.mxu0
    %v1170 = vadd.f32 0.0, %v1169
    %1171 = vdwg.mxu0
    %v1173 = vperm.slane %v1131, 0
    %v1174 = vperm.slane %v1131, 1
    %v1177 = vadd.f32 %v1173, %v1150
    %v1178 = vadd.f32 %v1174, %v1170
    %1180 = vrot.lane.b32.xlu0 %v1106, 32
    %v1181 = vpop.permute.xlu0 %1180
    %v1182 = vsel %vm73, %v1181, 0
    %1184 = vmatpush.msra.mxu0 0.0
    %1185 = vmatpush.msra.mxu0 0.0
    %1186 = vmatpush.msra.mxu0 0.0
    %1187 = vmatpush.msra.mxu0 0.0
    %1188 = vmatpush.msra.mxu0 0.0
    %1189 = vmatpush.msra.mxu0 0.0
    %1190 = vmatpush.msra.mxu0 0.0
    %1191 = vmatpush.msra.mxu0 0.0
    %1192 = vmatpush.msra.mxu0 0.0
    %1193 = vmatpush.msra.mxu0 0.0
    %1194 = vmatpush.msra.mxu0 0.0
    %1195 = vmatpush.msra.mxu0 0.0
    %1196 = vmatpush.msra.mxu0 %v1129
    %1197 = vmatpush.msra.mxu0 %v1127
    %1198 = vmatpush.msra.mxu0 %v1125
    %1199 = vmatpush.msra.mxu0 %v1123
    %1200 = vmatmul.f32.gmra.mxu0 %v1182
    %v1201 = vpop.f32.mrf.mxu0
    %v1202 = vadd.f32 0.0, %v1201
    %1203 = vdwg.mxu0
    %1204 = vmatpush.msra.mxu0 0.0
    %1205 = vmatpush.msra.mxu0 0.0
    %1206 = vmatpush.msra.mxu0 0.0
    %1207 = vmatpush.msra.mxu0 0.0
    %1208 = vmatpush.msra.mxu0 0.0
    %1209 = vmatpush.msra.mxu0 0.0
    %1210 = vmatpush.msra.mxu0 0.0
    %1211 = vmatpush.msra.mxu0 0.0
    %1212 = vmatpush.msra.mxu0 0.0
    %1213 = vmatpush.msra.mxu0 0.0
    %1214 = vmatpush.msra.mxu0 0.0
    %1215 = vmatpush.msra.mxu0 0.0
    %1216 = vmatpush.msra.mxu0 %v1130
    %1217 = vmatpush.msra.mxu0 %v1128
    %1218 = vmatpush.msra.mxu0 %v1126
    %1219 = vmatpush.msra.mxu0 %v1124
    %1220 = vmatmul.f32.gmra.mxu0 %v1182
    %v1221 = vpop.f32.mrf.mxu0
    %v1222 = vadd.f32 0.0, %v1221
    %1223 = vdwg.mxu0
    %v1224 = vadd.f32 %v1177, %v1202
    %v1225 = vadd.f32 %v1178, %v1222
    %1226 = vmatpush.msra.mxu0 0.0
    %1227 = vmatpush.msra.mxu0 0.0
    %1228 = vmatpush.msra.mxu0 0.0
    %1229 = vmatpush.msra.mxu0 0.0
    %1230 = vmatpush.msra.mxu0 0.0
    %1231 = vmatpush.msra.mxu0 0.0
    %1232 = vmatpush.msra.mxu0 0.0
    %1233 = vmatpush.msra.mxu0 0.0
    %1234 = vmatpush.msra.mxu0 0.0
    %1235 = vmatpush.msra.mxu0 0.0
    %1236 = vmatpush.msra.mxu0 0.0
    %1237 = vmatpush.msra.mxu0 0.0
    %1238 = vmatpush.msra.mxu0 %v1121
    %1239 = vmatpush.msra.mxu0 %v1119
    %1240 = vmatpush.msra.mxu0 %v1117
    %1241 = vmatpush.msra.mxu0 %v1115
    %1242 = vmatmul.f32.gmra.mxu0 %v330
    %v1243 = vpop.f32.mrf.mxu0
    %v1244 = vadd.f32 0.0, %v1243
    %1245 = vdwg.mxu0
    %1246 = vmatpush.msra.mxu0 0.0
    %1247 = vmatpush.msra.mxu0 0.0
    %1248 = vmatpush.msra.mxu0 0.0
    %1249 = vmatpush.msra.mxu0 0.0
    %1250 = vmatpush.msra.mxu0 0.0
    %1251 = vmatpush.msra.mxu0 0.0
    %1252 = vmatpush.msra.mxu0 0.0
    %1253 = vmatpush.msra.mxu0 0.0
    %1254 = vmatpush.msra.mxu0 0.0
    %1255 = vmatpush.msra.mxu0 0.0
    %1256 = vmatpush.msra.mxu0 0.0
    %1257 = vmatpush.msra.mxu0 0.0
    %1258 = vmatpush.msra.mxu0 %v1122
    %1259 = vmatpush.msra.mxu0 %v1120
    %1260 = vmatpush.msra.mxu0 %v1118
    %1261 = vmatpush.msra.mxu0 %v1116
    %1262 = vmatmul.f32.gmra.mxu0 %v330
    %v1263 = vpop.f32.mrf.mxu0
    %v1264 = vadd.f32 0.0, %v1263
    %1265 = vdwg.mxu0
    %v1266 = vadd.f32 %v1173, %v1244
    %v1267 = vadd.f32 %v1174, %v1264
    %1268 = vmatpush.msra.mxu0 0.0
    %1269 = vmatpush.msra.mxu0 0.0
    %1270 = vmatpush.msra.mxu0 0.0
    %1271 = vmatpush.msra.mxu0 0.0
    %1272 = vmatpush.msra.mxu0 0.0
    %1273 = vmatpush.msra.mxu0 0.0
    %1274 = vmatpush.msra.mxu0 0.0
    %1275 = vmatpush.msra.mxu0 0.0
    %1276 = vmatpush.msra.mxu0 0.0
    %1277 = vmatpush.msra.mxu0 0.0
    %1278 = vmatpush.msra.mxu0 0.0
    %1279 = vmatpush.msra.mxu0 0.0
    %1280 = vmatpush.msra.mxu0 %v1129
    %1281 = vmatpush.msra.mxu0 %v1127
    %1282 = vmatpush.msra.mxu0 %v1125
    %1283 = vmatpush.msra.mxu0 %v1123
    %1284 = vmatmul.f32.gmra.mxu0 %v1047
    %v1285 = vpop.f32.mrf.mxu0
    %v1286 = vadd.f32 0.0, %v1285
    %1287 = vdwg.mxu0
    %1288 = vmatpush.msra.mxu0 0.0
    %1289 = vmatpush.msra.mxu0 0.0
    %1290 = vmatpush.msra.mxu0 0.0
    %1291 = vmatpush.msra.mxu0 0.0
    %1292 = vmatpush.msra.mxu0 0.0
    %1293 = vmatpush.msra.mxu0 0.0
    %1294 = vmatpush.msra.mxu0 0.0
    %1295 = vmatpush.msra.mxu0 0.0
    %1296 = vmatpush.msra.mxu0 0.0
    %1297 = vmatpush.msra.mxu0 0.0
    %1298 = vmatpush.msra.mxu0 0.0
    %1299 = vmatpush.msra.mxu0 0.0
    %1300 = vmatpush.msra.mxu0 %v1130
    %1301 = vmatpush.msra.mxu0 %v1128
    %1302 = vmatpush.msra.mxu0 %v1126
    %1303 = vmatpush.msra.mxu0 %v1124
    %1304 = vmatmul.f32.gmra.mxu0 %v1047
    %v1305 = vpop.f32.mrf.mxu0
    %v1306 = vadd.f32 0.0, %v1305
    %1307 = vdwg.mxu0
    %v1308 = vadd.f32 %v1266, %v1286
    %v1309 = vadd.f32 %v1267, %v1306
    %1310 = vmatpush.msra.mxu0 0.0
    %1311 = vmatpush.msra.mxu0 0.0
    %1312 = vmatpush.msra.mxu0 0.0
    %1313 = vmatpush.msra.mxu0 0.0
    %1314 = vmatpush.msra.mxu0 0.0
    %1315 = vmatpush.msra.mxu0 0.0
    %1316 = vmatpush.msra.mxu0 0.0
    %1317 = vmatpush.msra.mxu0 0.0
    %1318 = vmatpush.msra.mxu0 0.0
    %1319 = vmatpush.msra.mxu0 0.0
    %1320 = vmatpush.msra.mxu0 0.0
    %1321 = vmatpush.msra.mxu0 0.0
    %1322 = vmatpush.msra.mxu0 %v1121
    %1323 = vmatpush.msra.mxu0 %v1119
    %1324 = vmatpush.msra.mxu0 %v1117
    %1325 = vmatpush.msra.mxu0 %v1115
    %1326 = vmatmul.f32.gmra.mxu0 %v460
    %v1327 = vpop.f32.mrf.mxu0
    %v1328 = vadd.f32 0.0, %v1327
    %1329 = vdwg.mxu0
    %1330 = vmatpush.msra.mxu0 0.0
    %1331 = vmatpush.msra.mxu0 0.0
    %1332 = vmatpush.msra.mxu0 0.0
    %1333 = vmatpush.msra.mxu0 0.0
    %1334 = vmatpush.msra.mxu0 0.0
    %1335 = vmatpush.msra.mxu0 0.0
    %1336 = vmatpush.msra.mxu0 0.0
    %1337 = vmatpush.msra.mxu0 0.0
    %1338 = vmatpush.msra.mxu0 0.0
    %1339 = vmatpush.msra.mxu0 0.0
    %1340 = vmatpush.msra.mxu0 0.0
    %1341 = vmatpush.msra.mxu0 0.0
    %1342 = vmatpush.msra.mxu0 %v1122
    %1343 = vmatpush.msra.mxu0 %v1120
    %1344 = vmatpush.msra.mxu0 %v1118
    %1345 = vmatpush.msra.mxu0 %v1116
    %1346 = vmatmul.f32.gmra.mxu0 %v460
    %v1347 = vpop.f32.mrf.mxu0
    %v1348 = vadd.f32 0.0, %v1347
    %1349 = vdwg.mxu0
    %v1350 = vadd.f32 %v1173, %v1328
    %v1351 = vadd.f32 %v1174, %v1348
    %1352 = vmatpush.msra.mxu0 0.0
    %1353 = vmatpush.msra.mxu0 0.0
    %1354 = vmatpush.msra.mxu0 0.0
    %1355 = vmatpush.msra.mxu0 0.0
    %1356 = vmatpush.msra.mxu0 0.0
    %1357 = vmatpush.msra.mxu0 0.0
    %1358 = vmatpush.msra.mxu0 0.0
    %1359 = vmatpush.msra.mxu0 0.0
    %1360 = vmatpush.msra.mxu0 0.0
    %1361 = vmatpush.msra.mxu0 0.0
    %1362 = vmatpush.msra.mxu0 0.0
    %1363 = vmatpush.msra.mxu0 0.0
    %1364 = vmatpush.msra.mxu0 %v1129
    %1365 = vmatpush.msra.mxu0 %v1127
    %1366 = vmatpush.msra.mxu0 %v1125
    %1367 = vmatpush.msra.mxu0 %v1123
    %1368 = vmatmul.f32.gmra.mxu0 %v917
    %v1369 = vpop.f32.mrf.mxu0
    %v1370 = vadd.f32 0.0, %v1369
    %1371 = vdwg.mxu0
    %1372 = vmatpush.msra.mxu0 0.0
    %1373 = vmatpush.msra.mxu0 0.0
    %1374 = vmatpush.msra.mxu0 0.0
    %1375 = vmatpush.msra.mxu0 0.0
    %1376 = vmatpush.msra.mxu0 0.0
    %1377 = vmatpush.msra.mxu0 0.0
    %1378 = vmatpush.msra.mxu0 0.0
    %1379 = vmatpush.msra.mxu0 0.0
    %1380 = vmatpush.msra.mxu0 0.0
    %1381 = vmatpush.msra.mxu0 0.0
    %1382 = vmatpush.msra.mxu0 0.0
    %1383 = vmatpush.msra.mxu0 0.0
    %1384 = vmatpush.msra.mxu0 %v1130
    %1385 = vmatpush.msra.mxu0 %v1128
    %1386 = vmatpush.msra.mxu0 %v1126
    %1387 = vmatpush.msra.mxu0 %v1124
    %1388 = vmatmul.f32.gmra.mxu0 %v917
    %v1389 = vpop.f32.mrf.mxu0
    %v1390 = vadd.f32 0.0, %v1389
    %1391 = vdwg.mxu0
    %v1392 = vadd.f32 %v1350, %v1370
    %v1393 = vadd.f32 %v1351, %v1390
    %1394 = vmatpush.msra.mxu0 0.0
    %1395 = vmatpush.msra.mxu0 0.0
    %1396 = vmatpush.msra.mxu0 0.0
    %1397 = vmatpush.msra.mxu0 0.0
    %1398 = vmatpush.msra.mxu0 0.0
    %1399 = vmatpush.msra.mxu0 0.0
    %1400 = vmatpush.msra.mxu0 0.0
    %1401 = vmatpush.msra.mxu0 0.0
    %1402 = vmatpush.msra.mxu0 0.0
    %1403 = vmatpush.msra.mxu0 0.0
    %1404 = vmatpush.msra.mxu0 0.0
    %1405 = vmatpush.msra.mxu0 0.0
    %1406 = vmatpush.msra.mxu0 %v1121
    %1407 = vmatpush.msra.mxu0 %v1119
    %1408 = vmatpush.msra.mxu0 %v1117
    %1409 = vmatpush.msra.mxu0 %v1115
    %1410 = vmatmul.f32.gmra.mxu0 %v590
    %v1411 = vpop.f32.mrf.mxu0
    %v1412 = vadd.f32 0.0, %v1411
    %1413 = vdwg.mxu0
    %1414 = vmatpush.msra.mxu0 0.0
    %1415 = vmatpush.msra.mxu0 0.0
    %1416 = vmatpush.msra.mxu0 0.0
    %1417 = vmatpush.msra.mxu0 0.0
    %1418 = vmatpush.msra.mxu0 0.0
    %1419 = vmatpush.msra.mxu0 0.0
    %1420 = vmatpush.msra.mxu0 0.0
    %1421 = vmatpush.msra.mxu0 0.0
    %1422 = vmatpush.msra.mxu0 0.0
    %1423 = vmatpush.msra.mxu0 0.0
    %1424 = vmatpush.msra.mxu0 0.0
    %1425 = vmatpush.msra.mxu0 0.0
    %1426 = vmatpush.msra.mxu0 %v1122
    %1427 = vmatpush.msra.mxu0 %v1120
    %1428 = vmatpush.msra.mxu0 %v1118
    %1429 = vmatpush.msra.mxu0 %v1116
    %1430 = vmatmul.f32.gmra.mxu0 %v590
    %v1431 = vpop.f32.mrf.mxu0
    %v1432 = vadd.f32 0.0, %v1431
    %1433 = vdwg.mxu0
    %v1434 = vadd.f32 %v1173, %v1412
    %v1435 = vadd.f32 %v1174, %v1432
    %1436 = vmatpush.msra.mxu0 0.0
    %1437 = vmatpush.msra.mxu0 0.0
    %1438 = vmatpush.msra.mxu0 0.0
    %1439 = vmatpush.msra.mxu0 0.0
    %1440 = vmatpush.msra.mxu0 0.0
    %1441 = vmatpush.msra.mxu0 0.0
    %1442 = vmatpush.msra.mxu0 0.0
    %1443 = vmatpush.msra.mxu0 0.0
    %1444 = vmatpush.msra.mxu0 0.0
    %1445 = vmatpush.msra.mxu0 0.0
    %1446 = vmatpush.msra.mxu0 0.0
    %1447 = vmatpush.msra.mxu0 0.0
    %1448 = vmatpush.msra.mxu0 %v1129
    %1449 = vmatpush.msra.mxu0 %v1127
    %1450 = vmatpush.msra.mxu0 %v1125
    %1451 = vmatpush.msra.mxu0 %v1123
    %1452 = vmatmul.f32.gmra.mxu0 %v787
    %v1453 = vpop.f32.mrf.mxu0
    %v1454 = vadd.f32 0.0, %v1453
    %1455 = vdwg.mxu0
    %1456 = vmatpush.msra.mxu0 0.0
    %1457 = vmatpush.msra.mxu0 0.0
    %1458 = vmatpush.msra.mxu0 0.0
    %1459 = vmatpush.msra.mxu0 0.0
    %1460 = vmatpush.msra.mxu0 0.0
    %1461 = vmatpush.msra.mxu0 0.0
    %1462 = vmatpush.msra.mxu0 0.0
    %1463 = vmatpush.msra.mxu0 0.0
    %1464 = vmatpush.msra.mxu0 0.0
    %1465 = vmatpush.msra.mxu0 0.0
    %1466 = vmatpush.msra.mxu0 0.0
    %1467 = vmatpush.msra.mxu0 0.0
    %1468 = vmatpush.msra.mxu0 %v1130
    %1469 = vmatpush.msra.mxu0 %v1128
    %1470 = vmatpush.msra.mxu0 %v1126
    %1471 = vmatpush.msra.mxu0 %v1124
    %1472 = vmatmul.f32.gmra.mxu0 %v787
    %v1473 = vpop.f32.mrf.mxu0
    %v1474 = vadd.f32 0.0, %v1473
    %1475 = vdwg.mxu0
    %v1476 = vadd.f32 %v1434, %v1454
    %v1477 = vadd.f32 %v1435, %v1474
    %1478 = vmatpush.msra.mxu0 0.0
    %1479 = vmatpush.msra.mxu0 0.0
    %1480 = vmatpush.msra.mxu0 0.0
    %1481 = vmatpush.msra.mxu0 0.0
    %1482 = vmatpush.msra.mxu0 0.0
    %1483 = vmatpush.msra.mxu0 0.0
    %1484 = vmatpush.msra.mxu0 0.0
    %1485 = vmatpush.msra.mxu0 0.0
    %1486 = vmatpush.msra.mxu0 0.0
    %1487 = vmatpush.msra.mxu0 0.0
    %1488 = vmatpush.msra.mxu0 0.0
    %1489 = vmatpush.msra.mxu0 0.0
    %1490 = vmatpush.msra.mxu0 %v1121
    %1491 = vmatpush.msra.mxu0 %v1119
    %1492 = vmatpush.msra.mxu0 %v1117
    %1493 = vmatpush.msra.mxu0 %v1115
    %1494 = vmatmul.f32.gmra.mxu0 %v720
    %v1495 = vpop.f32.mrf.mxu0
    %v1496 = vadd.f32 0.0, %v1495
    %1497 = vdwg.mxu0
    %1498 = vmatpush.msra.mxu0 0.0
    %1499 = vmatpush.msra.mxu0 0.0
    %1500 = vmatpush.msra.mxu0 0.0
    %1501 = vmatpush.msra.mxu0 0.0
    %1502 = vmatpush.msra.mxu0 0.0
    %1503 = vmatpush.msra.mxu0 0.0
    %1504 = vmatpush.msra.mxu0 0.0
    %1505 = vmatpush.msra.mxu0 0.0
    %1506 = vmatpush.msra.mxu0 0.0
    %1507 = vmatpush.msra.mxu0 0.0
    %1508 = vmatpush.msra.mxu0 0.0
    %1509 = vmatpush.msra.mxu0 0.0
    %1510 = vmatpush.msra.mxu0 %v1122
    %1511 = vmatpush.msra.mxu0 %v1120
    %1512 = vmatpush.msra.mxu0 %v1118
    %1513 = vmatpush.msra.mxu0 %v1116
    %1514 = vmatmul.f32.gmra.mxu0 %v720
    %v1515 = vpop.f32.mrf.mxu0
    %v1516 = vadd.f32 0.0, %v1515
    %1517 = vdwg.mxu0
    %v1518 = vadd.f32 %v1173, %v1496
    %v1519 = vadd.f32 %v1174, %v1516
    %1520 = vmatpush.msra.mxu0 0.0
    %1521 = vmatpush.msra.mxu0 0.0
    %1522 = vmatpush.msra.mxu0 0.0
    %1523 = vmatpush.msra.mxu0 0.0
    %1524 = vmatpush.msra.mxu0 0.0
    %1525 = vmatpush.msra.mxu0 0.0
    %1526 = vmatpush.msra.mxu0 0.0
    %1527 = vmatpush.msra.mxu0 0.0
    %1528 = vmatpush.msra.mxu0 0.0
    %1529 = vmatpush.msra.mxu0 0.0
    %1530 = vmatpush.msra.mxu0 0.0
    %1531 = vmatpush.msra.mxu0 0.0
    %1532 = vmatpush.msra.mxu0 %v1129
    %1533 = vmatpush.msra.mxu0 %v1127
    %1534 = vmatpush.msra.mxu0 %v1125
    %1535 = vmatpush.msra.mxu0 %v1123
    %1536 = vmatmul.f32.gmra.mxu0 %v657
    %v1537 = vpop.f32.mrf.mxu0
    %v1538 = vadd.f32 0.0, %v1537
    %1539 = vdwg.mxu0
    %1540 = vmatpush.msra.mxu0 0.0
    %1541 = vmatpush.msra.mxu0 0.0
    %1542 = vmatpush.msra.mxu0 0.0
    %1543 = vmatpush.msra.mxu0 0.0
    %1544 = vmatpush.msra.mxu0 0.0
    %1545 = vmatpush.msra.mxu0 0.0
    %1546 = vmatpush.msra.mxu0 0.0
    %1547 = vmatpush.msra.mxu0 0.0
    %1548 = vmatpush.msra.mxu0 0.0
    %1549 = vmatpush.msra.mxu0 0.0
    %1550 = vmatpush.msra.mxu0 0.0
    %1551 = vmatpush.msra.mxu0 0.0
    %1552 = vmatpush.msra.mxu0 %v1130
    %1553 = vmatpush.msra.mxu0 %v1128
    %1554 = vmatpush.msra.mxu0 %v1126
    %1555 = vmatpush.msra.mxu0 %v1124
    %1556 = vmatmul.f32.gmra.mxu0 %v657
    %v1557 = vpop.f32.mrf.mxu0
    %v1558 = vadd.f32 0.0, %v1557
    %1559 = vdwg.mxu0
    %v1560 = vadd.f32 %v1518, %v1538
    %v1561 = vadd.f32 %v1519, %v1558
    %1562 = vmatpush.msra.mxu0 0.0
    %1563 = vmatpush.msra.mxu0 0.0
    %1564 = vmatpush.msra.mxu0 0.0
    %1565 = vmatpush.msra.mxu0 0.0
    %1566 = vmatpush.msra.mxu0 0.0
    %1567 = vmatpush.msra.mxu0 0.0
    %1568 = vmatpush.msra.mxu0 0.0
    %1569 = vmatpush.msra.mxu0 0.0
    %1570 = vmatpush.msra.mxu0 0.0
    %1571 = vmatpush.msra.mxu0 0.0
    %1572 = vmatpush.msra.mxu0 0.0
    %1573 = vmatpush.msra.mxu0 0.0
    %1574 = vmatpush.msra.mxu0 %v1121
    %1575 = vmatpush.msra.mxu0 %v1119
    %1576 = vmatpush.msra.mxu0 %v1117
    %1577 = vmatpush.msra.mxu0 %v1115
    %1578 = vmatmul.f32.gmra.mxu0 %v850
    %v1579 = vpop.f32.mrf.mxu0
    %v1580 = vadd.f32 0.0, %v1579
    %1581 = vdwg.mxu0
    %1582 = vmatpush.msra.mxu0 0.0
    %1583 = vmatpush.msra.mxu0 0.0
    %1584 = vmatpush.msra.mxu0 0.0
    %1585 = vmatpush.msra.mxu0 0.0
    %1586 = vmatpush.msra.mxu0 0.0
    %1587 = vmatpush.msra.mxu0 0.0
    %1588 = vmatpush.msra.mxu0 0.0
    %1589 = vmatpush.msra.mxu0 0.0
    %1590 = vmatpush.msra.mxu0 0.0
    %1591 = vmatpush.msra.mxu0 0.0
    %1592 = vmatpush.msra.mxu0 0.0
    %1593 = vmatpush.msra.mxu0 0.0
    %1594 = vmatpush.msra.mxu0 %v1122
    %1595 = vmatpush.msra.mxu0 %v1120
    %1596 = vmatpush.msra.mxu0 %v1118
    %1597 = vmatpush.msra.mxu0 %v1116
    %1598 = vmatmul.f32.gmra.mxu0 %v850
    %v1599 = vpop.f32.mrf.mxu0
    %v1600 = vadd.f32 0.0, %v1599
    %1601 = vdwg.mxu0
    %v1602 = vadd.f32 %v1173, %v1580
    %v1603 = vadd.f32 %v1174, %v1600
    %1604 = vmatpush.msra.mxu0 0.0
    %1605 = vmatpush.msra.mxu0 0.0
    %1606 = vmatpush.msra.mxu0 0.0
    %1607 = vmatpush.msra.mxu0 0.0
    %1608 = vmatpush.msra.mxu0 0.0
    %1609 = vmatpush.msra.mxu0 0.0
    %1610 = vmatpush.msra.mxu0 0.0
    %1611 = vmatpush.msra.mxu0 0.0
    %1612 = vmatpush.msra.mxu0 0.0
    %1613 = vmatpush.msra.mxu0 0.0
    %1614 = vmatpush.msra.mxu0 0.0
    %1615 = vmatpush.msra.mxu0 0.0
    %1616 = vmatpush.msra.mxu0 %v1129
    %1617 = vmatpush.msra.mxu0 %v1127
    %1618 = vmatpush.msra.mxu0 %v1125
    %1619 = vmatpush.msra.mxu0 %v1123
    %1620 = vmatmul.f32.gmra.mxu0 %v527
    %v1621 = vpop.f32.mrf.mxu0
    %v1622 = vadd.f32 0.0, %v1621
    %1623 = vdwg.mxu0
    %1624 = vmatpush.msra.mxu0 0.0
    %1625 = vmatpush.msra.mxu0 0.0
    %1626 = vmatpush.msra.mxu0 0.0
    %1627 = vmatpush.msra.mxu0 0.0
    %1628 = vmatpush.msra.mxu0 0.0
    %1629 = vmatpush.msra.mxu0 0.0
    %1630 = vmatpush.msra.mxu0 0.0
    %1631 = vmatpush.msra.mxu0 0.0
    %1632 = vmatpush.msra.mxu0 0.0
    %1633 = vmatpush.msra.mxu0 0.0
    %1634 = vmatpush.msra.mxu0 0.0
    %1635 = vmatpush.msra.mxu0 0.0
    %1636 = vmatpush.msra.mxu0 %v1130
    %1637 = vmatpush.msra.mxu0 %v1128
    %1638 = vmatpush.msra.mxu0 %v1126
    %1639 = vmatpush.msra.mxu0 %v1124
    %1640 = vmatmul.f32.gmra.mxu0 %v527
    %v1641 = vpop.f32.mrf.mxu0
    %v1642 = vadd.f32 0.0, %v1641
    %1643 = vdwg.mxu0
    %v1644 = vadd.f32 %v1602, %v1622
    %v1645 = vadd.f32 %v1603, %v1642
    %1646 = vmatpush.msra.mxu0 0.0
    %1647 = vmatpush.msra.mxu0 0.0
    %1648 = vmatpush.msra.mxu0 0.0
    %1649 = vmatpush.msra.mxu0 0.0
    %1650 = vmatpush.msra.mxu0 0.0
    %1651 = vmatpush.msra.mxu0 0.0
    %1652 = vmatpush.msra.mxu0 0.0
    %1653 = vmatpush.msra.mxu0 0.0
    %1654 = vmatpush.msra.mxu0 0.0
    %1655 = vmatpush.msra.mxu0 0.0
    %1656 = vmatpush.msra.mxu0 0.0
    %1657 = vmatpush.msra.mxu0 0.0
    %1658 = vmatpush.msra.mxu0 %v1121
    %1659 = vmatpush.msra.mxu0 %v1119
    %1660 = vmatpush.msra.mxu0 %v1117
    %1661 = vmatpush.msra.mxu0 %v1115
    %1662 = vmatmul.f32.gmra.mxu0 %v980
    %v1663 = vpop.f32.mrf.mxu0
    %v1664 = vadd.f32 0.0, %v1663
    %1665 = vdwg.mxu0
    %1666 = vmatpush.msra.mxu0 0.0
    %1667 = vmatpush.msra.mxu0 0.0
    %1668 = vmatpush.msra.mxu0 0.0
    %1669 = vmatpush.msra.mxu0 0.0
    %1670 = vmatpush.msra.mxu0 0.0
    %1671 = vmatpush.msra.mxu0 0.0
    %1672 = vmatpush.msra.mxu0 0.0
    %1673 = vmatpush.msra.mxu0 0.0
    %1674 = vmatpush.msra.mxu0 0.0
    %1675 = vmatpush.msra.mxu0 0.0
    %1676 = vmatpush.msra.mxu0 0.0
    %1677 = vmatpush.msra.mxu0 0.0
    %1678 = vmatpush.msra.mxu0 %v1122
    %1679 = vmatpush.msra.mxu0 %v1120
    %1680 = vmatpush.msra.mxu0 %v1118
    %1681 = vmatpush.msra.mxu0 %v1116
    %1682 = vmatmul.f32.gmra.mxu0 %v980
    %v1683 = vpop.f32.mrf.mxu0
    %v1684 = vadd.f32 0.0, %v1683
    %1685 = vdwg.mxu0
    %v1686 = vadd.f32 %v1173, %v1664
    %v1687 = vadd.f32 %v1174, %v1684
    %1688 = vmatpush.msra.mxu0 0.0
    %1689 = vmatpush.msra.mxu0 0.0
    %1690 = vmatpush.msra.mxu0 0.0
    %1691 = vmatpush.msra.mxu0 0.0
    %1692 = vmatpush.msra.mxu0 0.0
    %1693 = vmatpush.msra.mxu0 0.0
    %1694 = vmatpush.msra.mxu0 0.0
    %1695 = vmatpush.msra.mxu0 0.0
    %1696 = vmatpush.msra.mxu0 0.0
    %1697 = vmatpush.msra.mxu0 0.0
    %1698 = vmatpush.msra.mxu0 0.0
    %1699 = vmatpush.msra.mxu0 0.0
    %1700 = vmatpush.msra.mxu0 %v1129
    %1701 = vmatpush.msra.mxu0 %v1127
    %1702 = vmatpush.msra.mxu0 %v1125
    %1703 = vmatpush.msra.mxu0 %v1123
    %1704 = vmatmul.f32.gmra.mxu0 %v397
    %v1705 = vpop.f32.mrf.mxu0
    %v1706 = vadd.f32 0.0, %v1705
    %1707 = vdwg.mxu0
    %1708 = vmatpush.msra.mxu0 0.0
    %1709 = vmatpush.msra.mxu0 0.0
    %1710 = vmatpush.msra.mxu0 0.0
    %1711 = vmatpush.msra.mxu0 0.0
    %1712 = vmatpush.msra.mxu0 0.0
    %1713 = vmatpush.msra.mxu0 0.0
    %1714 = vmatpush.msra.mxu0 0.0
    %1715 = vmatpush.msra.mxu0 0.0
    %1716 = vmatpush.msra.mxu0 0.0
    %1717 = vmatpush.msra.mxu0 0.0
    %1718 = vmatpush.msra.mxu0 0.0
    %1719 = vmatpush.msra.mxu0 0.0
    %1720 = vmatpush.msra.mxu0 %v1130
    %1721 = vmatpush.msra.mxu0 %v1128
    %1722 = vmatpush.msra.mxu0 %v1126
    %1723 = vmatpush.msra.mxu0 %v1124
    %1724 = vmatmul.f32.gmra.mxu0 %v397
    %v1725 = vpop.f32.mrf.mxu0
    %v1726 = vadd.f32 0.0, %v1725
    %1727 = vdwg.mxu0
    %v1728 = vadd.f32 %v1686, %v1706
    %v1729 = vadd.f32 %v1687, %v1726
    %1731 = vrot.lane.b32.xlu0 %v1039, 32
    %v1732 = vpop.permute.xlu0 %1731
    %v1733 = vsel %vm73, %v1732, 0
    %1735 = vmatpush.msra.mxu0 0.0
    %1736 = vmatpush.msra.mxu0 0.0
    %1737 = vmatpush.msra.mxu0 0.0
    %1738 = vmatpush.msra.mxu0 0.0
    %1739 = vmatpush.msra.mxu0 0.0
    %1740 = vmatpush.msra.mxu0 0.0
    %1741 = vmatpush.msra.mxu0 0.0
    %1742 = vmatpush.msra.mxu0 0.0
    %1743 = vmatpush.msra.mxu0 0.0
    %1744 = vmatpush.msra.mxu0 0.0
    %1745 = vmatpush.msra.mxu0 0.0
    %1746 = vmatpush.msra.mxu0 0.0
    %1747 = vmatpush.msra.mxu0 %v1121
    %1748 = vmatpush.msra.mxu0 %v1119
    %1749 = vmatpush.msra.mxu0 %v1117
    %1750 = vmatpush.msra.mxu0 %v1115
    %1751 = vmatmul.f32.gmra.mxu0 %v1733
    %v1752 = vpop.f32.mrf.mxu0
    %v1753 = vadd.f32 0.0, %v1752
    %1754 = vdwg.mxu0
    %1755 = vmatpush.msra.mxu0 0.0
    %1756 = vmatpush.msra.mxu0 0.0
    %1757 = vmatpush.msra.mxu0 0.0
    %1758 = vmatpush.msra.mxu0 0.0
    %1759 = vmatpush.msra.mxu0 0.0
    %1760 = vmatpush.msra.mxu0 0.0
    %1761 = vmatpush.msra.mxu0 0.0
    %1762 = vmatpush.msra.mxu0 0.0
    %1763 = vmatpush.msra.mxu0 0.0
    %1764 = vmatpush.msra.mxu0 0.0
    %1765 = vmatpush.msra.mxu0 0.0
    %1766 = vmatpush.msra.mxu0 0.0
    %1767 = vmatpush.msra.mxu0 %v1122
    %1768 = vmatpush.msra.mxu0 %v1120
    %1769 = vmatpush.msra.mxu0 %v1118
    %1770 = vmatpush.msra.mxu0 %v1116
    %1771 = vmatmul.f32.gmra.mxu0 %v1733
    %v1772 = vpop.f32.mrf.mxu0
    %v1773 = vadd.f32 0.0, %v1772
    %1774 = vdwg.mxu0
    %v1775 = vadd.f32 %v1173, %v1753
    %v1776 = vadd.f32 %v1174, %v1773
    %1777 = vmatpush.msra.mxu0 0.0
    %1778 = vmatpush.msra.mxu0 0.0
    %1779 = vmatpush.msra.mxu0 0.0
    %1780 = vmatpush.msra.mxu0 0.0
    %1781 = vmatpush.msra.mxu0 0.0
    %1782 = vmatpush.msra.mxu0 0.0
    %1783 = vmatpush.msra.mxu0 0.0
    %1784 = vmatpush.msra.mxu0 0.0
    %1785 = vmatpush.msra.mxu0 0.0
    %1786 = vmatpush.msra.mxu0 0.0
    %1787 = vmatpush.msra.mxu0 0.0
    %1788 = vmatpush.msra.mxu0 0.0
    %1789 = vmatpush.msra.mxu0 %v1129
    %1790 = vmatpush.msra.mxu0 %v1127
    %1791 = vmatpush.msra.mxu0 %v1125
    %1792 = vmatpush.msra.mxu0 %v1123
    %1793 = vmatmul.f32.gmra.mxu0 %v267
    %v1794 = vpop.f32.mrf.mxu0
    %v1795 = vadd.f32 0.0, %v1794
    %1796 = vdwg.mxu0
    %1797 = vmatpush.msra.mxu0 0.0
    %1798 = vmatpush.msra.mxu0 0.0
    %1799 = vmatpush.msra.mxu0 0.0
    %1800 = vmatpush.msra.mxu0 0.0
    %1801 = vmatpush.msra.mxu0 0.0
    %1802 = vmatpush.msra.mxu0 0.0
    %1803 = vmatpush.msra.mxu0 0.0
    %1804 = vmatpush.msra.mxu0 0.0
    %1805 = vmatpush.msra.mxu0 0.0
    %1806 = vmatpush.msra.mxu0 0.0
    %1807 = vmatpush.msra.mxu0 0.0
    %1808 = vmatpush.msra.mxu0 0.0
    %1809 = vmatpush.msra.mxu0 %v1130
    %1810 = vmatpush.msra.mxu0 %v1128
    %1811 = vmatpush.msra.mxu0 %v1126
    %1812 = vmatpush.msra.mxu0 %v1124
    %1813 = vmatmul.f32.gmra.mxu0 %v267
    %v1814 = vpop.f32.mrf.mxu0
    %v1815 = vadd.f32 0.0, %v1814
    %1816 = vdwg.mxu0
    %v1817 = vadd.f32 %v1775, %v1795
    %v1818 = vadd.f32 %v1776, %v1815
    %1819 = vmatpush.msra.mxu0 0.0
    %1820 = vmatpush.msra.mxu0 0.0
    %1821 = vmatpush.msra.mxu0 0.0
    %1822 = vmatpush.msra.mxu0 0.0
    %1823 = vmatpush.msra.mxu0 0.0
    %1824 = vmatpush.msra.mxu0 0.0
    %1825 = vmatpush.msra.mxu0 0.0
    %1826 = vmatpush.msra.mxu0 0.0
    %1827 = vmatpush.msra.mxu0 0.0
    %1828 = vmatpush.msra.mxu0 0.0
    %1829 = vmatpush.msra.mxu0 0.0
    %1830 = vmatpush.msra.mxu0 0.0
    %1831 = vmatpush.msra.mxu0 %v1110
    %1832 = vmatpush.msra.mxu0 %v1109
    %1833 = vmatpush.msra.mxu0 %v1108
    %1834 = vmatpush.msra.mxu0 %v1107
    %1835 = vmatmul.f32.gmra.mxu0 %v75
    %v1836 = vpop.f32.mrf.mxu0
    %v1837 = vadd.f32 %v1224, %v1836
    %1838 = vdwg.mxu0
    %v1839 = vxor.u32 %v1837, 2147483648
    %v1840 = vmul.f32 %v1839, 1.442695
    %v1841 = vpow.pop %v1840
    %v1842 = vadd.f32 %v1841, 1.0
    %v1843 = vrcp.pop %v1842
    %v1844 = vmul.f32 %v1842, %v1843
    %v1845 = vsub.f32 1.0, %v1844
    %v1846 = vmul.f32 %v1843, %v1845
    %v1847 = vadd.f32 %v1843, %v1846
    %vm1848 = vweird.f32 %v1842
    %vm1849 = vweird.f32 %v1843
    %vm1850 = vmor %vm1848, %vm1849
    %v1851 = vsel %vm1850, %v1843, %v1847
    %v1852 = vand.u32 2147483647, %v1842
    %vm1853 = vcmp.eq.f32.partialorder %v1852, 8.507059e+37
    %v1854 = vand.u32 %v1842, 2147483648
    %v1855 = vor.u32 1.1754944e-38, %v1854
    %v1856 = vsel %vm1853, %v1855, %v1851
    %v1857 = vmul.f32 1.0, %v1856
    %v1858 = vmul.f32 %v1857, 2.0
    %v1859 = vsub.f32 %v1858, 1.0
    %v1860 = vmul.f32 %v1857, 0.0
    %1862 = vrot.lane.b32.xlu0 %v1859, 64
    %v1863 = vpop.permute.xlu0 %1862
    %v1865 = vmul.f32 %v1857, %v1863
    %1867 = vrot.lane.b32.xlu0 %v1865, 32
    %v1868 = vpop.permute.xlu0 %1867
    %v1870 = vadd.f32 %v1860, %v1868
    %v1871 = vtanh.pop %v1870
    %1873 = vrot.lane.b32.xlu0 %v1871, 64
    %v1874 = vpop.permute.xlu0 %1873
    %v1876 = vmul.f32 %v1857, %v1874
    %1877 = vmatpush.msra.mxu0 0.0
    %1878 = vmatpush.msra.mxu0 0.0
    %1879 = vmatpush.msra.mxu0 0.0
    %1880 = vmatpush.msra.mxu0 0.0
    %1881 = vmatpush.msra.mxu0 0.0
    %1882 = vmatpush.msra.mxu0 0.0
    %1883 = vmatpush.msra.mxu0 0.0
    %1884 = vmatpush.msra.mxu0 0.0
    %1885 = vmatpush.msra.mxu0 0.0
    %1886 = vmatpush.msra.mxu0 0.0
    %1887 = vmatpush.msra.mxu0 0.0
    %1888 = vmatpush.msra.mxu0 0.0
    %1889 = vmatpush.msra.mxu0 %v1114
    %1890 = vmatpush.msra.mxu0 %v1113
    %1891 = vmatpush.msra.mxu0 %v1112
    %1892 = vmatpush.msra.mxu0 %v1111
    %1893 = vmatmul.f32.gmra.mxu0 %v75
    %v1894 = vpop.f32.mrf.mxu0
    %v1895 = vadd.f32 %v1818, %v1894
    %1896 = vdwg.mxu0
    %v1897 = vxor.u32 %v1895, 2147483648
    %v1898 = vmul.f32 %v1897, 1.442695
    %v1899 = vpow.pop %v1898
    %v1900 = vadd.f32 %v1899, 1.0
    %v1901 = vrcp.pop %v1900
    %v1902 = vmul.f32 %v1900, %v1901
    %v1903 = vsub.f32 1.0, %v1902
    %v1904 = vmul.f32 %v1901, %v1903
    %v1905 = vadd.f32 %v1901, %v1904
    %vm1906 = vweird.f32 %v1900
    %vm1907 = vweird.f32 %v1901
    %vm1908 = vmor %vm1906, %vm1907
    %v1909 = vsel %vm1908, %v1901, %v1905
    %v1910 = vand.u32 2147483647, %v1900
    %vm1911 = vcmp.eq.f32.partialorder %v1910, 8.507059e+37
    %v1912 = vand.u32 %v1900, 2147483648
    %v1913 = vor.u32 1.1754944e-38, %v1912
    %v1914 = vsel %vm1911, %v1913, %v1909
    %v1915 = vmul.f32 1.0, %v1914
    %v1916 = vmul.f32 %v1915, 2.0
    %v1917 = vsub.f32 %v1916, 1.0
    %v1918 = vmul.f32 %v1915, 0.0
    %1920 = vrot.lane.b32.xlu0 %v1917, 64
    %v1921 = vpop.permute.xlu0 %1920
    %v1923 = vmul.f32 %v1915, %v1921
    %1925 = vrot.lane.b32.xlu0 %v1923, 32
    %v1926 = vpop.permute.xlu0 %1925
    %v1928 = vadd.f32 %v1918, %v1926
    %v1929 = vtanh.pop %v1928
    %1931 = vrot.lane.b32.xlu0 %v1929, 64
    %v1932 = vpop.permute.xlu0 %1931
    %v1934 = vmul.f32 %v1915, %v1932
    %1936 = vrot.lane.b32.xlu0 %v1876, 32
    %v1937 = vpop.permute.xlu0 %1936
    %v1938 = vsel %vm73, %v1937, 0
    %1940 = vmatpush.msra.mxu0 0.0
    %1941 = vmatpush.msra.mxu0 0.0
    %1942 = vmatpush.msra.mxu0 0.0
    %1943 = vmatpush.msra.mxu0 0.0
    %1944 = vmatpush.msra.mxu0 0.0
    %1945 = vmatpush.msra.mxu0 0.0
    %1946 = vmatpush.msra.mxu0 0.0
    %1947 = vmatpush.msra.mxu0 0.0
    %1948 = vmatpush.msra.mxu0 0.0
    %1949 = vmatpush.msra.mxu0 0.0
    %1950 = vmatpush.msra.mxu0 0.0
    %1951 = vmatpush.msra.mxu0 0.0
    %1952 = vmatpush.msra.mxu0 %v1110
    %1953 = vmatpush.msra.mxu0 %v1109
    %1954 = vmatpush.msra.mxu0 %v1108
    %1955 = vmatpush.msra.mxu0 %v1107
    %1956 = vmatmul.f32.gmra.mxu0 %v1938
    %v1957 = vpop.f32.mrf.mxu0
    %v1958 = vadd.f32 %v1308, %v1957
    %1959 = vdwg.mxu0
    %v1960 = vxor.u32 %v1958, 2147483648
    %v1961 = vmul.f32 %v1960, 1.442695
    %v1962 = vpow.pop %v1961
    %v1963 = vadd.f32 %v1962, 1.0
    %v1964 = vrcp.pop %v1963
    %v1965 = vmul.f32 %v1963, %v1964
    %v1966 = vsub.f32 1.0, %v1965
    %v1967 = vmul.f32 %v1964, %v1966
    %v1968 = vadd.f32 %v1964, %v1967
    %vm1969 = vweird.f32 %v1963
    %vm1970 = vweird.f32 %v1964
    %vm1971 = vmor %vm1969, %vm1970
    %v1972 = vsel %vm1971, %v1964, %v1968
    %v1973 = vand.u32 2147483647, %v1963
    %vm1974 = vcmp.eq.f32.partialorder %v1973, 8.507059e+37
    %v1975 = vand.u32 %v1963, 2147483648
    %v1976 = vor.u32 1.1754944e-38, %v1975
    %v1977 = vsel %vm1974, %v1976, %v1972
    %v1978 = vmul.f32 1.0, %v1977
    %v1979 = vmul.f32 %v1978, 2.0
    %v1980 = vsub.f32 %v1979, 1.0
    %v1981 = vmul.f32 %v1978, %v1870
    %1983 = vrot.lane.b32.xlu0 %v1980, 64
    %v1984 = vpop.permute.xlu0 %1983
    %v1986 = vmul.f32 %v1978, %v1984
    %1988 = vrot.lane.b32.xlu0 %v1986, 32
    %v1989 = vpop.permute.xlu0 %1988
    %v1991 = vadd.f32 %v1981, %v1989
    %v1992 = vtanh.pop %v1991
    %1994 = vrot.lane.b32.xlu0 %v1992, 64
    %v1995 = vpop.permute.xlu0 %1994
    %v1997 = vmul.f32 %v1978, %v1995
    %1999 = vrot.lane.b32.xlu0 %v1934, 32
    %v2000 = vpop.permute.xlu0 %1999
    %v2001 = vsel %vm73, %v2000, 0
    %2003 = vmatpush.msra.mxu0 0.0
    %2004 = vmatpush.msra.mxu0 0.0
    %2005 = vmatpush.msra.mxu0 0.0
    %2006 = vmatpush.msra.mxu0 0.0
    %2007 = vmatpush.msra.mxu0 0.0
    %2008 = vmatpush.msra.mxu0 0.0
    %2009 = vmatpush.msra.mxu0 0.0
    %2010 = vmatpush.msra.mxu0 0.0
    %2011 = vmatpush.msra.mxu0 0.0
    %2012 = vmatpush.msra.mxu0 0.0
    %2013 = vmatpush.msra.mxu0 0.0
    %2014 = vmatpush.msra.mxu0 0.0
    %2015 = vmatpush.msra.mxu0 %v1114
    %2016 = vmatpush.msra.mxu0 %v1113
    %2017 = vmatpush.msra.mxu0 %v1112
    %2018 = vmatpush.msra.mxu0 %v1111
    %2019 = vmatmul.f32.gmra.mxu0 %v2001
    %v2020 = vpop.f32.mrf.mxu0
    %v2021 = vadd.f32 %v1729, %v2020
    %2022 = vdwg.mxu0
    %v2023 = vxor.u32 %v2021, 2147483648
    %v2024 = vmul.f32 %v2023, 1.442695
    %v2025 = vpow.pop %v2024
    %v2026 = vadd.f32 %v2025, 1.0
    %v2027 = vrcp.pop %v2026
    %v2028 = vmul.f32 %v2026, %v2027
    %v2029 = vsub.f32 1.0, %v2028
    %v2030 = vmul.f32 %v2027, %v2029
    %v2031 = vadd.f32 %v2027, %v2030
    %vm2032 = vweird.f32 %v2026
    %vm2033 = vweird.f32 %v2027
    %vm2034 = vmor %vm2032, %vm2033
    %v2035 = vsel %vm2034, %v2027, %v2031
    %v2036 = vand.u32 2147483647, %v2026
    %vm2037 = vcmp.eq.f32.partialorder %v2036, 8.507059e+37
    %v2038 = vand.u32 %v2026, 2147483648
    %v2039 = vor.u32 1.1754944e-38, %v2038
    %v2040 = vsel %vm2037, %v2039, %v2035
    %v2041 = vmul.f32 1.0, %v2040
    %v2042 = vmul.f32 %v2041, 2.0
    %v2043 = vsub.f32 %v2042, 1.0
    %v2044 = vmul.f32 %v2041, %v1928
    %2046 = vrot.lane.b32.xlu0 %v2043, 64
    %v2047 = vpop.permute.xlu0 %2046
    %v2049 = vmul.f32 %v2041, %v2047
    %2051 = vrot.lane.b32.xlu0 %v2049, 32
    %v2052 = vpop.permute.xlu0 %2051
    %v2054 = vadd.f32 %v2044, %v2052
    %v2055 = vtanh.pop %v2054
    %2057 = vrot.lane.b32.xlu0 %v2055, 64
    %v2058 = vpop.permute.xlu0 %2057
    %v2060 = vmul.f32 %v2041, %v2058
    %2062 = vrot.lane.b32.xlu0 %v1997, 32
    %v2063 = vpop.permute.xlu0 %2062
    %v2064 = vsel %vm73, %v2063, 0
    %2066 = vmatpush.msra.mxu0 0.0
    %2067 = vmatpush.msra.mxu0 0.0
    %2068 = vmatpush.msra.mxu0 0.0
    %2069 = vmatpush.msra.mxu0 0.0
    %2070 = vmatpush.msra.mxu0 0.0
    %2071 = vmatpush.msra.mxu0 0.0
    %2072 = vmatpush.msra.mxu0 0.0
    %2073 = vmatpush.msra.mxu0 0.0
    %2074 = vmatpush.msra.mxu0 0.0
    %2075 = vmatpush.msra.mxu0 0.0
    %2076 = vmatpush.msra.mxu0 0.0
    %2077 = vmatpush.msra.mxu0 0.0
    %2078 = vmatpush.msra.mxu0 %v1110
    %2079 = vmatpush.msra.mxu0 %v1109
    %2080 = vmatpush.msra.mxu0 %v1108
    %2081 = vmatpush.msra.mxu0 %v1107
    %2082 = vmatmul.f32.gmra.mxu0 %v2064
    %v2083 = vpop.f32.mrf.mxu0
    %v2084 = vadd.f32 %v1392, %v2083
    %2085 = vdwg.mxu0
    %v2086 = vxor.u32 %v2084, 2147483648
    %v2087 = vmul.f32 %v2086, 1.442695
    %v2088 = vpow.pop %v2087
    %v2089 = vadd.f32 %v2088, 1.0
    %v2090 = vrcp.pop %v2089
    %v2091 = vmul.f32 %v2089, %v2090
    %v2092 = vsub.f32 1.0, %v2091
    %v2093 = vmul.f32 %v2090, %v2092
    %v2094 = vadd.f32 %v2090, %v2093
    %vm2095 = vweird.f32 %v2089
    %vm2096 = vweird.f32 %v2090
    %vm2097 = vmor %vm2095, %vm2096
    %v2098 = vsel %vm2097, %v2090, %v2094
    %v2099 = vand.u32 2147483647, %v2089
    %vm2100 = vcmp.eq.f32.partialorder %v2099, 8.507059e+37
    %v2101 = vand.u32 %v2089, 2147483648
    %v2102 = vor.u32 1.1754944e-38, %v2101
    %v2103 = vsel %vm2100, %v2102, %v2098
    %v2104 = vmul.f32 1.0, %v2103
    %v2105 = vmul.f32 %v2104, 2.0
    %v2106 = vsub.f32 %v2105, 1.0
    %v2107 = vmul.f32 %v2104, %v1991
    %2109 = vrot.lane.b32.xlu0 %v2106, 64
    %v2110 = vpop.permute.xlu0 %2109
    %v2112 = vmul.f32 %v2104, %v2110
    %2114 = vrot.lane.b32.xlu0 %v2112, 32
    %v2115 = vpop.permute.xlu0 %2114
    %v2117 = vadd.f32 %v2107, %v2115
    %v2118 = vtanh.pop %v2117
    %2120 = vrot.lane.b32.xlu0 %v2118, 64
    %v2121 = vpop.permute.xlu0 %2120
    %v2123 = vmul.f32 %v2104, %v2121
    %2125 = vrot.lane.b32.xlu0 %v2060, 32
    %v2126 = vpop.permute.xlu0 %2125
    %v2127 = vsel %vm73, %v2126, 0
    %2129 = vmatpush.msra.mxu0 0.0
    %2130 = vmatpush.msra.mxu0 0.0
    %2131 = vmatpush.msra.mxu0 0.0
    %2132 = vmatpush.msra.mxu0 0.0
    %2133 = vmatpush.msra.mxu0 0.0
    %2134 = vmatpush.msra.mxu0 0.0
    %2135 = vmatpush.msra.mxu0 0.0
    %2136 = vmatpush.msra.mxu0 0.0
    %2137 = vmatpush.msra.mxu0 0.0
    %2138 = vmatpush.msra.mxu0 0.0
    %2139 = vmatpush.msra.mxu0 0.0
    %2140 = vmatpush.msra.mxu0 0.0
    %2141 = vmatpush.msra.mxu0 %v1114
    %2142 = vmatpush.msra.mxu0 %v1113
    %2143 = vmatpush.msra.mxu0 %v1112
    %2144 = vmatpush.msra.mxu0 %v1111
    %2145 = vmatmul.f32.gmra.mxu0 %v2127
    %v2146 = vpop.f32.mrf.mxu0
    %v2147 = vadd.f32 %v1645, %v2146
    %2148 = vdwg.mxu0
    %v2149 = vxor.u32 %v2147, 2147483648
    %v2150 = vmul.f32 %v2149, 1.442695
    %v2151 = vpow.pop %v2150
    %v2152 = vadd.f32 %v2151, 1.0
    %v2153 = vrcp.pop %v2152
    %v2154 = vmul.f32 %v2152, %v2153
    %v2155 = vsub.f32 1.0, %v2154
    %v2156 = vmul.f32 %v2153, %v2155
    %v2157 = vadd.f32 %v2153, %v2156
    %vm2158 = vweird.f32 %v2152
    %vm2159 = vweird.f32 %v2153
    %vm2160 = vmor %vm2158, %vm2159
    %v2161 = vsel %vm2160, %v2153, %v2157
    %v2162 = vand.u32 2147483647, %v2152
    %vm2163 = vcmp.eq.f32.partialorder %v2162, 8.507059e+37
    %v2164 = vand.u32 %v2152, 2147483648
    %v2165 = vor.u32 1.1754944e-38, %v2164
    %v2166 = vsel %vm2163, %v2165, %v2161
    %v2167 = vmul.f32 1.0, %v2166
    %v2168 = vmul.f32 %v2167, 2.0
    %v2169 = vsub.f32 %v2168, 1.0
    %v2170 = vmul.f32 %v2167, %v2054
    %2172 = vrot.lane.b32.xlu0 %v2169, 64
    %v2173 = vpop.permute.xlu0 %2172
    %v2175 = vmul.f32 %v2167, %v2173
    %2177 = vrot.lane.b32.xlu0 %v2175, 32
    %v2178 = vpop.permute.xlu0 %2177
    %v2180 = vadd.f32 %v2170, %v2178
    %v2181 = vtanh.pop %v2180
    %2183 = vrot.lane.b32.xlu0 %v2181, 64
    %v2184 = vpop.permute.xlu0 %2183
    %v2186 = vmul.f32 %v2167, %v2184
    %2188 = vrot.lane.b32.xlu0 %v2123, 32
    %v2189 = vpop.permute.xlu0 %2188
    %v2190 = vsel %vm73, %v2189, 0
    %2192 = vmatpush.msra.mxu0 0.0
    %2193 = vmatpush.msra.mxu0 0.0
    %2194 = vmatpush.msra.mxu0 0.0
    %2195 = vmatpush.msra.mxu0 0.0
    %2196 = vmatpush.msra.mxu0 0.0
    %2197 = vmatpush.msra.mxu0 0.0
    %2198 = vmatpush.msra.mxu0 0.0
    %2199 = vmatpush.msra.mxu0 0.0
    %2200 = vmatpush.msra.mxu0 0.0
    %2201 = vmatpush.msra.mxu0 0.0
    %2202 = vmatpush.msra.mxu0 0.0
    %2203 = vmatpush.msra.mxu0 0.0
    %2204 = vmatpush.msra.mxu0 %v1110
    %2205 = vmatpush.msra.mxu0 %v1109
    %2206 = vmatpush.msra.mxu0 %v1108
    %2207 = vmatpush.msra.mxu0 %v1107
    %2208 = vmatmul.f32.gmra.mxu0 %v2190
    %v2209 = vpop.f32.mrf.mxu0
    %v2210 = vadd.f32 %v1476, %v2209
    %2211 = vdwg.mxu0
    %v2212 = vxor.u32 %v2210, 2147483648
    %v2213 = vmul.f32 %v2212, 1.442695
    %v2214 = vpow.pop %v2213
    %v2215 = vadd.f32 %v2214, 1.0
    %v2216 = vrcp.pop %v2215
    %v2217 = vmul.f32 %v2215, %v2216
    %v2218 = vsub.f32 1.0, %v2217
    %v2219 = vmul.f32 %v2216, %v2218
    %v2220 = vadd.f32 %v2216, %v2219
    %vm2221 = vweird.f32 %v2215
    %vm2222 = vweird.f32 %v2216
    %vm2223 = vmor %vm2221, %vm2222
    %v2224 = vsel %vm2223, %v2216, %v2220
    %v2225 = vand.u32 2147483647, %v2215
    %vm2226 = vcmp.eq.f32.partialorder %v2225, 8.507059e+37
    %v2227 = vand.u32 %v2215, 2147483648
    %v2228 = vor.u32 1.1754944e-38, %v2227
    %v2229 = vsel %vm2226, %v2228, %v2224
    %v2230 = vmul.f32 1.0, %v2229
    %v2231 = vmul.f32 %v2230, 2.0
    %v2232 = vsub.f32 %v2231, 1.0
    %v2233 = vmul.f32 %v2230, %v2117
    %2235 = vrot.lane.b32.xlu0 %v2232, 64
    %v2236 = vpop.permute.xlu0 %2235
    %v2238 = vmul.f32 %v2230, %v2236
    %2240 = vrot.lane.b32.xlu0 %v2238, 32
    %v2241 = vpop.permute.xlu0 %2240
    %v2243 = vadd.f32 %v2233, %v2241
    %v2244 = vtanh.pop %v2243
    %2246 = vrot.lane.b32.xlu0 %v2244, 64
    %v2247 = vpop.permute.xlu0 %2246
    %v2249 = vmul.f32 %v2230, %v2247
    %2251 = vrot.lane.b32.xlu0 %v2186, 32
    %v2252 = vpop.permute.xlu0 %2251
    %v2253 = vsel %vm73, %v2252, 0
    %2255 = vmatpush.msra.mxu0 0.0
    %2256 = vmatpush.msra.mxu0 0.0
    %2257 = vmatpush.msra.mxu0 0.0
    %2258 = vmatpush.msra.mxu0 0.0
    %2259 = vmatpush.msra.mxu0 0.0
    %2260 = vmatpush.msra.mxu0 0.0
    %2261 = vmatpush.msra.mxu0 0.0
    %2262 = vmatpush.msra.mxu0 0.0
    %2263 = vmatpush.msra.mxu0 0.0
    %2264 = vmatpush.msra.mxu0 0.0
    %2265 = vmatpush.msra.mxu0 0.0
    %2266 = vmatpush.msra.mxu0 0.0
    %2267 = vmatpush.msra.mxu0 %v1114
    %2268 = vmatpush.msra.mxu0 %v1113
    %2269 = vmatpush.msra.mxu0 %v1112
    %2270 = vmatpush.msra.mxu0 %v1111
    %2271 = vmatmul.f32.gmra.mxu0 %v2253
    %v2272 = vpop.f32.mrf.mxu0
    %v2273 = vadd.f32 %v1561, %v2272
    %2274 = vdwg.mxu0
    %v2275 = vxor.u32 %v2273, 2147483648
    %v2276 = vmul.f32 %v2275, 1.442695
    %v2277 = vpow.pop %v2276
    %v2278 = vadd.f32 %v2277, 1.0
    %v2279 = vrcp.pop %v2278
    %v2280 = vmul.f32 %v2278, %v2279
    %v2281 = vsub.f32 1.0, %v2280
    %v2282 = vmul.f32 %v2279, %v2281
    %v2283 = vadd.f32 %v2279, %v2282
    %vm2284 = vweird.f32 %v2278
    %vm2285 = vweird.f32 %v2279
    %vm2286 = vmor %vm2284, %vm2285
    %v2287 = vsel %vm2286, %v2279, %v2283
    %v2288 = vand.u32 2147483647, %v2278
    %vm2289 = vcmp.eq.f32.partialorder %v2288, 8.507059e+37
    %v2290 = vand.u32 %v2278, 2147483648
    %v2291 = vor.u32 1.1754944e-38, %v2290
    %v2292 = vsel %vm2289, %v2291, %v2287
    %v2293 = vmul.f32 1.0, %v2292
    %v2294 = vmul.f32 %v2293, 2.0
    %v2295 = vsub.f32 %v2294, 1.0
    %v2296 = vmul.f32 %v2293, %v2180
    %2298 = vrot.lane.b32.xlu0 %v2295, 64
    %v2299 = vpop.permute.xlu0 %2298
    %v2301 = vmul.f32 %v2293, %v2299
    %2303 = vrot.lane.b32.xlu0 %v2301, 32
    %v2304 = vpop.permute.xlu0 %2303
    %v2306 = vadd.f32 %v2296, %v2304
    %v2307 = vtanh.pop %v2306
    %2309 = vrot.lane.b32.xlu0 %v2307, 64
    %v2310 = vpop.permute.xlu0 %2309
    %v2312 = vmul.f32 %v2293, %v2310
    %2314 = vrot.lane.b32.xlu0 %v2249, 32
    %v2315 = vpop.permute.xlu0 %2314
    %v2316 = vsel %vm73, %v2315, 0
    %2318 = vmatpush.msra.mxu0 0.0
    %2319 = vmatpush.msra.mxu0 0.0
    %2320 = vmatpush.msra.mxu0 0.0
    %2321 = vmatpush.msra.mxu0 0.0
    %2322 = vmatpush.msra.mxu0 0.0
    %2323 = vmatpush.msra.mxu0 0.0
    %2324 = vmatpush.msra.mxu0 0.0
    %2325 = vmatpush.msra.mxu0 0.0
    %2326 = vmatpush.msra.mxu0 0.0
    %2327 = vmatpush.msra.mxu0 0.0
    %2328 = vmatpush.msra.mxu0 0.0
    %2329 = vmatpush.msra.mxu0 0.0
    %2330 = vmatpush.msra.mxu0 %v1110
    %2331 = vmatpush.msra.mxu0 %v1109
    %2332 = vmatpush.msra.mxu0 %v1108
    %2333 = vmatpush.msra.mxu0 %v1107
    %2334 = vmatmul.f32.gmra.mxu0 %v2316
    %v2335 = vpop.f32.mrf.mxu0
    %v2336 = vadd.f32 %v1560, %v2335
    %2337 = vdwg.mxu0
    %v2338 = vxor.u32 %v2336, 2147483648
    %v2339 = vmul.f32 %v2338, 1.442695
    %v2340 = vpow.pop %v2339
    %v2341 = vadd.f32 %v2340, 1.0
    %v2342 = vrcp.pop %v2341
    %v2343 = vmul.f32 %v2341, %v2342
    %v2344 = vsub.f32 1.0, %v2343
    %v2345 = vmul.f32 %v2342, %v2344
    %v2346 = vadd.f32 %v2342, %v2345
    %vm2347 = vweird.f32 %v2341
    %vm2348 = vweird.f32 %v2342
    %vm2349 = vmor %vm2347, %vm2348
    %v2350 = vsel %vm2349, %v2342, %v2346
    %v2351 = vand.u32 2147483647, %v2341
    %vm2352 = vcmp.eq.f32.partialorder %v2351, 8.507059e+37
    %v2353 = vand.u32 %v2341, 2147483648
    %v2354 = vor.u32 1.1754944e-38, %v2353
    %v2355 = vsel %vm2352, %v2354, %v2350
    %v2356 = vmul.f32 1.0, %v2355
    %v2357 = vmul.f32 %v2356, 2.0
    %v2358 = vsub.f32 %v2357, 1.0
    %v2359 = vmul.f32 %v2356, %v2243
    %2361 = vrot.lane.b32.xlu0 %v2358, 64
    %v2362 = vpop.permute.xlu0 %2361
    %v2364 = vmul.f32 %v2356, %v2362
    %2366 = vrot.lane.b32.xlu0 %v2364, 32
    %v2367 = vpop.permute.xlu0 %2366
    %v2369 = vadd.f32 %v2359, %v2367
    %v2370 = vtanh.pop %v2369
    %2372 = vrot.lane.b32.xlu0 %v2370, 64
    %v2373 = vpop.permute.xlu0 %2372
    %v2375 = vmul.f32 %v2356, %v2373
    %2377 = vrot.lane.b32.xlu0 %v2312, 32
    %v2378 = vpop.permute.xlu0 %2377
    %v2379 = vsel %vm73, %v2378, 0
    %2381 = vmatpush.msra.mxu0 0.0
    %2382 = vmatpush.msra.mxu0 0.0
    %2383 = vmatpush.msra.mxu0 0.0
    %2384 = vmatpush.msra.mxu0 0.0
    %2385 = vmatpush.msra.mxu0 0.0
    %2386 = vmatpush.msra.mxu0 0.0
    %2387 = vmatpush.msra.mxu0 0.0
    %2388 = vmatpush.msra.mxu0 0.0
    %2389 = vmatpush.msra.mxu0 0.0
    %2390 = vmatpush.msra.mxu0 0.0
    %2391 = vmatpush.msra.mxu0 0.0
    %2392 = vmatpush.msra.mxu0 0.0
    %2393 = vmatpush.msra.mxu0 %v1114
    %2394 = vmatpush.msra.mxu0 %v1113
    %2395 = vmatpush.msra.mxu0 %v1112
    %2396 = vmatpush.msra.mxu0 %v1111
    %2397 = vmatmul.f32.gmra.mxu0 %v2379
    %v2398 = vpop.f32.mrf.mxu0
    %v2399 = vadd.f32 %v1477, %v2398
    %2400 = vdwg.mxu0
    %v2401 = vxor.u32 %v2399, 2147483648
    %v2402 = vmul.f32 %v2401, 1.442695
    %v2403 = vpow.pop %v2402
    %v2404 = vadd.f32 %v2403, 1.0
    %v2405 = vrcp.pop %v2404
    %v2406 = vmul.f32 %v2404, %v2405
    %v2407 = vsub.f32 1.0, %v2406
    %v2408 = vmul.f32 %v2405, %v2407
    %v2409 = vadd.f32 %v2405, %v2408
    %vm2410 = vweird.f32 %v2404
    %vm2411 = vweird.f32 %v2405
    %vm2412 = vmor %vm2410, %vm2411
    %v2413 = vsel %vm2412, %v2405, %v2409
    %v2414 = vand.u32 2147483647, %v2404
    %vm2415 = vcmp.eq.f32.partialorder %v2414, 8.507059e+37
    %v2416 = vand.u32 %v2404, 2147483648
    %v2417 = vor.u32 1.1754944e-38, %v2416
    %v2418 = vsel %vm2415, %v2417, %v2413
    %v2419 = vmul.f32 1.0, %v2418
    %v2420 = vmul.f32 %v2419, 2.0
    %v2421 = vsub.f32 %v2420, 1.0
    %v2422 = vmul.f32 %v2419, %v2306
    %2424 = vrot.lane.b32.xlu0 %v2421, 64
    %v2425 = vpop.permute.xlu0 %2424
    %v2427 = vmul.f32 %v2419, %v2425
    %2429 = vrot.lane.b32.xlu0 %v2427, 32
    %v2430 = vpop.permute.xlu0 %2429
    %v2432 = vadd.f32 %v2422, %v2430
    %v2433 = vtanh.pop %v2432
    %2435 = vrot.lane.b32.xlu0 %v2433, 64
    %v2436 = vpop.permute.xlu0 %2435
    %v2438 = vmul.f32 %v2419, %v2436
    %2440 = vrot.lane.b32.xlu0 %v2375, 32
    %v2441 = vpop.permute.xlu0 %2440
    %v2442 = vsel %vm73, %v2441, 0
    %2444 = vmatpush.msra.mxu0 0.0
    %2445 = vmatpush.msra.mxu0 0.0
    %2446 = vmatpush.msra.mxu0 0.0
    %2447 = vmatpush.msra.mxu0 0.0
    %2448 = vmatpush.msra.mxu0 0.0
    %2449 = vmatpush.msra.mxu0 0.0
    %2450 = vmatpush.msra.mxu0 0.0
    %2451 = vmatpush.msra.mxu0 0.0
    %2452 = vmatpush.msra.mxu0 0.0
    %2453 = vmatpush.msra.mxu0 0.0
    %2454 = vmatpush.msra.mxu0 0.0
    %2455 = vmatpush.msra.mxu0 0.0
    %2456 = vmatpush.msra.mxu0 %v1110
    %2457 = vmatpush.msra.mxu0 %v1109
    %2458 = vmatpush.msra.mxu0 %v1108
    %2459 = vmatpush.msra.mxu0 %v1107
    %2460 = vmatmul.f32.gmra.mxu0 %v2442
    %v2461 = vpop.f32.mrf.mxu0
    %v2462 = vadd.f32 %v1644, %v2461
    %2463 = vdwg.mxu0
    %v2464 = vxor.u32 %v2462, 2147483648
    %v2465 = vmul.f32 %v2464, 1.442695
    %v2466 = vpow.pop %v2465
    %v2467 = vadd.f32 %v2466, 1.0
    %v2468 = vrcp.pop %v2467
    %v2469 = vmul.f32 %v2467, %v2468
    %v2470 = vsub.f32 1.0, %v2469
    %v2471 = vmul.f32 %v2468, %v2470
    %v2472 = vadd.f32 %v2468, %v2471
    %vm2473 = vweird.f32 %v2467
    %vm2474 = vweird.f32 %v2468
    %vm2475 = vmor %vm2473, %vm2474
    %v2476 = vsel %vm2475, %v2468, %v2472
    %v2477 = vand.u32 2147483647, %v2467
    %vm2478 = vcmp.eq.f32.partialorder %v2477, 8.507059e+37
    %v2479 = vand.u32 %v2467, 2147483648
    %v2480 = vor.u32 1.1754944e-38, %v2479
    %v2481 = vsel %vm2478, %v2480, %v2476
    %v2482 = vmul.f32 1.0, %v2481
    %v2483 = vmul.f32 %v2482, 2.0
    %v2484 = vsub.f32 %v2483, 1.0
    %v2485 = vmul.f32 %v2482, %v2369
    %2487 = vrot.lane.b32.xlu0 %v2484, 64
    %v2488 = vpop.permute.xlu0 %2487
    %v2490 = vmul.f32 %v2482, %v2488
    %2492 = vrot.lane.b32.xlu0 %v2490, 32
    %v2493 = vpop.permute.xlu0 %2492
    %v2495 = vadd.f32 %v2485, %v2493
    %v2496 = vtanh.pop %v2495
    %2498 = vrot.lane.b32.xlu0 %v2496, 64
    %v2499 = vpop.permute.xlu0 %2498
    %v2501 = vmul.f32 %v2482, %v2499
    %2503 = vrot.lane.b32.xlu0 %v2438, 32
    %v2504 = vpop.permute.xlu0 %2503
    %v2505 = vsel %vm73, %v2504, 0
    %2507 = vmatpush.msra.mxu0 0.0
    %2508 = vmatpush.msra.mxu0 0.0
    %2509 = vmatpush.msra.mxu0 0.0
    %2510 = vmatpush.msra.mxu0 0.0
    %2511 = vmatpush.msra.mxu0 0.0
    %2512 = vmatpush.msra.mxu0 0.0
    %2513 = vmatpush.msra.mxu0 0.0
    %2514 = vmatpush.msra.mxu0 0.0
    %2515 = vmatpush.msra.mxu0 0.0
    %2516 = vmatpush.msra.mxu0 0.0
    %2517 = vmatpush.msra.mxu0 0.0
    %2518 = vmatpush.msra.mxu0 0.0
    %2519 = vmatpush.msra.mxu0 %v1114
    %2520 = vmatpush.msra.mxu0 %v1113
    %2521 = vmatpush.msra.mxu0 %v1112
    %2522 = vmatpush.msra.mxu0 %v1111
    %2523 = vmatmul.f32.gmra.mxu0 %v2505
    %v2524 = vpop.f32.mrf.mxu0
    %v2525 = vadd.f32 %v1393, %v2524
    %2526 = vdwg.mxu0
    %v2527 = vxor.u32 %v2525, 2147483648
    %v2528 = vmul.f32 %v2527, 1.442695
    %v2529 = vpow.pop %v2528
    %v2530 = vadd.f32 %v2529, 1.0
    %v2531 = vrcp.pop %v2530
    %v2532 = vmul.f32 %v2530, %v2531
    %v2533 = vsub.f32 1.0, %v2532
    %v2534 = vmul.f32 %v2531, %v2533
    %v2535 = vadd.f32 %v2531, %v2534
    %vm2536 = vweird.f32 %v2530
    %vm2537 = vweird.f32 %v2531
    %vm2538 = vmor %vm2536, %vm2537
    %v2539 = vsel %vm2538, %v2531, %v2535
    %v2540 = vand.u32 2147483647, %v2530
    %vm2541 = vcmp.eq.f32.partialorder %v2540, 8.507059e+37
    %v2542 = vand.u32 %v2530, 2147483648
    %v2543 = vor.u32 1.1754944e-38, %v2542
    %v2544 = vsel %vm2541, %v2543, %v2539
    %v2545 = vmul.f32 1.0, %v2544
    %v2546 = vmul.f32 %v2545, 2.0
    %v2547 = vsub.f32 %v2546, 1.0
    %v2548 = vmul.f32 %v2545, %v2432
    %2550 = vrot.lane.b32.xlu0 %v2547, 64
    %v2551 = vpop.permute.xlu0 %2550
    %v2553 = vmul.f32 %v2545, %v2551
    %2555 = vrot.lane.b32.xlu0 %v2553, 32
    %v2556 = vpop.permute.xlu0 %2555
    %v2558 = vadd.f32 %v2548, %v2556
    %v2559 = vtanh.pop %v2558
    %2561 = vrot.lane.b32.xlu0 %v2559, 64
    %v2562 = vpop.permute.xlu0 %2561
    %v2564 = vmul.f32 %v2545, %v2562
    %2566 = vrot.lane.b32.xlu0 %v2501, 32
    %v2567 = vpop.permute.xlu0 %2566
    %v2568 = vsel %vm73, %v2567, 0
    %2570 = vmatpush.msra.mxu0 0.0
    %2571 = vmatpush.msra.mxu0 0.0
    %2572 = vmatpush.msra.mxu0 0.0
    %2573 = vmatpush.msra.mxu0 0.0
    %2574 = vmatpush.msra.mxu0 0.0
    %2575 = vmatpush.msra.mxu0 0.0
    %2576 = vmatpush.msra.mxu0 0.0
    %2577 = vmatpush.msra.mxu0 0.0
    %2578 = vmatpush.msra.mxu0 0.0
    %2579 = vmatpush.msra.mxu0 0.0
    %2580 = vmatpush.msra.mxu0 0.0
    %2581 = vmatpush.msra.mxu0 0.0
    %2582 = vmatpush.msra.mxu0 %v1110
    %2583 = vmatpush.msra.mxu0 %v1109
    %2584 = vmatpush.msra.mxu0 %v1108
    %2585 = vmatpush.msra.mxu0 %v1107
    %2586 = vmatmul.f32.gmra.mxu0 %v2568
    %v2587 = vpop.f32.mrf.mxu0
    %v2588 = vadd.f32 %v1728, %v2587
    %2589 = vdwg.mxu0
    %v2590 = vxor.u32 %v2588, 2147483648
    %v2591 = vmul.f32 %v2590, 1.442695
    %v2592 = vpow.pop %v2591
    %v2593 = vadd.f32 %v2592, 1.0
    %v2594 = vrcp.pop %v2593
    %v2595 = vmul.f32 %v2593, %v2594
    %v2596 = vsub.f32 1.0, %v2595
    %v2597 = vmul.f32 %v2594, %v2596
    %v2598 = vadd.f32 %v2594, %v2597
    %vm2599 = vweird.f32 %v2593
    %vm2600 = vweird.f32 %v2594
    %vm2601 = vmor %vm2599, %vm2600
    %v2602 = vsel %vm2601, %v2594, %v2598
    %v2603 = vand.u32 2147483647, %v2593
    %vm2604 = vcmp.eq.f32.partialorder %v2603, 8.507059e+37
    %v2605 = vand.u32 %v2593, 2147483648
    %v2606 = vor.u32 1.1754944e-38, %v2605
    %v2607 = vsel %vm2604, %v2606, %v2602
    %v2608 = vmul.f32 1.0, %v2607
    %v2609 = vmul.f32 %v2608, 2.0
    %v2610 = vsub.f32 %v2609, 1.0
    %v2611 = vmul.f32 %v2608, %v2495
    %2613 = vrot.lane.b32.xlu0 %v2610, 64
    %v2614 = vpop.permute.xlu0 %2613
    %v2616 = vmul.f32 %v2608, %v2614
    %2618 = vrot.lane.b32.xlu0 %v2616, 32
    %v2619 = vpop.permute.xlu0 %2618
    %v2621 = vadd.f32 %v2611, %v2619
    %v2622 = vtanh.pop %v2621
    %2624 = vrot.lane.b32.xlu0 %v2622, 64
    %v2625 = vpop.permute.xlu0 %2624
    %v2627 = vmul.f32 %v2608, %v2625
    %2629 = vrot.lane.b32.xlu0 %v2564, 32
    %v2630 = vpop.permute.xlu0 %2629
    %v2631 = vsel %vm73, %v2630, 0
    %2633 = vmatpush.msra.mxu0 0.0
    %2634 = vmatpush.msra.mxu0 0.0
    %2635 = vmatpush.msra.mxu0 0.0
    %2636 = vmatpush.msra.mxu0 0.0
    %2637 = vmatpush.msra.mxu0 0.0
    %2638 = vmatpush.msra.mxu0 0.0
    %2639 = vmatpush.msra.mxu0 0.0
    %2640 = vmatpush.msra.mxu0 0.0
    %2641 = vmatpush.msra.mxu0 0.0
    %2642 = vmatpush.msra.mxu0 0.0
    %2643 = vmatpush.msra.mxu0 0.0
    %2644 = vmatpush.msra.mxu0 0.0
    %2645 = vmatpush.msra.mxu0 %v1114
    %2646 = vmatpush.msra.mxu0 %v1113
    %2647 = vmatpush.msra.mxu0 %v1112
    %2648 = vmatpush.msra.mxu0 %v1111
    %2649 = vmatmul.f32.gmra.mxu0 %v2631
    %v2650 = vpop.f32.mrf.mxu0
    %v2651 = vadd.f32 %v1309, %v2650
    %2652 = vdwg.mxu0
    %v2653 = vxor.u32 %v2651, 2147483648
    %v2654 = vmul.f32 %v2653, 1.442695
    %v2655 = vpow.pop %v2654
    %v2656 = vadd.f32 %v2655, 1.0
    %v2657 = vrcp.pop %v2656
    %v2658 = vmul.f32 %v2656, %v2657
    %v2659 = vsub.f32 1.0, %v2658
    %v2660 = vmul.f32 %v2657, %v2659
    %v2661 = vadd.f32 %v2657, %v2660
    %vm2662 = vweird.f32 %v2656
    %vm2663 = vweird.f32 %v2657
    %vm2664 = vmor %vm2662, %vm2663
    %v2665 = vsel %vm2664, %v2657, %v2661
    %v2666 = vand.u32 2147483647, %v2656
    %vm2667 = vcmp.eq.f32.partialorder %v2666, 8.507059e+37
    %v2668 = vand.u32 %v2656, 2147483648
    %v2669 = vor.u32 1.1754944e-38, %v2668
    %v2670 = vsel %vm2667, %v2669, %v2665
    %v2671 = vmul.f32 1.0, %v2670
    %v2672 = vmul.f32 %v2671, 2.0
    %v2673 = vsub.f32 %v2672, 1.0
    %v2674 = vmul.f32 %v2671, %v2558
    %2676 = vrot.lane.b32.xlu0 %v2673, 64
    %v2677 = vpop.permute.xlu0 %2676
    %v2679 = vmul.f32 %v2671, %v2677
    %2681 = vrot.lane.b32.xlu0 %v2679, 32
    %v2682 = vpop.permute.xlu0 %2681
    %v2684 = vadd.f32 %v2674, %v2682
    %v2685 = vtanh.pop %v2684
    %2687 = vrot.lane.b32.xlu0 %v2685, 64
    %v2688 = vpop.permute.xlu0 %2687
    %v2690 = vmul.f32 %v2671, %v2688
    %2692 = vrot.lane.b32.xlu0 %v2627, 32
    %v2693 = vpop.permute.xlu0 %2692
    %v2694 = vsel %vm73, %v2693, 0
    %2696 = vmatpush.msra.mxu0 0.0
    %2697 = vmatpush.msra.mxu0 0.0
    %2698 = vmatpush.msra.mxu0 0.0
    %2699 = vmatpush.msra.mxu0 0.0
    %2700 = vmatpush.msra.mxu0 0.0
    %2701 = vmatpush.msra.mxu0 0.0
    %2702 = vmatpush.msra.mxu0 0.0
    %2703 = vmatpush.msra.mxu0 0.0
    %2704 = vmatpush.msra.mxu0 0.0
    %2705 = vmatpush.msra.mxu0 0.0
    %2706 = vmatpush.msra.mxu0 0.0
    %2707 = vmatpush.msra.mxu0 0.0
    %2708 = vmatpush.msra.mxu0 %v1110
    %2709 = vmatpush.msra.mxu0 %v1109
    %2710 = vmatpush.msra.mxu0 %v1108
    %2711 = vmatpush.msra.mxu0 %v1107
    %2712 = vmatmul.f32.gmra.mxu0 %v2694
    %v2713 = vpop.f32.mrf.mxu0
    %v2714 = vadd.f32 %v1817, %v2713
    %2715 = vdwg.mxu0
    %v2716 = vxor.u32 %v2714, 2147483648
    %v2717 = vmul.f32 %v2716, 1.442695
    %v2718 = vpow.pop %v2717
    %v2719 = vadd.f32 %v2718, 1.0
    %v2720 = vrcp.pop %v2719
    %v2721 = vmul.f32 %v2719, %v2720
    %v2722 = vsub.f32 1.0, %v2721
    %v2723 = vmul.f32 %v2720, %v2722
    %v2724 = vadd.f32 %v2720, %v2723
    %vm2725 = vweird.f32 %v2719
    %vm2726 = vweird.f32 %v2720
    %vm2727 = vmor %vm2725, %vm2726
    %v2728 = vsel %vm2727, %v2720, %v2724
    %v2729 = vand.u32 2147483647, %v2719
    %vm2730 = vcmp.eq.f32.partialorder %v2729, 8.507059e+37
    %v2731 = vand.u32 %v2719, 2147483648
    %v2732 = vor.u32 1.1754944e-38, %v2731
    %v2733 = vsel %vm2730, %v2732, %v2728
    %v2734 = vmul.f32 1.0, %v2733
    %v2735 = vmul.f32 %v2734, 2.0
    %v2736 = vsub.f32 %v2735, 1.0
    %v2737 = vmul.f32 %v2734, %v2621
    %2739 = vrot.lane.b32.xlu0 %v2736, 64
    %v2740 = vpop.permute.xlu0 %2739
    %v2742 = vmul.f32 %v2734, %v2740
    %2744 = vrot.lane.b32.xlu0 %v2742, 32
    %v2745 = vpop.permute.xlu0 %2744
    %v2747 = vadd.f32 %v2737, %v2745
    %v2748 = vtanh.pop %v2747
    %2750 = vrot.lane.b32.xlu0 %v2748, 64
    %v2751 = vpop.permute.xlu0 %2750
    %v2753 = vmul.f32 %v2734, %v2751
    %2755 = vrot.lane.b32.xlu0 %v2690, 32
    %v2756 = vpop.permute.xlu0 %2755
    %v2757 = vsel %vm73, %v2756, 0
    %2759 = vmatpush.msra.mxu0 0.0
    %2760 = vmatpush.msra.mxu0 0.0
    %2761 = vmatpush.msra.mxu0 0.0
    %2762 = vmatpush.msra.mxu0 0.0
    %2763 = vmatpush.msra.mxu0 0.0
    %2764 = vmatpush.msra.mxu0 0.0
    %2765 = vmatpush.msra.mxu0 0.0
    %2766 = vmatpush.msra.mxu0 0.0
    %2767 = vmatpush.msra.mxu0 0.0
    %2768 = vmatpush.msra.mxu0 0.0
    %2769 = vmatpush.msra.mxu0 0.0
    %2770 = vmatpush.msra.mxu0 0.0
    %2771 = vmatpush.msra.mxu0 %v1114
    %2772 = vmatpush.msra.mxu0 %v1113
    %2773 = vmatpush.msra.mxu0 %v1112
    %2774 = vmatpush.msra.mxu0 %v1111
    %2775 = vmatmul.f32.gmra.mxu0 %v2757
    %v2776 = vpop.f32.mrf.mxu0
    %v2777 = vadd.f32 %v1225, %v2776
    %2778 = vdwg.mxu0
    %v2779 = vxor.u32 %v2777, 2147483648
    %v2780 = vmul.f32 %v2779, 1.442695
    %v2781 = vpow.pop %v2780
    %v2782 = vadd.f32 %v2781, 1.0
    %v2783 = vrcp.pop %v2782
    %v2784 = vmul.f32 %v2782, %v2783
    %v2785 = vsub.f32 1.0, %v2784
    %v2786 = vmul.f32 %v2783, %v2785
    %v2787 = vadd.f32 %v2783, %v2786
    %vm2788 = vweird.f32 %v2782
    %vm2789 = vweird.f32 %v2783
    %vm2790 = vmor %vm2788, %vm2789
    %v2791 = vsel %vm2790, %v2783, %v2787
    %v2792 = vand.u32 2147483647, %v2782
    %vm2793 = vcmp.eq.f32.partialorder %v2792, 8.507059e+37
    %v2794 = vand.u32 %v2782, 2147483648
    %v2795 = vor.u32 1.1754944e-38, %v2794
    %v2796 = vsel %vm2793, %v2795, %v2791
    %v2797 = vmul.f32 1.0, %v2796
    %v2798 = vmul.f32 %v2797, 2.0
    %v2799 = vsub.f32 %v2798, 1.0
    %v2800 = vmul.f32 %v2797, %v2684
    %2802 = vrot.lane.b32.xlu0 %v2799, 64
    %v2803 = vpop.permute.xlu0 %2802
    %v2805 = vmul.f32 %v2797, %v2803
    %2807 = vrot.lane.b32.xlu0 %v2805, 32
    %v2808 = vpop.permute.xlu0 %2807
    %v2810 = vadd.f32 %v2800, %v2808
    %v2811 = vtanh.pop %v2810
    %2813 = vrot.lane.b32.xlu0 %v2811, 64
    %v2814 = vpop.permute.xlu0 %2813
    %v2816 = vmul.f32 %v2797, %v2814
    %v2817 = vld [vmem:[%s8] sm:$0x1]
    %v2818 = vld [vmem:[%s9] sm:$0x1]
    %v2819 = vld [vmem:[#allocation2] sm:$0x1]
    %v2821 = vperm.slane %v2817, 0
    %2822 = vrot.lane.b32.xlu0 %v2821, 96
    %v2823 = vpop.permute.xlu0 %2822
    %v2825 = vmul.f32 %v1876, %v2823
    %2827 = vrot.lane.b32.xlu0 %v2825, 32
    %v2828 = vpop.permute.xlu0 %2827
    %vm2830 = vcmask 254976
    %v2831 = vsel %vm2830, %v2828, 0.0
    %2832 = vadd.xlane.f32.xlu0 %v2831
    %v2833 = vpop.xlane.xlu0 %2832
    %v2835 = vperm.slane %v2819, 0
    %v2837 = vadd.f32 %v2835, %v2833
    %v2839 = vperm.slane %v2818, 0
    %2840 = vrot.lane.b32.xlu0 %v2839, 96
    %v2841 = vpop.permute.xlu0 %2840
    %v2843 = vmul.f32 %v2816, %v2841
    %2845 = vrot.lane.b32.xlu0 %v2843, 32
    %v2846 = vpop.permute.xlu0 %2845
    %v2848 = vsel %vm2830, %v2846, 0.0
    %2849 = vadd.xlane.f32.xlu0 %v2848
    %v2850 = vpop.xlane.xlu0 %2849
    %v2851 = vadd.f32 %v2837, %v2850
    %v2852 = vmul.f32 %v1997, %v2823
    %2854 = vrot.lane.b32.xlu0 %v2852, 32
    %v2855 = vpop.permute.xlu0 %2854
    %v2857 = vsel %vm2830, %v2855, 0.0
    %2858 = vadd.xlane.f32.xlu0 %v2857
    %v2859 = vpop.xlane.xlu0 %2858
    %v2860 = vadd.f32 %v2835, %v2859
    %v2861 = vmul.f32 %v2690, %v2841
    %2863 = vrot.lane.b32.xlu0 %v2861, 32
    %v2864 = vpop.permute.xlu0 %2863
    %v2866 = vsel %vm2830, %v2864, 0.0
    %2867 = vadd.xlane.f32.xlu0 %v2866
    %v2868 = vpop.xlane.xlu0 %2867
    %v2869 = vadd.f32 %v2860, %v2868
    %v2870 = vmul.f32 %v2123, %v2823
    %2872 = vrot.lane.b32.xlu0 %v2870, 32
    %v2873 = vpop.permute.xlu0 %2872
    %v2875 = vsel %vm2830, %v2873, 0.0
    %2876 = vadd.xlane.f32.xlu0 %v2875
    %v2877 = vpop.xlane.xlu0 %2876
    %v2878 = vadd.f32 %v2835, %v2877
    %v2879 = vmul.f32 %v2564, %v2841
    %2881 = vrot.lane.b32.xlu0 %v2879, 32
    %v2882 = vpop.permute.xlu0 %2881
    %v2884 = vsel %vm2830, %v2882, 0.0
    %2885 = vadd.xlane.f32.xlu0 %v2884
    %v2886 = vpop.xlane.xlu0 %2885
    %v2887 = vadd.f32 %v2878, %v2886
    %v2888 = vmul.f32 %v2249, %v2823
    %2890 = vrot.lane.b32.xlu0 %v2888, 32
    %v2891 = vpop.permute.xlu0 %2890
    %v2893 = vsel %vm2830, %v2891, 0.0
    %2894 = vadd.xlane.f32.xlu0 %v2893
    %v2895 = vpop.xlane.xlu0 %2894
    %v2896 = vadd.f32 %v2835, %v2895
    %v2897 = vmul.f32 %v2438, %v2841
    %2899 = vrot.lane.b32.xlu0 %v2897, 32
    %v2900 = vpop.permute.xlu0 %2899
    %v2902 = vsel %vm2830, %v2900, 0.0
    %2903 = vadd.xlane.f32.xlu0 %v2902
    %v2904 = vpop.xlane.xlu0 %2903
    %v2905 = vadd.f32 %v2896, %v2904
    %v2906 = vmul.f32 %v2375, %v2823
    %2908 = vrot.lane.b32.xlu0 %v2906, 32
    %v2909 = vpop.permute.xlu0 %2908
    %v2911 = vsel %vm2830, %v2909, 0.0
    %2912 = vadd.xlane.f32.xlu0 %v2911
    %v2913 = vpop.xlane.xlu0 %2912
    %v2914 = vadd.f32 %v2835, %v2913
    %v2915 = vmul.f32 %v2312, %v2841
    %2917 = vrot.lane.b32.xlu0 %v2915, 32
    %v2918 = vpop.permute.xlu0 %2917
    %v2920 = vsel %vm2830, %v2918, 0.0
    %2921 = vadd.xlane.f32.xlu0 %v2920
    %v2922 = vpop.xlane.xlu0 %2921
    %v2923 = vadd.f32 %v2914, %v2922
    %v2924 = vmul.f32 %v2501, %v2823
    %2926 = vrot.lane.b32.xlu0 %v2924, 32
    %v2927 = vpop.permute.xlu0 %2926
    %v2929 = vsel %vm2830, %v2927, 0.0
    %2930 = vadd.xlane.f32.xlu0 %v2929
    %v2931 = vpop.xlane.xlu0 %2930
    %v2932 = vadd.f32 %v2835, %v2931
    %v2933 = vmul.f32 %v2186, %v2841
    %2935 = vrot.lane.b32.xlu0 %v2933, 32
    %v2936 = vpop.permute.xlu0 %2935
    %v2938 = vsel %vm2830, %v2936, 0.0
    %2939 = vadd.xlane.f32.xlu0 %v2938
    %v2940 = vpop.xlane.xlu0 %2939
    %v2941 = vadd.f32 %v2932, %v2940
    %v2942 = vmul.f32 %v2627, %v2823
    %2944 = vrot.lane.b32.xlu0 %v2942, 32
    %v2945 = vpop.permute.xlu0 %2944
    %v2947 = vsel %vm2830, %v2945, 0.0
    %2948 = vadd.xlane.f32.xlu0 %v2947
    %v2949 = vpop.xlane.xlu0 %2948
    %v2950 = vadd.f32 %v2835, %v2949
    %v2951 = vmul.f32 %v2060, %v2841
    %2953 = vrot.lane.b32.xlu0 %v2951, 32
    %v2954 = vpop.permute.xlu0 %2953
    %v2956 = vsel %vm2830, %v2954, 0.0
    %2957 = vadd.xlane.f32.xlu0 %v2956
    %v2958 = vpop.xlane.xlu0 %2957
    %v2959 = vadd.f32 %v2950, %v2958
    %v2960 = vmul.f32 %v2753, %v2823
    %2962 = vrot.lane.b32.xlu0 %v2960, 32
    %v2963 = vpop.permute.xlu0 %2962
    %v2965 = vsel %vm2830, %v2963, 0.0
    %2966 = vadd.xlane.f32.xlu0 %v2965
    %v2967 = vpop.xlane.xlu0 %2966
    %v2968 = vadd.f32 %v2835, %v2967
    %v2969 = vmul.f32 %v1934, %v2841
    %2971 = vrot.lane.b32.xlu0 %v2969, 32
    %v2972 = vpop.permute.xlu0 %2971
    %v2974 = vsel %vm2830, %v2972, 0.0
    %2975 = vadd.xlane.f32.xlu0 %v2974
    %v2976 = vpop.xlane.xlu0 %2975
    %v2977 = vadd.f32 %v2968, %v2976
    %v2978 = vmax.f32 %v2851, %v2869
    %v2979 = vmax.f32 %v2978, %v2887
    %v2980 = vmax.f32 %v2979, %v2905
    %v2981 = vmax.f32 %v2980, %v2923
    %v2982 = vmax.f32 %v2981, %v2941
    %v2983 = vmax.f32 %v2982, %v2959
    %v2984 = vmax.f32 %v2983, %v2977
    %v2985 = vsub.f32 %v2851, %v2984
    %v2986 = vmul.f32 %v2985, 1.442695
    %v2987 = vpow.pop %v2986
    %v2988 = vsub.f32 %v2869, %v2984
    %v2989 = vmul.f32 %v2988, 1.442695
    %v2990 = vpow.pop %v2989
    %v2991 = vsub.f32 %v2887, %v2984
    %v2992 = vmul.f32 %v2991, 1.442695
    %v2993 = vpow.pop %v2992
    %v2994 = vsub.f32 %v2905, %v2984
    %v2995 = vmul.f32 %v2994, 1.442695
    %v2996 = vpow.pop %v2995
    %v2997 = vsub.f32 %v2923, %v2984
    %v2998 = vmul.f32 %v2997, 1.442695
    %v2999 = vpow.pop %v2998
    %v3000 = vsub.f32 %v2941, %v2984
    %v3001 = vmul.f32 %v3000, 1.442695
    %v3002 = vpow.pop %v3001
    %v3003 = vsub.f32 %v2959, %v2984
    %v3004 = vmul.f32 %v3003, 1.442695
    %v3005 = vpow.pop %v3004
    %v3006 = vsub.f32 %v2977, %v2984
    %v3007 = vmul.f32 %v3006, 1.442695
    %v3008 = vpow.pop %v3007
    %v3009 = vadd.f32 %v2987, %v2990
    %v3010 = vadd.f32 %v3009, %v2993
    %v3011 = vadd.f32 %v3010, %v2996
    %v3012 = vadd.f32 %v3011, %v2999
    %v3013 = vadd.f32 %v3012, %v3002
    %v3014 = vadd.f32 %v3013, %v3005
    %v3015 = vadd.f32 %v3014, %v3008
    %v3016 = vrcp.pop %v3015
    %v3017 = vmul.f32 %v3015, %v3016
    %v3018 = vsub.f32 1.0, %v3017
    %v3019 = vmul.f32 %v3016, %v3018
    %v3020 = vadd.f32 %v3016, %v3019
    %vm3021 = vweird.f32 %v3015
    %vm3022 = vweird.f32 %v3016
    %vm3023 = vmor %vm3021, %vm3022
    %v3024 = vsel %vm3023, %v3016, %v3020
    %v3025 = vand.u32 2147483647, %v3015
    %vm3026 = vcmp.eq.f32.partialorder %v3025, 8.507059e+37
    %v3027 = vand.u32 %v3015, 2147483648
    %v3028 = vor.u32 1.1754944e-38, %v3027
    %v3029 = vsel %vm3026, %v3028, %v3024
    %v3030 = vmul.f32 1.0, %v3029
    %v3031 = vld [vmem:[%s13] sm:$0x1]
    %3033 = vset.pattern.permute.xlu0 0
    %3034 = vperm.xlu0 %3033, %v2987
    %v3035 = vpop.permute.xlu0 %3034
    %v3037 = vmul.f32 %v3035, %v1876
    %3039 = vset.pattern.permute.xlu0 0
    %3040 = vperm.xlu0 %3039, %v2990
    %v3041 = vpop.permute.xlu0 %3040
    %v3043 = vmul.f32 %v3041, %v1997
    %v3044 = vadd.f32 %v3037, %v3043
    %3046 = vset.pattern.permute.xlu0 0
    %3047 = vperm.xlu0 %3046, %v2993
    %v3048 = vpop.permute.xlu0 %3047
    %v3050 = vmul.f32 %v3048, %v2123
    %v3051 = vadd.f32 %v3044, %v3050
    %3053 = vset.pattern.permute.xlu0 0
    %3054 = vperm.xlu0 %3053, %v2996
    %v3055 = vpop.permute.xlu0 %3054
    %v3057 = vmul.f32 %v3055, %v2249
    %v3058 = vadd.f32 %v3051, %v3057
    %3060 = vset.pattern.permute.xlu0 0
    %3061 = vperm.xlu0 %3060, %v2999
    %v3062 = vpop.permute.xlu0 %3061
    %v3064 = vmul.f32 %v3062, %v2375
    %v3065 = vadd.f32 %v3058, %v3064
    %3067 = vset.pattern.permute.xlu0 0
    %3068 = vperm.xlu0 %3067, %v3002
    %v3069 = vpop.permute.xlu0 %3068
    %v3071 = vmul.f32 %v3069, %v2501
    %v3072 = vadd.f32 %v3065, %v3071
    %3074 = vset.pattern.permute.xlu0 0
    %3075 = vperm.xlu0 %3074, %v3005
    %v3076 = vpop.permute.xlu0 %3075
    %v3078 = vmul.f32 %v3076, %v2627
    %v3079 = vadd.f32 %v3072, %v3078
    %3081 = vset.pattern.permute.xlu0 0
    %3082 = vperm.xlu0 %3081, %v3008
    %v3083 = vpop.permute.xlu0 %3082
    %v3085 = vmul.f32 %v3083, %v2753
    %v3086 = vadd.f32 %v3079, %v3085
    %3088 = vset.pattern.permute.xlu0 0
    %3089 = vperm.xlu0 %3088, %v3030
    %v3090 = vpop.permute.xlu0 %3089
    %v3092 = vmul.f32 %v3086, %v3090
    %v3093 = vld [vmem:[%s11] sm:$0xff]
    %v3094 = vld [vmem:[%s11 + $0x8] sm:$0xff]
    %v3095 = vld [vmem:[%s11 + $0x10] sm:$0xff]
    %v3096 = vld [vmem:[%s11 + $0x18] sm:$0xff]
    %3098 = vrot.lane.b32.xlu0 %v3092, 32
    %v3099 = vpop.permute.xlu0 %3098
    %v3100 = vsel %vm73, %v3099, 0
    %3102 = vmatpush.msra.mxu0 0.0
    %3103 = vmatpush.msra.mxu0 0.0
    %3104 = vmatpush.msra.mxu0 0.0
    %3105 = vmatpush.msra.mxu0 0.0
    %3106 = vmatpush.msra.mxu0 0.0
    %3107 = vmatpush.msra.mxu0 0.0
    %3108 = vmatpush.msra.mxu0 0.0
    %3109 = vmatpush.msra.mxu0 0.0
    %3110 = vmatpush.msra.mxu0 0.0
    %3111 = vmatpush.msra.mxu0 0.0
    %3112 = vmatpush.msra.mxu0 0.0
    %3113 = vmatpush.msra.mxu0 0.0
    %3114 = vmatpush.msra.mxu0 %v3096
    %3115 = vmatpush.msra.mxu0 %v3095
    %3116 = vmatpush.msra.mxu0 %v3094
    %3117 = vmatpush.msra.mxu0 %v3093
    %3118 = vmatmul.f32.gmra.mxu0 %v3100
    %v3119 = vpop.f32.mrf.mxu0
    %v3120 = vadd.f32 0.0, %v3119
    %3121 = vdwg.mxu0
    %v3123 = vperm.slane %v3031, 0
    %v3125 = vadd.f32 %v3123, %v3120
    %v3126 = vmul.f32 %v3035, %v2816
    %v3127 = vmul.f32 %v3041, %v2690
    %v3128 = vadd.f32 %v3126, %v3127
    %v3129 = vmul.f32 %v3048, %v2564
    %v3130 = vadd.f32 %v3128, %v3129
    %v3131 = vmul.f32 %v3055, %v2438
    %v3132 = vadd.f32 %v3130, %v3131
    %v3133 = vmul.f32 %v3062, %v2312
    %v3134 = vadd.f32 %v3132, %v3133
    %v3135 = vmul.f32 %v3069, %v2186
    %v3136 = vadd.f32 %v3134, %v3135
    %v3137 = vmul.f32 %v3076, %v2060
    %v3138 = vadd.f32 %v3136, %v3137
    %v3139 = vmul.f32 %v3083, %v1934
    %v3140 = vadd.f32 %v3138, %v3139
    %v3141 = vmul.f32 %v3140, %v3090
    %v3142 = vld [vmem:[%s12] sm:$0xff]
    %v3143 = vld [vmem:[%s12 + $0x8] sm:$0xff]
    %v3144 = vld [vmem:[%s12 + $0x10] sm:$0xff]
    %v3145 = vld [vmem:[%s12 + $0x18] sm:$0xff]
    %3147 = vrot.lane.b32.xlu0 %v3141, 32
    %v3148 = vpop.permute.xlu0 %3147
    %v3149 = vsel %vm73, %v3148, 0
    %3151 = vmatpush.msra.mxu0 0.0
    %3152 = vmatpush.msra.mxu0 0.0
    %3153 = vmatpush.msra.mxu0 0.0
    %3154 = vmatpush.msra.mxu0 0.0
    %3155 = vmatpush.msra.mxu0 0.0
    %3156 = vmatpush.msra.mxu0 0.0
    %3157 = vmatpush.msra.mxu0 0.0
    %3158 = vmatpush.msra.mxu0 0.0
    %3159 = vmatpush.msra.mxu0 0.0
    %3160 = vmatpush.msra.mxu0 0.0
    %3161 = vmatpush.msra.mxu0 0.0
    %3162 = vmatpush.msra.mxu0 0.0
    %3163 = vmatpush.msra.mxu0 %v3145
    %3164 = vmatpush.msra.mxu0 %v3144
    %3165 = vmatpush.msra.mxu0 %v3143
    %3166 = vmatpush.msra.mxu0 %v3142
    %3167 = vmatmul.f32.gmra.mxu0 %v3149
    %v3168 = vpop.f32.mrf.mxu0
    %v3169 = vadd.f32 0.0, %v3168
    %3170 = vdwg.mxu0
    %v3171 = vadd.f32 %v3125, %v3169
    %vm3172 = vcmask 25600
    %3173 = vst.msk [vmem:[#allocation3] sm:$0x3] %vm3172, %v3171
    // Predicated region
    $region58: #{x_lstm_forward.1} parent=1 // pred_check
      _
    $region59: #{x_lstm_forward.1} parent=1 // pred_check_branch
      %3175 = sbr.rel (0) target = $region61
    $region60: #{x_lstm_forward.1} parent=1 // pred_region
      %3177 = vsyncadd [#allocation4], 0
      %s3179 = sshll.u32 [#allocation3], 4
      %s3180 = int_to_ptr.vmem [resolvable:$true] %s3179
      %s3181 = sshll.u32 %s14, 4
      %s3182 = int_to_ptr.hbm [resolvable:$true] %s3181
      %3184 = dma.vmem_to_hbm [thread:$0]  %s3180, 32, %s3182, [#allocation4]
    $region61: #{x_lstm_forward.1} parent=1 // pred_fallthru
      _
    // Predicated region
    $region62: #{x_lstm_forward.1} parent=1 // pred_check
      _
    $region63: #{x_lstm_forward.1} parent=1 // pred_check_branch
      %3186 = sbr.rel (0) target = $region65
    $region64: #{x_lstm_forward.1} parent=1 // pred_region
      %3188 = dma.done [#allocation4], 32
    $region65: #{x_lstm_forward.1} parent=1 // pred_fallthru
      _
    %3189 = vsyncpa [#allocation4], 1

</llo_original>
